<compile_context>
chip_gen: v7x
topology: tpu7x:2x2x1
jax: 0.10.0
libtpu: 0.0.40
codegen_flags: <defaults>
</compile_context>

<pallas_src>
import math

import jax
import jax.numpy as jnp
from jax.experimental import pallas as pl
from jax.experimental.pallas import tpu as pltpu

# ---- small synthetic "bert-base-cased"-shaped config ----
VOCAB = 64
MAX_POS = 16
TYPE_VOCAB = 2
HIDDEN = 32
N_HEADS = 4
D_HEAD = HIDDEN // N_HEADS
D_FF = 64
N_LAYERS = 2
N_CLASSES = 3
CLS_PAD = 128           # lane-dense padded width of the classifier output
LN_EPS = 1e-12


def _layernorm(x, g, b):
    mu = jnp.mean(x, axis=-1, keepdims=True)
    xc = x - mu
    var = jnp.mean(xc * xc, axis=-1, keepdims=True)
    return (xc * jax.lax.rsqrt(var + LN_EPS)) * g + b


# ---------------- fully fused forward kernel (one pallas_call) ----------------

def _bert_fwd_kernel(word_ref, pos_ref, mask_ref, gvec_ref,
                     wqkv_ref, wo_ref, w1_ref, w2_ref, lvec_ref,
                     pool_w_ref, cls_w_ref, o_ref):
    S = word_ref.shape[1]

    # Global packed vector params (one lane-dense [8,128] tile).
    gvec = gvec_ref[...]
    emb_g = gvec[0:1, :HIDDEN]
    emb_b = gvec[1:2, :HIDDEN]
    pool_b = gvec[2:3, :HIDDEN]
    cls_b = gvec[3:4, :]                                   # [1, CLS_PAD]

    # Embedding add + LayerNorm (gather done in JAX glue).
    h = _layernorm(word_ref[0] + pos_ref[...], emb_g, emb_b)      # [S, H] fp32
    addmask = mask_ref[0]                                          # [1, S] additive

    for l in range(N_LAYERS):                # static unroll over stacked weights
        vec = lvec_ref[l]                    # [8, 128] packed per-layer vectors
        bqkv = vec[0:1, :3 * HIDDEN]
        b1 = vec[1:2, :D_FF]
        bo = vec[2:3, :HIDDEN]
        ln1_g = vec[3:4, :HIDDEN]
        ln1_b = vec[4:5, :HIDDEN]
        b2 = vec[5:6, :HIDDEN]
        ln2_g = vec[6:7, :HIDDEN]
        ln2_b = vec[7:8, :HIDDEN]

        # Fused Q/K/V projection (1/sqrt(d_head) pre-folded into the Q columns).
        qkv = jnp.dot(h.astype(jnp.bfloat16), wqkv_ref[l],
                      preferred_element_type=jnp.float32) + bqkv   # [S, 3H]

        # Head-batched attention: view as [n_heads, S, d_head], bf16 MXU operands.
        qh = qkv[:, :HIDDEN].reshape(S, N_HEADS, D_HEAD).swapaxes(0, 1)
        kh = qkv[:, HIDDEN:2 * HIDDEN].reshape(S, N_HEADS, D_HEAD).swapaxes(0, 1)
        vh = qkv[:, 2 * HIDDEN:].reshape(S, N_HEADS, D_HEAD).swapaxes(0, 1)
        s = jnp.einsum("hqd,hkd->hqk",
                       qh.astype(jnp.bfloat16), kh.astype(jnp.bfloat16),
                       preferred_element_type=jnp.float32)         # [NH, S, S]
        s = s + addmask                       # broadcast over heads & query rows
        s = s - jnp.max(s, axis=-1, keepdims=True)
        p = jnp.exp(s)
        p = p * pl.reciprocal(jnp.sum(p, axis=-1, keepdims=True), approx=True)
        ctx = jnp.einsum("hqk,hkd->hqd",
                         p.astype(jnp.bfloat16), vh.astype(jnp.bfloat16),
                         preferred_element_type=jnp.float32)       # [NH, S, DH]
        ctx = ctx.swapaxes(0, 1).reshape(S, HIDDEN)                # [S, H]

        # Single full-width output projection, residual + LN1.
        attn = jnp.dot(ctx.astype(jnp.bfloat16), wo_ref[l],
                       preferred_element_type=jnp.float32) + bo
        h1 = _layernorm(attn + h, ln1_g, ln1_b)

        # Feed-forward (gelu) + residual + LN2, still in VMEM.
        ff = jnp.dot(h1.astype(jnp.bfloat16), w1_ref[l],
                     preferred_element_type=jnp.float32) + b1
        # TODO(synk): HF/PyTorch BERT uses exact erf-GELU; tanh approximation here.
        ff = jax.nn.gelu(ff, approximate=True)
        ff = jnp.dot(ff.astype(jnp.bfloat16), w2_ref[l],
                     preferred_element_type=jnp.float32) + b2
        h = _layernorm(ff + h1, ln2_g, ln2_b)

    # Pooler (tanh) + classifier on the CLS token, selected in-kernel.
    cls = h[0:1, :]                                                # [1, H]
    pooled = jnp.tanh(jnp.dot(cls.astype(jnp.bfloat16), pool_w_ref[...],
                              preferred_element_type=jnp.float32) + pool_b)
    # nn.Dropout(p=0.3) is identity at inference (PyTorch eval semantics).
    # TODO(synk): training-mode dropout would need pltpu.prng_seed/prng_random_bits.
    o_ref[0] = (jnp.dot(pooled.astype(jnp.bfloat16), cls_w_ref[...],
                        preferred_element_type=jnp.float32) + cls_b)


def bert_forward_fused(word, pos_tok, addmask, params):
    B, S, H = word.shape

    def full(shape):
        n = len(shape)
        return pl.BlockSpec(shape, lambda b: (0,) * n)

    logits_pad = pl.pallas_call(
        _bert_fwd_kernel,
        out_shape=jax.ShapeDtypeStruct((B, 1, CLS_PAD), jnp.float32),
        grid=(B,),
        in_specs=[
            pl.BlockSpec((1, S, H), lambda b: (b, 0, 0)),          # embedded tokens
            full((S, H)),                                          # pos + type emb
            pl.BlockSpec((1, 1, S), lambda b: (b, 0, 0)),          # additive mask
            full((8, CLS_PAD)),                                    # global vec slab
            full((N_LAYERS, H, 3 * H)),                            # wqkv (stacked)
            full((N_LAYERS, H, H)),                                # wo
            full((N_LAYERS, H, D_FF)),                             # w1
            full((N_LAYERS, D_FF, H)),                             # w2
            full((N_LAYERS, 8, CLS_PAD)),                          # per-layer vec slabs
            full((H, H)),                                          # pooler weight
            full((H, CLS_PAD)),                                    # classifier weight (padded)
        ],
        out_specs=pl.BlockSpec((1, 1, CLS_PAD), lambda b: (b, 0, 0)),
        compiler_params=pltpu.CompilerParams(
            dimension_semantics=("parallel",)),
    )(word, pos_tok, addmask, params["gvec"],
      params["wqkv"], params["wo"], params["w1"], params["w2"], params["lvec"],
      params["pool_w"], params["cls_w_pad"])
    return logits_pad


# ---------------- model (forward pass of BERTSentimentClassifier) ----------------

def bert_sentiment_forward(params, input_ids, attention_mask):
    B, S = input_ids.shape

    # Embedding gather stays in JAX glue; token_type_ids hard-coded to 0
    # (matches the reference call signature, which never passes segment ids).
    word = jnp.take(params["word_emb"], input_ids, axis=0)               # [B, S, H]
    pos_tok = params["pos_emb"][:S] + params["type_emb"][0][None, :]     # [S, H]

    # HF-style extended attention mask: (1 - mask) * -10000, broadcast over keys.
    addmask = (1.0 - attention_mask.astype(jnp.float32))[:, None, :] * -10000.0

    logits_pad = bert_forward_fused(word, pos_tok, addmask, params)      # [B,1,128]
    return logits_pad[:, 0, :N_CLASSES]


# ---------------- deterministic parameter init ----------------

def init_params(key):
    def nrm(k, shape, dtype=jnp.float32):
        return (0.02 * jax.random.normal(k, shape)).astype(dtype)

    ks = jax.random.split(key, 5)

    # Classifier weight zero-padded to a lane-dense 128-wide slab.
    cls_w = nrm(ks[4], (HIDDEN, N_CLASSES))
    cls_w_pad = jnp.zeros((HIDDEN, CLS_PAD), jnp.float32).at[:, :N_CLASSES].set(cls_w)

    # Global packed vector slab: rows = [emb_ln_g, emb_ln_b, pool_b, cls_b, 0...].
    gvec = jnp.zeros((8, CLS_PAD), jnp.float32)
    gvec = gvec.at[0, :HIDDEN].set(1.0)                 # embedding LN gamma
    # rows 1 (emb LN beta), 2 (pooler bias), 3 (classifier bias) stay zero.

    scale = 1.0 / math.sqrt(D_HEAD)
    wqkv_l, wo_l, w1_l, w2_l, lvec_l = [], [], [], [], []
    for i in range(N_LAYERS):
        lk = jax.random.split(jax.random.fold_in(key, 100 + i), 6)
        # Fold the attention scale into the Q projection (weight and — if nonzero —
        # its bias), so the kernel never multiplies the [S,S] scores.
        wq = nrm(lk[0], (HIDDEN, HIDDEN)) * scale
        wk = nrm(lk[1], (HIDDEN, HIDDEN))
        wv = nrm(lk[2], (HIDDEN, HIDDEN))
        wqkv_l.append(jnp.concatenate([wq, wk, wv], axis=1).astype(jnp.bfloat16))
        wo_l.append(nrm(lk[3], (HIDDEN, HIDDEN), jnp.bfloat16))
        w1_l.append(nrm(lk[4], (HIDDEN, D_FF), jnp.bfloat16))
        w2_l.append(nrm(lk[5], (D_FF, HIDDEN), jnp.bfloat16))

        # Per-layer vector params packed into one lane-dense (8, 128) fp32 tile:
        # rows = [bqkv (Q part pre-scaled), b1, bo, ln1_g, ln1_b, b2, ln2_g, ln2_b].
        vec = jnp.zeros((8, CLS_PAD), jnp.float32)
        vec = vec.at[3, :HIDDEN].set(1.0)               # ln1 gamma
        vec = vec.at[6, :HIDDEN].set(1.0)               # ln2 gamma
        lvec_l.append(vec)

    return {
        "word_emb": nrm(ks[0], (VOCAB, HIDDEN)),
        "pos_emb": nrm(ks[1], (MAX_POS, HIDDEN)),
        "type_emb": nrm(ks[2], (TYPE_VOCAB, HIDDEN)),
        "gvec": gvec,
        "wqkv": jnp.stack(wqkv_l),
        "wo": jnp.stack(wo_l),
        "w1": jnp.stack(w1_l),
        "w2": jnp.stack(w2_l),
        "lvec": jnp.stack(lvec_l),
        "pool_w": nrm(ks[3], (HIDDEN, HIDDEN), jnp.bfloat16),
        "cls_w_pad": cls_w_pad.astype(jnp.bfloat16),
    }


if __name__ == "__main__":
    key = jax.random.PRNGKey(0)
    pkey, ikey = jax.random.split(key)
    params = init_params(pkey)

    B, S = 2, 8
    input_ids = jax.random.randint(ikey, (B, S), 0, VOCAB, dtype=jnp.int32)
    attention_mask = jnp.ones((B, S), dtype=jnp.int32)
    attention_mask = attention_mask.at[1, 6:].set(0)    # padding on sample 1

    logits = jax.jit(bert_sentiment_forward)(params, input_ids, attention_mask)
    jax.block_until_ready(logits)
    assert logits.shape == (B, N_CLASSES)
    assert bool(jnp.all(jnp.isfinite(logits)))
    print("KERNEL_OK")
</pallas_src>

<mosaic_0001>
module attributes {stable_mosaic.version = 11 : i64} {
  func.func @_bert_fwd_kernel(%arg0: i32, %arg1: memref<1x8x32xf32, #tpu.memory_space<vmem>>, %arg2: memref<8x32xf32, #tpu.memory_space<vmem>>, %arg3: memref<1x1x8xf32, #tpu.memory_space<vmem>>, %arg4: memref<8x128xf32, #tpu.memory_space<vmem>>, %arg5: memref<2x32x96xbf16, #tpu.memory_space<vmem>>, %arg6: memref<2x32x32xbf16, #tpu.memory_space<vmem>>, %arg7: memref<2x32x64xbf16, #tpu.memory_space<vmem>>, %arg8: memref<2x64x32xbf16, #tpu.memory_space<vmem>>, %arg9: memref<2x8x128xf32, #tpu.memory_space<vmem>>, %arg10: memref<32x32xbf16, #tpu.memory_space<vmem>>, %arg11: memref<32x128xbf16, #tpu.memory_space<vmem>>, %arg12: memref<1x1x128xf32, #tpu.memory_space<vmem>>) attributes {dimension_semantics = [#tpu.dimension_semantics<parallel>], iteration_bounds = array<i64: 2>, scalar_prefetch = 0 : i64, scratch_operands = 0 : i64, tpu.core_type = #tpu.core_type<tc>, window_params = [{transform_indices = @transform_0, window_bounds = array<i64: 1, 8, 32>}, {pipeline_mode = #tpu.pipeline_mode<synchronous>, transform_indices = @transform_1, window_bounds = array<i64: 8, 32>}, {transform_indices = @transform_2, window_bounds = array<i64: 1, 1, 8>}, {pipeline_mode = #tpu.pipeline_mode<synchronous>, transform_indices = @transform_3, window_bounds = array<i64: 8, 128>}, {pipeline_mode = #tpu.pipeline_mode<synchronous>, transform_indices = @transform_4, window_bounds = array<i64: 2, 32, 96>}, {pipeline_mode = #tpu.pipeline_mode<synchronous>, transform_indices = @transform_5, window_bounds = array<i64: 2, 32, 32>}, {pipeline_mode = #tpu.pipeline_mode<synchronous>, transform_indices = @transform_6, window_bounds = array<i64: 2, 32, 64>}, {pipeline_mode = #tpu.pipeline_mode<synchronous>, transform_indices = @transform_7, window_bounds = array<i64: 2, 64, 32>}, {pipeline_mode = #tpu.pipeline_mode<synchronous>, transform_indices = @transform_8, window_bounds = array<i64: 2, 8, 128>}, {pipeline_mode = #tpu.pipeline_mode<synchronous>, transform_indices = @transform_9, window_bounds = array<i64: 32, 32>}, {pipeline_mode = #tpu.pipeline_mode<synchronous>, transform_indices = @transform_10, window_bounds = array<i64: 32, 128>}, {transform_indices = @transform_11, window_bounds = array<i64: 1, 1, 128>}]} {
    %c0 = arith.constant 0 : index
    %c0_0 = arith.constant 0 : index
    %0 = vector.load %arg4[%c0, %c0_0] : memref<8x128xf32, #tpu.memory_space<vmem>>, vector<8x128xf32>
    %1 = vector.extract_strided_slice %0 {offsets = [0, 0], sizes = [1, 32], strides = [1, 1]} : vector<8x128xf32> to vector<1x32xf32>
    %2 = vector.extract_strided_slice %0 {offsets = [1, 0], sizes = [1, 32], strides = [1, 1]} : vector<8x128xf32> to vector<1x32xf32>
    %3 = vector.extract_strided_slice %0 {offsets = [2, 0], sizes = [1, 32], strides = [1, 1]} : vector<8x128xf32> to vector<1x32xf32>
    %4 = vector.extract_strided_slice %0 {offsets = [3, 0], sizes = [1, 128], strides = [1, 1]} : vector<8x128xf32> to vector<1x128xf32>
    %c0_1 = arith.constant 0 : index
    %c0_2 = arith.constant 0 : index
    %c0_3 = arith.constant 0 : index
    %5 = vector.load %arg1[%c0_1, %c0_2, %c0_3] : memref<1x8x32xf32, #tpu.memory_space<vmem>>, vector<1x8x32xf32>
    %6 = vector.shape_cast %5 : vector<1x8x32xf32> to vector<8x32xf32>
    %c0_4 = arith.constant 0 : index
    %c0_5 = arith.constant 0 : index
    %7 = vector.load %arg2[%c0_4, %c0_5] : memref<8x32xf32, #tpu.memory_space<vmem>>, vector<8x32xf32>
    %8 = arith.addf %6, %7 : vector<8x32xf32>
    %cst = arith.constant dense<0.000000e+00> : vector<8xf32>
    %9 = vector.multi_reduction <add>, %8, %cst [1] : vector<8x32xf32> to vector<8xf32>
    %10 = vector.shape_cast %9 : vector<8xf32> to vector<8x1xf32>
    %cst_6 = arith.constant 3.200000e+01 : f32
    %11 = vector.broadcast %cst_6 : f32 to vector<8x1xf32>
    %12 = arith.divf %10, %11 : vector<8x1xf32>
    %13 = vector.broadcast %12 : vector<8x1xf32> to vector<8x32xf32>
    %14 = arith.subf %8, %13 : vector<8x32xf32>
    %15 = arith.mulf %14, %14 : vector<8x32xf32>
    %cst_7 = arith.constant dense<0.000000e+00> : vector<8xf32>
    %16 = vector.multi_reduction <add>, %15, %cst_7 [1] : vector<8x32xf32> to vector<8xf32>
    %17 = vector.shape_cast %16 : vector<8xf32> to vector<8x1xf32>
    %cst_8 = arith.constant 3.200000e+01 : f32
    %18 = vector.broadcast %cst_8 : f32 to vector<8x1xf32>
    %19 = arith.divf %17, %18 : vector<8x1xf32>
    %cst_9 = arith.constant 9.99999996E-13 : f32
    %20 = vector.broadcast %cst_9 : f32 to vector<8x1xf32>
    %21 = arith.addf %19, %20 : vector<8x1xf32>
    %22 = math.rsqrt %21 : vector<8x1xf32>
    %23 = vector.broadcast %22 : vector<8x1xf32> to vector<8x32xf32>
    %24 = arith.mulf %14, %23 : vector<8x32xf32>
    %25 = vector.broadcast %1 : vector<1x32xf32> to vector<8x32xf32>
    %26 = arith.mulf %24, %25 : vector<8x32xf32>
    %27 = vector.broadcast %2 : vector<1x32xf32> to vector<8x32xf32>
    %28 = arith.addf %26, %27 : vector<8x32xf32>
    %c0_10 = arith.constant 0 : index
    %c0_11 = arith.constant 0 : index
    %c0_12 = arith.constant 0 : index
    %29 = vector.load %arg3[%c0_10, %c0_11, %c0_12] : memref<1x1x8xf32, #tpu.memory_space<vmem>>, vector<1x1x8xf32>
    %30 = vector.shape_cast %29 : vector<1x1x8xf32> to vector<1x8xf32>
    %c0_13 = arith.constant 0 : index
    %c0_14 = arith.constant 0 : index
    %c0_15 = arith.constant 0 : index
    %31 = vector.load %arg9[%c0_13, %c0_14, %c0_15] : memref<2x8x128xf32, #tpu.memory_space<vmem>>, vector<1x8x128xf32>
    %32 = vector.shape_cast %31 : vector<1x8x128xf32> to vector<8x128xf32>
    %33 = vector.extract_strided_slice %32 {offsets = [0, 0], sizes = [1, 96], strides = [1, 1]} : vector<8x128xf32> to vector<1x96xf32>
    %34 = vector.extract_strided_slice %32 {offsets = [1, 0], sizes = [1, 64], strides = [1, 1]} : vector<8x128xf32> to vector<1x64xf32>
    %35 = vector.extract_strided_slice %32 {offsets = [2, 0], sizes = [1, 32], strides = [1, 1]} : vector<8x128xf32> to vector<1x32xf32>
    %36 = vector.extract_strided_slice %32 {offsets = [3, 0], sizes = [1, 32], strides = [1, 1]} : vector<8x128xf32> to vector<1x32xf32>
    %37 = vector.extract_strided_slice %32 {offsets = [4, 0], sizes = [1, 32], strides = [1, 1]} : vector<8x128xf32> to vector<1x32xf32>
    %38 = vector.extract_strided_slice %32 {offsets = [5, 0], sizes = [1, 32], strides = [1, 1]} : vector<8x128xf32> to vector<1x32xf32>
    %39 = vector.extract_strided_slice %32 {offsets = [6, 0], sizes = [1, 32], strides = [1, 1]} : vector<8x128xf32> to vector<1x32xf32>
    %40 = vector.extract_strided_slice %32 {offsets = [7, 0], sizes = [1, 32], strides = [1, 1]} : vector<8x128xf32> to vector<1x32xf32>
    %41 = arith.truncf %28 : vector<8x32xf32> to vector<8x32xbf16>
    %c0_16 = arith.constant 0 : index
    %c0_17 = arith.constant 0 : index
    %c0_18 = arith.constant 0 : index
    %42 = vector.load %arg5[%c0_16, %c0_17, %c0_18] : memref<2x32x96xbf16, #tpu.memory_space<vmem>>, vector<1x32x96xbf16>
    %43 = vector.shape_cast %42 : vector<1x32x96xbf16> to vector<32x96xbf16>
    %cst_19 = arith.constant dense<0.000000e+00> : vector<8x96xf32>
    %44 = tpu.matmul %41, %43, %cst_19 {dimension_numbers = #tpu.dot_dimension_numbers<[1], [0], [0], [1], [0, 0, 1, 1], [], []>} : vector<8x32xbf16>, vector<32x96xbf16>, vector<8x96xf32> -> vector<8x96xf32>
    %45 = vector.broadcast %33 : vector<1x96xf32> to vector<8x96xf32>
    %46 = arith.addf %44, %45 : vector<8x96xf32>
    %47 = vector.extract_strided_slice %46 {offsets = [0, 0], sizes = [8, 32], strides = [1, 1]} : vector<8x96xf32> to vector<8x32xf32>
    %48 = vector.shape_cast %47 : vector<8x32xf32> to vector<8x4x8xf32>
    %49 = tpu.transpose %48, [1, 0, 2] : vector<8x4x8xf32> -> vector<4x8x8xf32>
    %50 = vector.extract_strided_slice %46 {offsets = [0, 32], sizes = [8, 32], strides = [1, 1]} : vector<8x96xf32> to vector<8x32xf32>
    %51 = vector.shape_cast %50 : vector<8x32xf32> to vector<8x4x8xf32>
    %52 = tpu.transpose %51, [1, 0, 2] : vector<8x4x8xf32> -> vector<4x8x8xf32>
    %53 = vector.extract_strided_slice %46 {offsets = [0, 64], sizes = [8, 32], strides = [1, 1]} : vector<8x96xf32> to vector<8x32xf32>
    %54 = vector.shape_cast %53 : vector<8x32xf32> to vector<8x4x8xf32>
    %55 = tpu.transpose %54, [1, 0, 2] : vector<8x4x8xf32> -> vector<4x8x8xf32>
    %56 = arith.truncf %49 : vector<4x8x8xf32> to vector<4x8x8xbf16>
    %57 = arith.truncf %52 : vector<4x8x8xf32> to vector<4x8x8xbf16>
    "tpu.trace_start"() <{level = 10 : i32, message = "hqd,hkd->hqk"}> : () -> ()
    %cst_20 = arith.constant dense<0.000000e+00> : vector<4x8x8xf32>
    %58 = tpu.matmul %56, %57, %cst_20 {dimension_numbers = #tpu.dot_dimension_numbers<[2], [2], [1], [1], [0, 0, 0, 1, 1, 1], [0], [0]>} : vector<4x8x8xbf16>, vector<4x8x8xbf16>, vector<4x8x8xf32> -> vector<4x8x8xf32>
    "tpu.trace_stop"() : () -> ()
    %59 = vector.shape_cast %30 : vector<1x8xf32> to vector<1x1x8xf32>
    %60 = vector.broadcast %59 : vector<1x1x8xf32> to vector<4x8x8xf32>
    %61 = arith.addf %58, %60 : vector<4x8x8xf32>
    %cst_21 = arith.constant dense<0xFF800000> : vector<4x8xf32>
    %62 = vector.multi_reduction <maximumf>, %61, %cst_21 [2] : vector<4x8x8xf32> to vector<4x8xf32>
    %63 = vector.shape_cast %62 : vector<4x8xf32> to vector<4x8x1xf32>
    %64 = vector.broadcast %63 : vector<4x8x1xf32> to vector<4x8x8xf32>
    %65 = arith.subf %61, %64 : vector<4x8x8xf32>
    %66 = math.exp %65 : vector<4x8x8xf32>
    %cst_22 = arith.constant dense<0.000000e+00> : vector<4x8xf32>
    %67 = vector.multi_reduction <add>, %66, %cst_22 [2] : vector<4x8x8xf32> to vector<4x8xf32>
    %68 = vector.shape_cast %67 : vector<4x8xf32> to vector<4x8x1xf32>
    %69 = tpu.reciprocal %68 {approx = true} : vector<4x8x1xf32> -> vector<4x8x1xf32>
    %70 = vector.broadcast %69 : vector<4x8x1xf32> to vector<4x8x8xf32>
    %71 = arith.mulf %66, %70 : vector<4x8x8xf32>
    %72 = arith.truncf %71 : vector<4x8x8xf32> to vector<4x8x8xbf16>
    %73 = arith.truncf %55 : vector<4x8x8xf32> to vector<4x8x8xbf16>
    "tpu.trace_start"() <{level = 10 : i32, message = "hqk,hkd->hqd"}> : () -> ()
    %cst_23 = arith.constant dense<0.000000e+00> : vector<4x8x8xf32>
    %74 = tpu.matmul %72, %73, %cst_23 {dimension_numbers = #tpu.dot_dimension_numbers<[2], [1], [1], [2], [0, 0, 0, 1, 1, 2], [0], [0]>} : vector<4x8x8xbf16>, vector<4x8x8xbf16>, vector<4x8x8xf32> -> vector<4x8x8xf32>
    "tpu.trace_stop"() : () -> ()
    %75 = tpu.transpose %74, [1, 0, 2] : vector<4x8x8xf32> -> vector<8x4x8xf32>
    %76 = vector.shape_cast %75 : vector<8x4x8xf32> to vector<8x32xf32>
    %77 = arith.truncf %76 : vector<8x32xf32> to vector<8x32xbf16>
    %c0_24 = arith.constant 0 : index
    %c0_25 = arith.constant 0 : index
    %c0_26 = arith.constant 0 : index
    %78 = vector.load %arg6[%c0_24, %c0_25, %c0_26] : memref<2x32x32xbf16, #tpu.memory_space<vmem>>, vector<1x32x32xbf16>
    %79 = vector.shape_cast %78 : vector<1x32x32xbf16> to vector<32x32xbf16>
    %cst_27 = arith.constant dense<0.000000e+00> : vector<8x32xf32>
    %80 = tpu.matmul %77, %79, %cst_27 {dimension_numbers = #tpu.dot_dimension_numbers<[1], [0], [0], [1], [0, 0, 1, 1], [], []>} : vector<8x32xbf16>, vector<32x32xbf16>, vector<8x32xf32> -> vector<8x32xf32>
    %81 = vector.broadcast %35 : vector<1x32xf32> to vector<8x32xf32>
    %82 = arith.addf %80, %81 : vector<8x32xf32>
    %83 = arith.addf %82, %28 : vector<8x32xf32>
    %cst_28 = arith.constant dense<0.000000e+00> : vector<8xf32>
    %84 = vector.multi_reduction <add>, %83, %cst_28 [1] : vector<8x32xf32> to vector<8xf32>
    %85 = vector.shape_cast %84 : vector<8xf32> to vector<8x1xf32>
    %cst_29 = arith.constant 3.200000e+01 : f32
    %86 = vector.broadcast %cst_29 : f32 to vector<8x1xf32>
    %87 = arith.divf %85, %86 : vector<8x1xf32>
    %88 = vector.broadcast %87 : vector<8x1xf32> to vector<8x32xf32>
    %89 = arith.subf %83, %88 : vector<8x32xf32>
    %90 = arith.mulf %89, %89 : vector<8x32xf32>
    %cst_30 = arith.constant dense<0.000000e+00> : vector<8xf32>
    %91 = vector.multi_reduction <add>, %90, %cst_30 [1] : vector<8x32xf32> to vector<8xf32>
    %92 = vector.shape_cast %91 : vector<8xf32> to vector<8x1xf32>
    %cst_31 = arith.constant 3.200000e+01 : f32
    %93 = vector.broadcast %cst_31 : f32 to vector<8x1xf32>
    %94 = arith.divf %92, %93 : vector<8x1xf32>
    %cst_32 = arith.constant 9.99999996E-13 : f32
    %95 = vector.broadcast %cst_32 : f32 to vector<8x1xf32>
    %96 = arith.addf %94, %95 : vector<8x1xf32>
    %97 = math.rsqrt %96 : vector<8x1xf32>
    %98 = vector.broadcast %97 : vector<8x1xf32> to vector<8x32xf32>
    %99 = arith.mulf %89, %98 : vector<8x32xf32>
    %100 = vector.broadcast %36 : vector<1x32xf32> to vector<8x32xf32>
    %101 = arith.mulf %99, %100 : vector<8x32xf32>
    %102 = vector.broadcast %37 : vector<1x32xf32> to vector<8x32xf32>
    %103 = arith.addf %101, %102 : vector<8x32xf32>
    %104 = arith.truncf %103 : vector<8x32xf32> to vector<8x32xbf16>
    %c0_33 = arith.constant 0 : index
    %c0_34 = arith.constant 0 : index
    %c0_35 = arith.constant 0 : index
    %105 = vector.load %arg7[%c0_33, %c0_34, %c0_35] : memref<2x32x64xbf16, #tpu.memory_space<vmem>>, vector<1x32x64xbf16>
    %106 = vector.shape_cast %105 : vector<1x32x64xbf16> to vector<32x64xbf16>
    %cst_36 = arith.constant dense<0.000000e+00> : vector<8x64xf32>
    %107 = tpu.matmul %104, %106, %cst_36 {dimension_numbers = #tpu.dot_dimension_numbers<[1], [0], [0], [1], [0, 0, 1, 1], [], []>} : vector<8x32xbf16>, vector<32x64xbf16>, vector<8x64xf32> -> vector<8x64xf32>
    %108 = vector.broadcast %34 : vector<1x64xf32> to vector<8x64xf32>
    %109 = arith.addf %107, %108 : vector<8x64xf32>
    %110 = arith.mulf %109, %109 : vector<8x64xf32>
    %111 = arith.mulf %109, %110 : vector<8x64xf32>
    %cst_37 = arith.constant 4.471500e-02 : f32
    %112 = vector.broadcast %cst_37 : f32 to vector<8x64xf32>
    %113 = arith.mulf %112, %111 : vector<8x64xf32>
    %114 = arith.addf %109, %113 : vector<8x64xf32>
    %cst_38 = arith.constant 0.797884583 : f32
    %115 = vector.broadcast %cst_38 : f32 to vector<8x64xf32>
    %116 = arith.mulf %115, %114 : vector<8x64xf32>
    %117 = math.tanh %116 : vector<8x64xf32>
    %cst_39 = arith.constant 1.000000e+00 : f32
    %118 = vector.broadcast %cst_39 : f32 to vector<8x64xf32>
    %119 = arith.addf %118, %117 : vector<8x64xf32>
    %cst_40 = arith.constant 5.000000e-01 : f32
    %120 = vector.broadcast %cst_40 : f32 to vector<8x64xf32>
    %121 = arith.mulf %120, %119 : vector<8x64xf32>
    %122 = arith.mulf %109, %121 : vector<8x64xf32>
    %123 = arith.truncf %122 : vector<8x64xf32> to vector<8x64xbf16>
    %c0_41 = arith.constant 0 : index
    %c0_42 = arith.constant 0 : index
    %c0_43 = arith.constant 0 : index
    %124 = vector.load %arg8[%c0_41, %c0_42, %c0_43] : memref<2x64x32xbf16, #tpu.memory_space<vmem>>, vector<1x64x32xbf16>
    %125 = vector.shape_cast %124 : vector<1x64x32xbf16> to vector<64x32xbf16>
    %cst_44 = arith.constant dense<0.000000e+00> : vector<8x32xf32>
    %126 = tpu.matmul %123, %125, %cst_44 {dimension_numbers = #tpu.dot_dimension_numbers<[1], [0], [0], [1], [0, 0, 1, 1], [], []>} : vector<8x64xbf16>, vector<64x32xbf16>, vector<8x32xf32> -> vector<8x32xf32>
    %127 = vector.broadcast %38 : vector<1x32xf32> to vector<8x32xf32>
    %128 = arith.addf %126, %127 : vector<8x32xf32>
    %129 = arith.addf %128, %103 : vector<8x32xf32>
    %cst_45 = arith.constant dense<0.000000e+00> : vector<8xf32>
    %130 = vector.multi_reduction <add>, %129, %cst_45 [1] : vector<8x32xf32> to vector<8xf32>
    %131 = vector.shape_cast %130 : vector<8xf32> to vector<8x1xf32>
    %cst_46 = arith.constant 3.200000e+01 : f32
    %132 = vector.broadcast %cst_46 : f32 to vector<8x1xf32>
    %133 = arith.divf %131, %132 : vector<8x1xf32>
    %134 = vector.broadcast %133 : vector<8x1xf32> to vector<8x32xf32>
    %135 = arith.subf %129, %134 : vector<8x32xf32>
    %136 = arith.mulf %135, %135 : vector<8x32xf32>
    %cst_47 = arith.constant dense<0.000000e+00> : vector<8xf32>
    %137 = vector.multi_reduction <add>, %136, %cst_47 [1] : vector<8x32xf32> to vector<8xf32>
    %138 = vector.shape_cast %137 : vector<8xf32> to vector<8x1xf32>
    %cst_48 = arith.constant 3.200000e+01 : f32
    %139 = vector.broadcast %cst_48 : f32 to vector<8x1xf32>
    %140 = arith.divf %138, %139 : vector<8x1xf32>
    %cst_49 = arith.constant 9.99999996E-13 : f32
    %141 = vector.broadcast %cst_49 : f32 to vector<8x1xf32>
    %142 = arith.addf %140, %141 : vector<8x1xf32>
    %143 = math.rsqrt %142 : vector<8x1xf32>
    %144 = vector.broadcast %143 : vector<8x1xf32> to vector<8x32xf32>
    %145 = arith.mulf %135, %144 : vector<8x32xf32>
    %146 = vector.broadcast %39 : vector<1x32xf32> to vector<8x32xf32>
    %147 = arith.mulf %145, %146 : vector<8x32xf32>
    %148 = vector.broadcast %40 : vector<1x32xf32> to vector<8x32xf32>
    %149 = arith.addf %147, %148 : vector<8x32xf32>
    %c1 = arith.constant 1 : index
    %c0_50 = arith.constant 0 : index
    %c0_51 = arith.constant 0 : index
    %150 = vector.load %arg9[%c1, %c0_50, %c0_51] : memref<2x8x128xf32, #tpu.memory_space<vmem>>, vector<1x8x128xf32>
    %151 = vector.shape_cast %150 : vector<1x8x128xf32> to vector<8x128xf32>
    %152 = vector.extract_strided_slice %151 {offsets = [0, 0], sizes = [1, 96], strides = [1, 1]} : vector<8x128xf32> to vector<1x96xf32>
    %153 = vector.extract_strided_slice %151 {offsets = [1, 0], sizes = [1, 64], strides = [1, 1]} : vector<8x128xf32> to vector<1x64xf32>
    %154 = vector.extract_strided_slice %151 {offsets = [2, 0], sizes = [1, 32], strides = [1, 1]} : vector<8x128xf32> to vector<1x32xf32>
    %155 = vector.extract_strided_slice %151 {offsets = [3, 0], sizes = [1, 32], strides = [1, 1]} : vector<8x128xf32> to vector<1x32xf32>
    %156 = vector.extract_strided_slice %151 {offsets = [4, 0], sizes = [1, 32], strides = [1, 1]} : vector<8x128xf32> to vector<1x32xf32>
    %157 = vector.extract_strided_slice %151 {offsets = [5, 0], sizes = [1, 32], strides = [1, 1]} : vector<8x128xf32> to vector<1x32xf32>
    %158 = vector.extract_strided_slice %151 {offsets = [6, 0], sizes = [1, 32], strides = [1, 1]} : vector<8x128xf32> to vector<1x32xf32>
    %159 = vector.extract_strided_slice %151 {offsets = [7, 0], sizes = [1, 32], strides = [1, 1]} : vector<8x128xf32> to vector<1x32xf32>
    %160 = arith.truncf %149 : vector<8x32xf32> to vector<8x32xbf16>
    %c1_52 = arith.constant 1 : index
    %c0_53 = arith.constant 0 : index
    %c0_54 = arith.constant 0 : index
    %161 = vector.load %arg5[%c1_52, %c0_53, %c0_54] : memref<2x32x96xbf16, #tpu.memory_space<vmem>>, vector<1x32x96xbf16>
    %162 = vector.shape_cast %161 : vector<1x32x96xbf16> to vector<32x96xbf16>
    %cst_55 = arith.constant dense<0.000000e+00> : vector<8x96xf32>
    %163 = tpu.matmul %160, %162, %cst_55 {dimension_numbers = #tpu.dot_dimension_numbers<[1], [0], [0], [1], [0, 0, 1, 1], [], []>} : vector<8x32xbf16>, vector<32x96xbf16>, vector<8x96xf32> -> vector<8x96xf32>
    %164 = vector.broadcast %152 : vector<1x96xf32> to vector<8x96xf32>
    %165 = arith.addf %163, %164 : vector<8x96xf32>
    %166 = vector.extract_strided_slice %165 {offsets = [0, 0], sizes = [8, 32], strides = [1, 1]} : vector<8x96xf32> to vector<8x32xf32>
    %167 = vector.shape_cast %166 : vector<8x32xf32> to vector<8x4x8xf32>
    %168 = tpu.transpose %167, [1, 0, 2] : vector<8x4x8xf32> -> vector<4x8x8xf32>
    %169 = vector.extract_strided_slice %165 {offsets = [0, 32], sizes = [8, 32], strides = [1, 1]} : vector<8x96xf32> to vector<8x32xf32>
    %170 = vector.shape_cast %169 : vector<8x32xf32> to vector<8x4x8xf32>
    %171 = tpu.transpose %170, [1, 0, 2] : vector<8x4x8xf32> -> vector<4x8x8xf32>
    %172 = vector.extract_strided_slice %165 {offsets = [0, 64], sizes = [8, 32], strides = [1, 1]} : vector<8x96xf32> to vector<8x32xf32>
    %173 = vector.shape_cast %172 : vector<8x32xf32> to vector<8x4x8xf32>
    %174 = tpu.transpose %173, [1, 0, 2] : vector<8x4x8xf32> -> vector<4x8x8xf32>
    %175 = arith.truncf %168 : vector<4x8x8xf32> to vector<4x8x8xbf16>
    %176 = arith.truncf %171 : vector<4x8x8xf32> to vector<4x8x8xbf16>
    "tpu.trace_start"() <{level = 10 : i32, message = "hqd,hkd->hqk"}> : () -> ()
    %cst_56 = arith.constant dense<0.000000e+00> : vector<4x8x8xf32>
    %177 = tpu.matmul %175, %176, %cst_56 {dimension_numbers = #tpu.dot_dimension_numbers<[2], [2], [1], [1], [0, 0, 0, 1, 1, 1], [0], [0]>} : vector<4x8x8xbf16>, vector<4x8x8xbf16>, vector<4x8x8xf32> -> vector<4x8x8xf32>
    "tpu.trace_stop"() : () -> ()
    %178 = vector.shape_cast %30 : vector<1x8xf32> to vector<1x1x8xf32>
    %179 = vector.broadcast %178 : vector<1x1x8xf32> to vector<4x8x8xf32>
    %180 = arith.addf %177, %179 : vector<4x8x8xf32>
    %cst_57 = arith.constant dense<0xFF800000> : vector<4x8xf32>
    %181 = vector.multi_reduction <maximumf>, %180, %cst_57 [2] : vector<4x8x8xf32> to vector<4x8xf32>
    %182 = vector.shape_cast %181 : vector<4x8xf32> to vector<4x8x1xf32>
    %183 = vector.broadcast %182 : vector<4x8x1xf32> to vector<4x8x8xf32>
    %184 = arith.subf %180, %183 : vector<4x8x8xf32>
    %185 = math.exp %184 : vector<4x8x8xf32>
    %cst_58 = arith.constant dense<0.000000e+00> : vector<4x8xf32>
    %186 = vector.multi_reduction <add>, %185, %cst_58 [2] : vector<4x8x8xf32> to vector<4x8xf32>
    %187 = vector.shape_cast %186 : vector<4x8xf32> to vector<4x8x1xf32>
    %188 = tpu.reciprocal %187 {approx = true} : vector<4x8x1xf32> -> vector<4x8x1xf32>
    %189 = vector.broadcast %188 : vector<4x8x1xf32> to vector<4x8x8xf32>
    %190 = arith.mulf %185, %189 : vector<4x8x8xf32>
    %191 = arith.truncf %190 : vector<4x8x8xf32> to vector<4x8x8xbf16>
    %192 = arith.truncf %174 : vector<4x8x8xf32> to vector<4x8x8xbf16>
    "tpu.trace_start"() <{level = 10 : i32, message = "hqk,hkd->hqd"}> : () -> ()
    %cst_59 = arith.constant dense<0.000000e+00> : vector<4x8x8xf32>
    %193 = tpu.matmul %191, %192, %cst_59 {dimension_numbers = #tpu.dot_dimension_numbers<[2], [1], [1], [2], [0, 0, 0, 1, 1, 2], [0], [0]>} : vector<4x8x8xbf16>, vector<4x8x8xbf16>, vector<4x8x8xf32> -> vector<4x8x8xf32>
    "tpu.trace_stop"() : () -> ()
    %194 = tpu.transpose %193, [1, 0, 2] : vector<4x8x8xf32> -> vector<8x4x8xf32>
    %195 = vector.shape_cast %194 : vector<8x4x8xf32> to vector<8x32xf32>
    %196 = arith.truncf %195 : vector<8x32xf32> to vector<8x32xbf16>
    %c1_60 = arith.constant 1 : index
    %c0_61 = arith.constant 0 : index
    %c0_62 = arith.constant 0 : index
    %197 = vector.load %arg6[%c1_60, %c0_61, %c0_62] : memref<2x32x32xbf16, #tpu.memory_space<vmem>>, vector<1x32x32xbf16>
    %198 = vector.shape_cast %197 : vector<1x32x32xbf16> to vector<32x32xbf16>
    %cst_63 = arith.constant dense<0.000000e+00> : vector<8x32xf32>
    %199 = tpu.matmul %196, %198, %cst_63 {dimension_numbers = #tpu.dot_dimension_numbers<[1], [0], [0], [1], [0, 0, 1, 1], [], []>} : vector<8x32xbf16>, vector<32x32xbf16>, vector<8x32xf32> -> vector<8x32xf32>
    %200 = vector.broadcast %154 : vector<1x32xf32> to vector<8x32xf32>
    %201 = arith.addf %199, %200 : vector<8x32xf32>
    %202 = arith.addf %201, %149 : vector<8x32xf32>
    %cst_64 = arith.constant dense<0.000000e+00> : vector<8xf32>
    %203 = vector.multi_reduction <add>, %202, %cst_64 [1] : vector<8x32xf32> to vector<8xf32>
    %204 = vector.shape_cast %203 : vector<8xf32> to vector<8x1xf32>
    %cst_65 = arith.constant 3.200000e+01 : f32
    %205 = vector.broadcast %cst_65 : f32 to vector<8x1xf32>
    %206 = arith.divf %204, %205 : vector<8x1xf32>
    %207 = vector.broadcast %206 : vector<8x1xf32> to vector<8x32xf32>
    %208 = arith.subf %202, %207 : vector<8x32xf32>
    %209 = arith.mulf %208, %208 : vector<8x32xf32>
    %cst_66 = arith.constant dense<0.000000e+00> : vector<8xf32>
    %210 = vector.multi_reduction <add>, %209, %cst_66 [1] : vector<8x32xf32> to vector<8xf32>
    %211 = vector.shape_cast %210 : vector<8xf32> to vector<8x1xf32>
    %cst_67 = arith.constant 3.200000e+01 : f32
    %212 = vector.broadcast %cst_67 : f32 to vector<8x1xf32>
    %213 = arith.divf %211, %212 : vector<8x1xf32>
    %cst_68 = arith.constant 9.99999996E-13 : f32
    %214 = vector.broadcast %cst_68 : f32 to vector<8x1xf32>
    %215 = arith.addf %213, %214 : vector<8x1xf32>
    %216 = math.rsqrt %215 : vector<8x1xf32>
    %217 = vector.broadcast %216 : vector<8x1xf32> to vector<8x32xf32>
    %218 = arith.mulf %208, %217 : vector<8x32xf32>
    %219 = vector.broadcast %155 : vector<1x32xf32> to vector<8x32xf32>
    %220 = arith.mulf %218, %219 : vector<8x32xf32>
    %221 = vector.broadcast %156 : vector<1x32xf32> to vector<8x32xf32>
    %222 = arith.addf %220, %221 : vector<8x32xf32>
    %223 = arith.truncf %222 : vector<8x32xf32> to vector<8x32xbf16>
    %c1_69 = arith.constant 1 : index
    %c0_70 = arith.constant 0 : index
    %c0_71 = arith.constant 0 : index
    %224 = vector.load %arg7[%c1_69, %c0_70, %c0_71] : memref<2x32x64xbf16, #tpu.memory_space<vmem>>, vector<1x32x64xbf16>
    %225 = vector.shape_cast %224 : vector<1x32x64xbf16> to vector<32x64xbf16>
    %cst_72 = arith.constant dense<0.000000e+00> : vector<8x64xf32>
    %226 = tpu.matmul %223, %225, %cst_72 {dimension_numbers = #tpu.dot_dimension_numbers<[1], [0], [0], [1], [0, 0, 1, 1], [], []>} : vector<8x32xbf16>, vector<32x64xbf16>, vector<8x64xf32> -> vector<8x64xf32>
    %227 = vector.broadcast %153 : vector<1x64xf32> to vector<8x64xf32>
    %228 = arith.addf %226, %227 : vector<8x64xf32>
    %229 = arith.mulf %228, %228 : vector<8x64xf32>
    %230 = arith.mulf %228, %229 : vector<8x64xf32>
    %cst_73 = arith.constant 4.471500e-02 : f32
    %231 = vector.broadcast %cst_73 : f32 to vector<8x64xf32>
    %232 = arith.mulf %231, %230 : vector<8x64xf32>
    %233 = arith.addf %228, %232 : vector<8x64xf32>
    %cst_74 = arith.constant 0.797884583 : f32
    %234 = vector.broadcast %cst_74 : f32 to vector<8x64xf32>
    %235 = arith.mulf %234, %233 : vector<8x64xf32>
    %236 = math.tanh %235 : vector<8x64xf32>
    %cst_75 = arith.constant 1.000000e+00 : f32
    %237 = vector.broadcast %cst_75 : f32 to vector<8x64xf32>
    %238 = arith.addf %237, %236 : vector<8x64xf32>
    %cst_76 = arith.constant 5.000000e-01 : f32
    %239 = vector.broadcast %cst_76 : f32 to vector<8x64xf32>
    %240 = arith.mulf %239, %238 : vector<8x64xf32>
    %241 = arith.mulf %228, %240 : vector<8x64xf32>
    %242 = arith.truncf %241 : vector<8x64xf32> to vector<8x64xbf16>
    %c1_77 = arith.constant 1 : index
    %c0_78 = arith.constant 0 : index
    %c0_79 = arith.constant 0 : index
    %243 = vector.load %arg8[%c1_77, %c0_78, %c0_79] : memref<2x64x32xbf16, #tpu.memory_space<vmem>>, vector<1x64x32xbf16>
    %244 = vector.shape_cast %243 : vector<1x64x32xbf16> to vector<64x32xbf16>
    %cst_80 = arith.constant dense<0.000000e+00> : vector<8x32xf32>
    %245 = tpu.matmul %242, %244, %cst_80 {dimension_numbers = #tpu.dot_dimension_numbers<[1], [0], [0], [1], [0, 0, 1, 1], [], []>} : vector<8x64xbf16>, vector<64x32xbf16>, vector<8x32xf32> -> vector<8x32xf32>
    %246 = vector.broadcast %157 : vector<1x32xf32> to vector<8x32xf32>
    %247 = arith.addf %245, %246 : vector<8x32xf32>
    %248 = arith.addf %247, %222 : vector<8x32xf32>
    %cst_81 = arith.constant dense<0.000000e+00> : vector<8xf32>
    %249 = vector.multi_reduction <add>, %248, %cst_81 [1] : vector<8x32xf32> to vector<8xf32>
    %250 = vector.shape_cast %249 : vector<8xf32> to vector<8x1xf32>
    %cst_82 = arith.constant 3.200000e+01 : f32
    %251 = vector.broadcast %cst_82 : f32 to vector<8x1xf32>
    %252 = arith.divf %250, %251 : vector<8x1xf32>
    %253 = vector.broadcast %252 : vector<8x1xf32> to vector<8x32xf32>
    %254 = arith.subf %248, %253 : vector<8x32xf32>
    %255 = arith.mulf %254, %254 : vector<8x32xf32>
    %cst_83 = arith.constant dense<0.000000e+00> : vector<8xf32>
    %256 = vector.multi_reduction <add>, %255, %cst_83 [1] : vector<8x32xf32> to vector<8xf32>
    %257 = vector.shape_cast %256 : vector<8xf32> to vector<8x1xf32>
    %cst_84 = arith.constant 3.200000e+01 : f32
    %258 = vector.broadcast %cst_84 : f32 to vector<8x1xf32>
    %259 = arith.divf %257, %258 : vector<8x1xf32>
    %cst_85 = arith.constant 9.99999996E-13 : f32
    %260 = vector.broadcast %cst_85 : f32 to vector<8x1xf32>
    %261 = arith.addf %259, %260 : vector<8x1xf32>
    %262 = math.rsqrt %261 : vector<8x1xf32>
    %263 = vector.broadcast %262 : vector<8x1xf32> to vector<8x32xf32>
    %264 = arith.mulf %254, %263 : vector<8x32xf32>
    %265 = vector.broadcast %158 : vector<1x32xf32> to vector<8x32xf32>
    %266 = arith.mulf %264, %265 : vector<8x32xf32>
    %267 = vector.broadcast %159 : vector<1x32xf32> to vector<8x32xf32>
    %268 = arith.addf %266, %267 : vector<8x32xf32>
    %269 = vector.extract_strided_slice %268 {offsets = [0, 0], sizes = [1, 32], strides = [1, 1]} : vector<8x32xf32> to vector<1x32xf32>
    %270 = arith.truncf %269 : vector<1x32xf32> to vector<1x32xbf16>
    %c0_86 = arith.constant 0 : index
    %c0_87 = arith.constant 0 : index
    %271 = vector.load %arg10[%c0_86, %c0_87] : memref<32x32xbf16, #tpu.memory_space<vmem>>, vector<32x32xbf16>
    %cst_88 = arith.constant dense<0.000000e+00> : vector<1x32xf32>
    %272 = tpu.matmul %270, %271, %cst_88 {dimension_numbers = #tpu.dot_dimension_numbers<[1], [0], [0], [1], [0, 0, 1, 1], [], []>} : vector<1x32xbf16>, vector<32x32xbf16>, vector<1x32xf32> -> vector<1x32xf32>
    %273 = arith.addf %272, %3 : vector<1x32xf32>
    %274 = math.tanh %273 : vector<1x32xf32>
    %275 = arith.truncf %274 : vector<1x32xf32> to vector<1x32xbf16>
    %c0_89 = arith.constant 0 : index
    %c0_90 = arith.constant 0 : index
    %276 = vector.load %arg11[%c0_89, %c0_90] : memref<32x128xbf16, #tpu.memory_space<vmem>>, vector<32x128xbf16>
    %cst_91 = arith.constant dense<0.000000e+00> : vector<1x128xf32>
    %277 = tpu.matmul %275, %276, %cst_91 {dimension_numbers = #tpu.dot_dimension_numbers<[1], [0], [0], [1], [0, 0, 1, 1], [], []>} : vector<1x32xbf16>, vector<32x128xbf16>, vector<1x128xf32> -> vector<1x128xf32>
    %278 = arith.addf %277, %4 : vector<1x128xf32>
    %c0_92 = arith.constant 0 : index
    %c0_93 = arith.constant 0 : index
    %c0_94 = arith.constant 0 : index
    %279 = vector.load %arg12[%c0_92, %c0_93, %c0_94] : memref<1x1x128xf32, #tpu.memory_space<vmem>>, vector<1x1x128xf32>
    %280 = vector.shape_cast %279 : vector<1x1x128xf32> to vector<1x128xf32>
    %281 = vector.shape_cast %278 : vector<1x128xf32> to vector<1x1x128xf32>
    tpu.vector_store %arg12[%c0_92, %c0_93, %c0_94], %281 {strides = array<i32>} : memref<1x1x128xf32, #tpu.memory_space<vmem>>, vector<1x1x128xf32>,
    return
  }
  func.func @transform_0(%arg0: i32) -> (i32, i32, i32) {
    %c0_i32 = arith.constant 0 : i32
    %c0_i32_0 = arith.constant 0 : i32
    %c0_i32_1 = arith.constant 0 : i32
    return %arg0, %c0_i32, %c0_i32_0 : i32, i32, i32
  }
  func.func @transform_1(%arg0: i32) -> (i32, i32) {
    %c0_i32 = arith.constant 0 : i32
    %c0_i32_0 = arith.constant 0 : i32
    %c0_i32_1 = arith.constant 0 : i32
    return %c0_i32, %c0_i32_0 : i32, i32
  }
  func.func @transform_2(%arg0: i32) -> (i32, i32, i32) {
    %c0_i32 = arith.constant 0 : i32
    %c0_i32_0 = arith.constant 0 : i32
    %c0_i32_1 = arith.constant 0 : i32
    return %arg0, %c0_i32, %c0_i32_0 : i32, i32, i32
  }
  func.func @transform_3(%arg0: i32) -> (i32, i32) {
    %c0_i32 = arith.constant 0 : i32
    %c0_i32_0 = arith.constant 0 : i32
    %c0_i32_1 = arith.constant 0 : i32
    return %c0_i32, %c0_i32_0 : i32, i32
  }
  func.func @transform_4(%arg0: i32) -> (i32, i32, i32) {
    %c0_i32 = arith.constant 0 : i32
    %c0_i32_0 = arith.constant 0 : i32
    %c0_i32_1 = arith.constant 0 : i32
    %c0_i32_2 = arith.constant 0 : i32
    return %c0_i32, %c0_i32_0, %c0_i32_1 : i32, i32, i32
  }
  func.func @transform_5(%arg0: i32) -> (i32, i32, i32) {
    %c0_i32 = arith.constant 0 : i32
    %c0_i32_0 = arith.constant 0 : i32
    %c0_i32_1 = arith.constant 0 : i32
    %c0_i32_2 = arith.constant 0 : i32
    return %c0_i32, %c0_i32_0, %c0_i32_1 : i32, i32, i32
  }
  func.func @transform_6(%arg0: i32) -> (i32, i32, i32) {
    %c0_i32 = arith.constant 0 : i32
    %c0_i32_0 = arith.constant 0 : i32
    %c0_i32_1 = arith.constant 0 : i32
    %c0_i32_2 = arith.constant 0 : i32
    return %c0_i32, %c0_i32_0, %c0_i32_1 : i32, i32, i32
  }
  func.func @transform_7(%arg0: i32) -> (i32, i32, i32) {
    %c0_i32 = arith.constant 0 : i32
    %c0_i32_0 = arith.constant 0 : i32
    %c0_i32_1 = arith.constant 0 : i32
    %c0_i32_2 = arith.constant 0 : i32
    return %c0_i32, %c0_i32_0, %c0_i32_1 : i32, i32, i32
  }
  func.func @transform_8(%arg0: i32) -> (i32, i32, i32) {
    %c0_i32 = arith.constant 0 : i32
    %c0_i32_0 = arith.constant 0 : i32
    %c0_i32_1 = arith.constant 0 : i32
    %c0_i32_2 = arith.constant 0 : i32
    return %c0_i32, %c0_i32_0, %c0_i32_1 : i32, i32, i32
  }
  func.func @transform_9(%arg0: i32) -> (i32, i32) {
    %c0_i32 = arith.constant 0 : i32
    %c0_i32_0 = arith.constant 0 : i32
    %c0_i32_1 = arith.constant 0 : i32
    return %c0_i32, %c0_i32_0 : i32, i32
  }
  func.func @transform_10(%arg0: i32) -> (i32, i32) {
    %c0_i32 = arith.constant 0 : i32
    %c0_i32_0 = arith.constant 0 : i32
    %c0_i32_1 = arith.constant 0 : i32
    return %c0_i32, %c0_i32_0 : i32, i32
  }
  func.func @transform_11(%arg0: i32) -> (i32, i32, i32) {
    %c0_i32 = arith.constant 0 : i32
    %c0_i32_0 = arith.constant 0 : i32
    %c0_i32_1 = arith.constant 0 : i32
    return %arg0, %c0_i32, %c0_i32_0 : i32, i32, i32
  }
}

</mosaic_0001>

<llo_original>
// kernel: bert_sentiment_forward.1
$region0: #{bert_sentiment_forward.1}
  #allocation0 [shape = 'u32[]', space=smem, size = 0x4, offset = 0x4, fixed_abs, tag = 'smem constant byte address 0x4 - core index']
  #allocation1 [shape = 'u32[144,128]{1,0:T(1,128)}', space=vmem, size = 0x12000, scoped, tag = 'internal scratch']
  %s0 = inlined_call_operand.vmem [shape: f32[2,8,32], index: 0, kind: input, shape index: {}]
  %s1 = inlined_call_operand.vmem [shape: f32[8,32], index: 1, kind: input, shape index: {}]
  %s2 = inlined_call_operand.vmem [shape: f32[2,1,8], index: 2, kind: input, shape index: {}]
  %s3 = inlined_call_operand.vmem [shape: f32[8,128], index: 3, kind: input, shape index: {}]
  %s4 = inlined_call_operand.vmem [shape: bf16[2,32,96], index: 4, kind: input, shape index: {}]
  %s5 = inlined_call_operand.vmem [shape: bf16[2,32,32], index: 5, kind: input, shape index: {}]
  %s6 = inlined_call_operand.vmem [shape: bf16[2,32,64], index: 6, kind: input, shape index: {}]
  %s7 = inlined_call_operand.vmem [shape: bf16[2,64,32], index: 7, kind: input, shape index: {}]
  %s8 = inlined_call_operand.vmem [shape: f32[2,8,128], index: 8, kind: input, shape index: {}]
  %s9 = inlined_call_operand.vmem [shape: bf16[32,32], index: 9, kind: input, shape index: {}]
  %s10 = inlined_call_operand.vmem [shape: bf16[32,128], index: 10, kind: input, shape index: {}]
  %s11 = inlined_call_operand.hbm [shape: f32[2,1,128], index: 11, kind: output, shape index: {}]
  %s12 = sld [smem:[#allocation0]]
  $region77: #{bert_sentiment_forward.1} parent=0
    _
  %s14 = ssub.s32 1, %s12
  %s15 = scalar_select 0, %s14, %s12
  $region1: #{bert_sentiment_forward.1} parent=0
    #allocation2 [shape = 'u8[1024]{0}', space=vmem, size = 0x400, scoped, tag = 'output window, operand 0']
    #allocation3 [shape = 's32[2]{0}', space=sflag, size = 0x8, scoped, tag = 'scoped memory for bert_sentiment_forward.1']
    %16 = vsyncpa [#allocation3], 0
    %s17 = scalar_lea.sflag [#allocation3], 1
    %18 = vsyncpa %s17, 0
    loop: start=0, step=1, limit=4
    $region2: #{bert_sentiment_forward.1} parent=1 // loop_pre_header
      _
    $region3: #{bert_sentiment_forward.1} parent=1 // loop_header
      %s20 = sphi 0, %s24
      %p21 = scmp.ge.s32.totalorder %s20, 4
      %s30 = sphi 0, %s32
      %s33 = sphi 0, %s30
      %s34 = sphi 0, %s33
      %s50 = sphi 0, %s34
      %s54 = sphi 0, %s54
      %s56 = sphi 0, %s54
      %s57 = sphi 0, %s56
      %s71 = sphi 0, %s57
      %s77 = sphi 0, %s79
      %s80 = sphi 0, %s77
      %s81 = sphi 0, %s80
      %s97 = sphi 0, %s81
      %s101 = sphi 0, %s101
      %s103 = sphi 0, %s101
      %s104 = sphi 0, %s103
      %s118 = sphi 0, %s104
      %s122 = sphi 0, %s122
      %s124 = sphi 0, %s122
      %s125 = sphi 0, %s124
      %s139 = sphi 0, %s125
      %s143 = sphi 0, %s143
      %s145 = sphi 0, %s143
      %s146 = sphi 0, %s145
      %s160 = sphi 0, %s146
      %s164 = sphi 0, %s164
      %s166 = sphi 0, %s164
      %s167 = sphi 0, %s166
      %s181 = sphi 0, %s167
      %s185 = sphi 0, %s185
      %s187 = sphi 0, %s185
      %s188 = sphi 0, %s187
      %s202 = sphi 0, %s188
      %s206 = sphi 0, %s206
      %s208 = sphi 0, %s206
      %s209 = sphi 0, %s208
      %s223 = sphi 0, %s209
      %s227 = sphi 0, %s227
      %s229 = sphi 0, %s227
      %s230 = sphi 0, %s229
      %s244 = sphi 0, %s230
      %s248 = sphi 0, %s248
      %s250 = sphi 0, %s248
      %s251 = sphi 0, %s250
      %s265 = sphi 0, %s251
      %s271 = sphi 0, %s273
      %s274 = sphi 0, %s271
      %s275 = sphi 0, %s274
      %s291 = sphi 0, %s275
    $region4: #{bert_sentiment_forward.1} parent=1 // loop_header_branch
      %23 = sbr.rel (%p21) target = $region8
    $region5: #{bert_sentiment_forward.1} parent=1 // loop_body
      %s25 = ssub.s32 %s20, 1
      %s26 = ssub.s32 %s20, 2
      %s27 = sadd.s32 %s20, 1
      %s28 = ssub.s32 %s20, %s27
      %p29 = scmp.eq.s32.totalorder %s28, 0
      %s31 = sadd.s32 %s30, 1
      %s32 = scalar_select %p29, %s30, %s31
      %p35 = pneg %p29
      %p36 = scmp.eq.s32.totalorder %s20, 1
      %p37 = por %p35, %p36
      %p38 = scmp.ne.s32.totalorder %s30, %s33
      %p39 = scmp.eq.s32.totalorder %s20, 0
      %p40 = por %p38, %p39
      %p41 = scmp.ne.s32.totalorder %s30, %s33
      %p42 = scmp.eq.s32.totalorder %s25, 1
      %p43 = por %p41, %p42
      %p44 = scmp.ne.s32.totalorder %s33, %s34
      %p45 = scmp.eq.s32.totalorder %s25, 0
      %p46 = por %p44, %p45
      %p47 = scmp.ne.s32.totalorder %s33, %s34
      %p48 = scmp.eq.s32.totalorder %s26, 1
      %p49 = por %p47, %p48
      %p51 = scmp.ne.s32.totalorder %s34, %s50
      %p52 = scmp.eq.s32.totalorder %s26, 0
      %p53 = por %p51, %p52
      %s55 = sadd.s32 %s54, 1
      %p58 = scmp.eq.s32.totalorder %s20, 1
      %p59 = scmp.ne.s32.totalorder %s54, %s56
      %p60 = scmp.eq.s32.totalorder %s20, 0
      %p61 = por %p59, %p60
      %p62 = scmp.ne.s32.totalorder %s54, %s56
      %p63 = scmp.eq.s32.totalorder %s25, 1
      %p64 = por %p62, %p63
      %p65 = scmp.ne.s32.totalorder %s56, %s57
      %p66 = scmp.eq.s32.totalorder %s25, 0
      %p67 = por %p65, %p66
      %p68 = scmp.ne.s32.totalorder %s56, %s57
      %p69 = scmp.eq.s32.totalorder %s26, 1
      %p70 = por %p68, %p69
      %p72 = scmp.ne.s32.totalorder %s57, %s71
      %p73 = scmp.eq.s32.totalorder %s26, 0
      %p74 = por %p72, %p73
      %s75 = ssub.s32 %s20, %s27
      %p76 = scmp.eq.s32.totalorder %s75, 0
      %s78 = sadd.s32 %s77, 1
      %s79 = scalar_select %p76, %s77, %s78
      %p82 = pneg %p76
      %p83 = scmp.eq.s32.totalorder %s20, 1
      %p84 = por %p82, %p83
      %p85 = scmp.ne.s32.totalorder %s77, %s80
      %p86 = scmp.eq.s32.totalorder %s20, 0
      %p87 = por %p85, %p86
      %p88 = scmp.ne.s32.totalorder %s77, %s80
      %p89 = scmp.eq.s32.totalorder %s25, 1
      %p90 = por %p88, %p89
      %p91 = scmp.ne.s32.totalorder %s80, %s81
      %p92 = scmp.eq.s32.totalorder %s25, 0
      %p93 = por %p91, %p92
      %p94 = scmp.ne.s32.totalorder %s80, %s81
      %p95 = scmp.eq.s32.totalorder %s26, 1
      %p96 = por %p94, %p95
      %p98 = scmp.ne.s32.totalorder %s81, %s97
      %p99 = scmp.eq.s32.totalorder %s26, 0
      %p100 = por %p98, %p99
      %s102 = sadd.s32 %s101, 1
      %p105 = scmp.eq.s32.totalorder %s20, 1
      %p106 = scmp.ne.s32.totalorder %s101, %s103
      %p107 = scmp.eq.s32.totalorder %s20, 0
      %p108 = por %p106, %p107
      %p109 = scmp.ne.s32.totalorder %s101, %s103
      %p110 = scmp.eq.s32.totalorder %s25, 1
      %p111 = por %p109, %p110
      %p112 = scmp.ne.s32.totalorder %s103, %s104
      %p113 = scmp.eq.s32.totalorder %s25, 0
      %p114 = por %p112, %p113
      %p115 = scmp.ne.s32.totalorder %s103, %s104
      %p116 = scmp.eq.s32.totalorder %s26, 1
      %p117 = por %p115, %p116
      %p119 = scmp.ne.s32.totalorder %s104, %s118
      %p120 = scmp.eq.s32.totalorder %s26, 0
      %p121 = por %p119, %p120
      %s123 = sadd.s32 %s122, 1
      %p126 = scmp.eq.s32.totalorder %s20, 1
      %p127 = scmp.ne.s32.totalorder %s122, %s124
      %p128 = scmp.eq.s32.totalorder %s20, 0
      %p129 = por %p127, %p128
      %p130 = scmp.ne.s32.totalorder %s122, %s124
      %p131 = scmp.eq.s32.totalorder %s25, 1
      %p132 = por %p130, %p131
      %p133 = scmp.ne.s32.totalorder %s124, %s125
      %p134 = scmp.eq.s32.totalorder %s25, 0
      %p135 = por %p133, %p134
      %p136 = scmp.ne.s32.totalorder %s124, %s125
      %p137 = scmp.eq.s32.totalorder %s26, 1
      %p138 = por %p136, %p137
      %p140 = scmp.ne.s32.totalorder %s125, %s139
      %p141 = scmp.eq.s32.totalorder %s26, 0
      %p142 = por %p140, %p141
      %s144 = sadd.s32 %s143, 1
      %p147 = scmp.eq.s32.totalorder %s20, 1
      %p148 = scmp.ne.s32.totalorder %s143, %s145
      %p149 = scmp.eq.s32.totalorder %s20, 0
      %p150 = por %p148, %p149
      %p151 = scmp.ne.s32.totalorder %s143, %s145
      %p152 = scmp.eq.s32.totalorder %s25, 1
      %p153 = por %p151, %p152
      %p154 = scmp.ne.s32.totalorder %s145, %s146
      %p155 = scmp.eq.s32.totalorder %s25, 0
      %p156 = por %p154, %p155
      %p157 = scmp.ne.s32.totalorder %s145, %s146
      %p158 = scmp.eq.s32.totalorder %s26, 1
      %p159 = por %p157, %p158
      %p161 = scmp.ne.s32.totalorder %s146, %s160
      %p162 = scmp.eq.s32.totalorder %s26, 0
      %p163 = por %p161, %p162
      %s165 = sadd.s32 %s164, 1
      %p168 = scmp.eq.s32.totalorder %s20, 1
      %p169 = scmp.ne.s32.totalorder %s164, %s166
      %p170 = scmp.eq.s32.totalorder %s20, 0
      %p171 = por %p169, %p170
      %p172 = scmp.ne.s32.totalorder %s164, %s166
      %p173 = scmp.eq.s32.totalorder %s25, 1
      %p174 = por %p172, %p173
      %p175 = scmp.ne.s32.totalorder %s166, %s167
      %p176 = scmp.eq.s32.totalorder %s25, 0
      %p177 = por %p175, %p176
      %p178 = scmp.ne.s32.totalorder %s166, %s167
      %p179 = scmp.eq.s32.totalorder %s26, 1
      %p180 = por %p178, %p179
      %p182 = scmp.ne.s32.totalorder %s167, %s181
      %p183 = scmp.eq.s32.totalorder %s26, 0
      %p184 = por %p182, %p183
      %s186 = sadd.s32 %s185, 1
      %p189 = scmp.eq.s32.totalorder %s20, 1
      %p190 = scmp.ne.s32.totalorder %s185, %s187
      %p191 = scmp.eq.s32.totalorder %s20, 0
      %p192 = por %p190, %p191
      %p193 = scmp.ne.s32.totalorder %s185, %s187
      %p194 = scmp.eq.s32.totalorder %s25, 1
      %p195 = por %p193, %p194
      %p196 = scmp.ne.s32.totalorder %s187, %s188
      %p197 = scmp.eq.s32.totalorder %s25, 0
      %p198 = por %p196, %p197
      %p199 = scmp.ne.s32.totalorder %s187, %s188
      %p200 = scmp.eq.s32.totalorder %s26, 1
      %p201 = por %p199, %p200
      %p203 = scmp.ne.s32.totalorder %s188, %s202
      %p204 = scmp.eq.s32.totalorder %s26, 0
      %p205 = por %p203, %p204
      %s207 = sadd.s32 %s206, 1
      %p210 = scmp.eq.s32.totalorder %s20, 1
      %p211 = scmp.ne.s32.totalorder %s206, %s208
      %p212 = scmp.eq.s32.totalorder %s20, 0
      %p213 = por %p211, %p212
      %p214 = scmp.ne.s32.totalorder %s206, %s208
      %p215 = scmp.eq.s32.totalorder %s25, 1
      %p216 = por %p214, %p215
      %p217 = scmp.ne.s32.totalorder %s208, %s209
      %p218 = scmp.eq.s32.totalorder %s25, 0
      %p219 = por %p217, %p218
      %p220 = scmp.ne.s32.totalorder %s208, %s209
      %p221 = scmp.eq.s32.totalorder %s26, 1
      %p222 = por %p220, %p221
      %p224 = scmp.ne.s32.totalorder %s209, %s223
      %p225 = scmp.eq.s32.totalorder %s26, 0
      %p226 = por %p224, %p225
      %s228 = sadd.s32 %s227, 1
      %p231 = scmp.eq.s32.totalorder %s20, 1
      %p232 = scmp.ne.s32.totalorder %s227, %s229
      %p233 = scmp.eq.s32.totalorder %s20, 0
      %p234 = por %p232, %p233
      %p235 = scmp.ne.s32.totalorder %s227, %s229
      %p236 = scmp.eq.s32.totalorder %s25, 1
      %p237 = por %p235, %p236
      %p238 = scmp.ne.s32.totalorder %s229, %s230
      %p239 = scmp.eq.s32.totalorder %s25, 0
      %p240 = por %p238, %p239
      %p241 = scmp.ne.s32.totalorder %s229, %s230
      %p242 = scmp.eq.s32.totalorder %s26, 1
      %p243 = por %p241, %p242
      %p245 = scmp.ne.s32.totalorder %s230, %s244
      %p246 = scmp.eq.s32.totalorder %s26, 0
      %p247 = por %p245, %p246
      %s249 = sadd.s32 %s248, 1
      %p252 = scmp.eq.s32.totalorder %s20, 1
      %p253 = scmp.ne.s32.totalorder %s248, %s250
      %p254 = scmp.eq.s32.totalorder %s20, 0
      %p255 = por %p253, %p254
      %p256 = scmp.ne.s32.totalorder %s248, %s250
      %p257 = scmp.eq.s32.totalorder %s25, 1
      %p258 = por %p256, %p257
      %p259 = scmp.ne.s32.totalorder %s250, %s251
      %p260 = scmp.eq.s32.totalorder %s25, 0
      %p261 = por %p259, %p260
      %p262 = scmp.ne.s32.totalorder %s250, %s251
      %p263 = scmp.eq.s32.totalorder %s26, 1
      %p264 = por %p262, %p263
      %p266 = scmp.ne.s32.totalorder %s251, %s265
      %p267 = scmp.eq.s32.totalorder %s26, 0
      %p268 = por %p266, %p267
      %s269 = ssub.s32 %s20, %s27
      %p270 = scmp.eq.s32.totalorder %s269, 0
      %s272 = sadd.s32 %s271, 1
      %s273 = scalar_select %p270, %s271, %s272
      %p276 = pneg %p270
      %p277 = scmp.eq.s32.totalorder %s20, 1
      %p278 = por %p276, %p277
      %p279 = scmp.ne.s32.totalorder %s271, %s274
      %p280 = scmp.eq.s32.totalorder %s20, 0
      %p281 = por %p279, %p280
      %p282 = scmp.ne.s32.totalorder %s271, %s274
      %p283 = scmp.eq.s32.totalorder %s25, 1
      %p284 = por %p282, %p283
      %p285 = scmp.ne.s32.totalorder %s274, %s275
      %p286 = scmp.eq.s32.totalorder %s25, 0
      %p287 = por %p285, %p286
      %p288 = scmp.ne.s32.totalorder %s274, %s275
      %p289 = scmp.eq.s32.totalorder %s26, 1
      %p290 = por %p288, %p289
      %p292 = scmp.ne.s32.totalorder %s275, %s291
      %p293 = scmp.eq.s32.totalorder %s26, 0
      %p294 = por %p292, %p293
      %p295 = scmp.le.s32.totalorder 1, %s20
      %p296 = scmp.lt.s32.totalorder %s20, 3
      %p297 = pnand %p295, %p296
      %p298 = pneg %p297
      // Predicated region
      $region9: #{bert_sentiment_forward.1} parent=5 // pred_check
        _
      $region10: #{bert_sentiment_forward.1} parent=5 // pred_check_branch
        %300 = sbr.rel (%p297) target = $region12
      $region11: #{bert_sentiment_forward.1} parent=5 // pred_region
        %s301 = ssub.s32 %s20, 1
        // Predicated region
        $region13: #{bert_sentiment_forward.1} parent=11 // pred_check
          %p302 = pneg %p67
        $region14: #{bert_sentiment_forward.1} parent=11 // pred_check_branch
          %304 = sbr.rel (%p302) target = $region16
        $region15: #{bert_sentiment_forward.1} parent=11 // pred_region
          _
        $region16: #{bert_sentiment_forward.1} parent=11 // pred_fallthru
          _
        // Predicated region
        $region17: #{bert_sentiment_forward.1} parent=11 // pred_check
          %p305 = pneg %p114
        $region18: #{bert_sentiment_forward.1} parent=11 // pred_check_branch
          %307 = sbr.rel (%p305) target = $region20
        $region19: #{bert_sentiment_forward.1} parent=11 // pred_region
          _
        $region20: #{bert_sentiment_forward.1} parent=11 // pred_fallthru
          _
        // Predicated region
        $region21: #{bert_sentiment_forward.1} parent=11 // pred_check
          %p308 = pneg %p135
        $region22: #{bert_sentiment_forward.1} parent=11 // pred_check_branch
          %310 = sbr.rel (%p308) target = $region24
        $region23: #{bert_sentiment_forward.1} parent=11 // pred_region
          _
        $region24: #{bert_sentiment_forward.1} parent=11 // pred_fallthru
          _
        // Predicated region
        $region25: #{bert_sentiment_forward.1} parent=11 // pred_check
          %p311 = pneg %p156
        $region26: #{bert_sentiment_forward.1} parent=11 // pred_check_branch
          %313 = sbr.rel (%p311) target = $region28
        $region27: #{bert_sentiment_forward.1} parent=11 // pred_region
          _
        $region28: #{bert_sentiment_forward.1} parent=11 // pred_fallthru
          _
        // Predicated region
        $region29: #{bert_sentiment_forward.1} parent=11 // pred_check
          %p314 = pneg %p177
        $region30: #{bert_sentiment_forward.1} parent=11 // pred_check_branch
          %316 = sbr.rel (%p314) target = $region32
        $region31: #{bert_sentiment_forward.1} parent=11 // pred_region
          _
        $region32: #{bert_sentiment_forward.1} parent=11 // pred_fallthru
          _
        // Predicated region
        $region33: #{bert_sentiment_forward.1} parent=11 // pred_check
          %p317 = pneg %p198
        $region34: #{bert_sentiment_forward.1} parent=11 // pred_check_branch
          %319 = sbr.rel (%p317) target = $region36
        $region35: #{bert_sentiment_forward.1} parent=11 // pred_region
          _
        $region36: #{bert_sentiment_forward.1} parent=11 // pred_fallthru
          _
        // Predicated region
        $region37: #{bert_sentiment_forward.1} parent=11 // pred_check
          %p320 = pneg %p219
        $region38: #{bert_sentiment_forward.1} parent=11 // pred_check_branch
          %322 = sbr.rel (%p320) target = $region40
        $region39: #{bert_sentiment_forward.1} parent=11 // pred_region
          _
        $region40: #{bert_sentiment_forward.1} parent=11 // pred_fallthru
          _
        // Predicated region
        $region41: #{bert_sentiment_forward.1} parent=11 // pred_check
          %p323 = pneg %p240
        $region42: #{bert_sentiment_forward.1} parent=11 // pred_check_branch
          %325 = sbr.rel (%p323) target = $region44
        $region43: #{bert_sentiment_forward.1} parent=11 // pred_region
          _
        $region44: #{bert_sentiment_forward.1} parent=11 // pred_fallthru
          _
        // Predicated region
        $region45: #{bert_sentiment_forward.1} parent=11 // pred_check
          %p326 = pneg %p261
        $region46: #{bert_sentiment_forward.1} parent=11 // pred_check_branch
          %328 = sbr.rel (%p326) target = $region48
        $region47: #{bert_sentiment_forward.1} parent=11 // pred_region
          _
        $region48: #{bert_sentiment_forward.1} parent=11 // pred_fallthru
          _
      $region12: #{bert_sentiment_forward.1} parent=5 // pred_fallthru
        _
      %p329 = scmp.lt.s32.totalorder %s20, 2
      // Predicated region
      $region49: #{bert_sentiment_forward.1} parent=5 // pred_check
        %p330 = pneg %p329
      $region50: #{bert_sentiment_forward.1} parent=5 // pred_check_branch
        %332 = sbr.rel (%p330) target = $region52
      $region51: #{bert_sentiment_forward.1} parent=5 // pred_region
        // Predicated region
        $region53: #{bert_sentiment_forward.1} parent=51 // pred_check
          %p333 = pneg %p40
        $region54: #{bert_sentiment_forward.1} parent=51 // pred_check_branch
          %335 = sbr.rel (%p333) target = $region56
        $region55: #{bert_sentiment_forward.1} parent=51 // pred_region
          %p336 = scmp.lt.s32.totalorder %s20, 1
          %s337 = scalar_select %p336, %s20, 1
          %s338 = smul.addr %s337, 8
          %s339 = scalar_lea.vmem %s0, %s338
        $region56: #{bert_sentiment_forward.1} parent=51 // pred_fallthru
          _
        // Predicated region
        $region57: #{bert_sentiment_forward.1} parent=51 // pred_check
          %p340 = pneg %p87
        $region58: #{bert_sentiment_forward.1} parent=51 // pred_check_branch
          %342 = sbr.rel (%p340) target = $region60
        $region59: #{bert_sentiment_forward.1} parent=51 // pred_region
          %p343 = scmp.lt.s32.totalorder %s20, 1
          %s344 = scalar_select %p343, %s20, 1
          %s345 = scalar_lea.vmem %s2, %s344
        $region60: #{bert_sentiment_forward.1} parent=51 // pred_fallthru
          _
      $region52: #{bert_sentiment_forward.1} parent=5 // pred_fallthru
        _
      %p346 = scmp.le.s32.totalorder 1, %s20
      %p347 = scmp.lt.s32.totalorder %s20, 3
      %p348 = pnand %p346, %p347
      %p349 = pneg %p348
      // Predicated region
      $region61: #{bert_sentiment_forward.1} parent=5 // pred_check
        _
      $region62: #{bert_sentiment_forward.1} parent=5 // pred_check_branch
        %351 = sbr.rel (%p348) target = $region64
      $region63: #{bert_sentiment_forward.1} parent=5 // pred_region
        %s352 = ssub.s32 %s20, 1
        %p353 = scmp.lt.s32.totalorder %s25, 1
        %s354 = scalar_select %p353, %s25, 1
        %s355 = smul.addr %s354, 8
        %s356 = scalar_lea.vmem %s0, %s355
        %p357 = pneg %p46
        %p358 = pneg %p43
        %p359 = pneg %p67
        %p360 = pneg %p64
        %p361 = scmp.lt.s32.totalorder %s25, 1
        %s362 = scalar_select %p361, %s25, 1
        %s363 = scalar_lea.vmem %s2, %s362
        %p364 = pneg %p93
        %p365 = pneg %p90
        %p366 = pneg %p114
        %p367 = pneg %p111
        %p368 = pneg %p135
        %p369 = pneg %p132
        %p370 = pneg %p156
        %p371 = pneg %p153
        %p372 = pneg %p177
        %p373 = pneg %p174
        %p374 = pneg %p198
        %p375 = pneg %p195
        %p376 = pneg %p219
        %p377 = pneg %p216
        %p378 = pneg %p240
        %p379 = pneg %p237
        %p380 = pneg %p261
        %p381 = pneg %p258
        %p382 = pneg %p287
        %p383 = pneg %p284
        %s384 = sand.u32 %s274, 1
        %s385 = scalar_lea.sflag [#allocation3], %s384
        %s386 = sand.u32 %s274, 1
        %s387 = scalar_lea.vmem [#allocation2], %s386
        %p388 = scmp.lt.s32.totalorder %s25, 1
        %s389 = scalar_select %p388, %s25, 1
        %s390 = smul.addr %s389, 8
        %s391 = scalar_lea.vmem %s0, %s390
        %p392 = scmp.lt.s32.totalorder %s25, 1
        %s393 = scalar_select %p392, %s25, 1
        %s394 = scalar_lea.vmem %s2, %s393
        %v396 = vld [vmem:[%s3] sm:$0xff]
        %v397 = vld [vmem:[%s391] sm:$0xff]
        %v398 = vld [vmem:[%s1] sm:$0xff]
        %v399 = vadd.f32 %v397, %v398
        %vm400 = vcmask 261120
        %v401 = vsel %vm400, %v399, 0.0
        %402 = vadd.xlane.f32.xlu0 %v401
        %v403 = vpop.xlane.xlu0 %402
        %v404 = vrcp.pop 32.0
        %v405 = vmul.f32 %v403, %v404
        %v406 = vsub.f32 %v399, %v405
        %v407 = vmul.f32 %v406, %v406
        %v408 = vsel %vm400, %v407, 0.0
        %409 = vadd.xlane.f32.xlu0 %v408
        %v410 = vpop.xlane.xlu0 %409
        %v411 = vmul.f32 %v410, %v404
        %v412 = vadd.f32 %v411, 1e-12
        %v413 = vrsqrt.pop %v412
        %v414 = vmul.f32 %v406, %v413
        %v415 = vlaneseq
        %v416 = vshrl.u32 %v415, 7
        %v417 = vsub.s32 0, %v416
        %v418 = vrot.slane %v396, %v417
        %v419 = vmul.f32 %v414, %v418
        %v420 = vlaneseq
        %v421 = vshrl.u32 %v420, 7
        %v422 = vsub.s32 1, %v421
        %v423 = vrot.slane %v396, %v422
        %v424 = vadd.f32 %v419, %v423
        %v425 = vld [vmem:[%s394] sm:$0x1]
        %v426 = vld [vmem:[%s8] sm:$0xff]
        %v427 = vpack.c.bf16 %v424, %v424
        %v428 = vld [vmem:[%s4] sm:$0xf]
        %v429 = vld [vmem:[%s4 + $0x4] sm:$0xf]
        %v430 = vld [vmem:[%s4 + $0x8] sm:$0xf]
        %v431 = vld [vmem:[%s4 + $0xc] sm:$0xf]
        %v432 = vlaneseq
        %v433 = vshrl.u32 %v432, 7
        %v434 = vsub.s32 0, %v433
        %v435 = vrot.slane %v426, %v434
        %v440 = vunpack.c.l.b16 %v428
        %v441 = vunpack.c.l.b16 %v429
        %v442 = vunpack.c.l.b16 %v430
        %v443 = vunpack.c.l.b16 %v431
        %v444 = vpack.c.b16 %v441, %v440
        %v445 = vpack.c.b16 %v443, %v442
        %v449 = vsel %vm400, %v427, 0
        %451 = vmatprep.subr.bf16.mxu0 0
        %452 = vmatpush1.bf16.msra.mxu0 %v444
        %453 = vmatprep.subr.bf16.mxu0 0
        %454 = vmatpush1.bf16.msra.mxu0 %v445
        %455 = vmatprep.subr.bf16.mxu0 0
        %456 = vmatpush1.bf16.msra.mxu0 0
        %457 = vmatprep.subr.bf16.mxu0 0
        %458 = vmatpush1.bf16.msra.mxu0 0
        %459 = vmatprep.subr.bf16.mxu0 0
        %460 = vmatpush1.bf16.msra.mxu0 0
        %461 = vmatprep.subr.bf16.mxu0 0
        %462 = vmatpush1.bf16.msra.mxu0 0
        %463 = vmatprep.subr.bf16.mxu0 0
        %464 = vmatpush1.bf16.msra.mxu0 0
        %465 = vmatprep.subr.bf16.mxu0 0
        %466 = vmatpush1.bf16.msra.mxu0 0
        %467 = vmatprep.subr.bf16.mxu0 0
        %468 = vmatpush1.bf16.msra.mxu0 0
        %469 = vmatprep.subr.bf16.mxu0 0
        %470 = vmatpush1.bf16.msra.mxu0 0
        %471 = vmatprep.subr.bf16.mxu0 0
        %472 = vmatpush1.bf16.msra.mxu0 0
        %473 = vmatprep.subr.bf16.mxu0 0
        %474 = vmatpush1.bf16.msra.mxu0 0
        %475 = vmatprep.subr.bf16.mxu0 0
        %476 = vmatpush1.bf16.msra.mxu0 0
        %477 = vmatprep.subr.bf16.mxu0 0
        %478 = vmatpush1.bf16.msra.mxu0 0
        %479 = vmatprep.subr.bf16.mxu0 0
        %480 = vmatpush1.bf16.msra.mxu0 0
        %481 = vmatprep.subr.bf16.mxu0 0
        %482 = vmatpush1.bf16.msra.mxu0 0
        %483 = vmatprep.mubr.bf16.mxu0 0
        %484 = vmatmul.mubr.bf16.gmra.mrb[0].mxu0 %v449
        %v485 = vpop.f32.mrb[0].mxu0
        %v486 = vadd.f32 %v435, %v485
        %v487 = vpop.f32.mrb[0].mxu0
        %v488 = vpop.f32.mrb[0].mxu0
        %v489 = vpop.f32.mrb[0].mxu0
        %490 = vdwg.mxu0
        %492 = vrot.lane.b32.xlu0 %v486, 120
        %v493 = vpop.permute.xlu0 %492
        %495 = vrot.lane.b32.xlu0 %v486, 112
        %v496 = vpop.permute.xlu0 %495
        %498 = vrot.lane.b32.xlu0 %v486, 104
        %v499 = vpop.permute.xlu0 %498
        %v501 = vcombine.low %v486, %v496
        %v502 = vcombine.high %v486, %v496
        %v504 = vunpack.c.l.s4 1983009808
        %v505 = vunpack.c.0.s8 %v504
        %v506 = vlaneseq
        %v507 = vshrl.u32 %v506, 7
        %v508 = vsub.s32 %v505, %v507
        %v509 = vrot.slane %v501, %v508
        %v511 = vunpack.c.l.s4 1983009808
        %v512 = vunpack.c.0.s8 %v511
        %v513 = vlaneseq
        %v514 = vshrl.u32 %v513, 7
        %v515 = vsub.s32 %v512, %v514
        %v516 = vrot.slane %v502, %v515
        %v517 = vcombine.low %v493, %v499
        %v518 = vcombine.high %v493, %v499
        %v520 = vunpack.c.l.s4 1983009808
        %v521 = vunpack.c.0.s8 %v520
        %v522 = vlaneseq
        %v523 = vshrl.u32 %v522, 7
        %v524 = vsub.s32 %v521, %v523
        %v525 = vrot.slane %v517, %v524
        %v527 = vunpack.c.l.s4 1983009808
        %v528 = vunpack.c.0.s8 %v527
        %v529 = vlaneseq
        %v530 = vshrl.u32 %v529, 7
        %v531 = vsub.s32 %v528, %v530
        %v532 = vrot.slane %v518, %v531
        %v533 = vcombine.low %v509, %v525
        %v534 = vcombine.high %v509, %v525
        %v536 = vunpack.c.l.s4 1934713408
        %v537 = vunpack.c.0.s8 %v536
        %v538 = vlaneseq
        %v539 = vshrl.u32 %v538, 7
        %v540 = vsub.s32 %v537, %v539
        %v541 = vrot.slane %v533, %v540
        %v543 = vunpack.c.l.s4 1934713408
        %v544 = vunpack.c.0.s8 %v543
        %v545 = vlaneseq
        %v546 = vshrl.u32 %v545, 7
        %v547 = vsub.s32 %v544, %v546
        %v548 = vrot.slane %v534, %v547
        %v549 = vcombine.low %v516, %v532
        %v550 = vcombine.high %v516, %v532
        %v552 = vunpack.c.l.s4 1934713408
        %v553 = vunpack.c.0.s8 %v552
        %v554 = vlaneseq
        %v555 = vshrl.u32 %v554, 7
        %v556 = vsub.s32 %v553, %v555
        %v557 = vrot.slane %v549, %v556
        %v559 = vunpack.c.l.s4 1934713408
        %v560 = vunpack.c.0.s8 %v559
        %v561 = vlaneseq
        %v562 = vshrl.u32 %v561, 7
        %v563 = vsub.s32 %v560, %v562
        %v564 = vrot.slane %v550, %v563
        %v565 = vcombine.high %v541, 0.0
        %v566 = vcombine.high %v548, 0.0
        %v567 = vcombine.high %v557, 0.0
        %v568 = vcombine.high %v564, 0.0
        %v569 = vcombine.low %v541, %v548
        %v571 = vunpack.c.l.s4 1983009808
        %v572 = vunpack.c.0.s8 %v571
        %v573 = vlaneseq
        %v574 = vshrl.u32 %v573, 7
        %v575 = vsub.s32 %v572, %v574
        %v576 = vrot.slane %v569, %v575
        %v577 = vcombine.low %v565, %v566
        %v579 = vunpack.c.l.s4 1983009808
        %v580 = vunpack.c.0.s8 %v579
        %v581 = vlaneseq
        %v582 = vshrl.u32 %v581, 7
        %v583 = vsub.s32 %v580, %v582
        %v584 = vrot.slane %v577, %v583
        %v585 = vcombine.low %v557, %v564
        %v587 = vunpack.c.l.s4 1983009808
        %v588 = vunpack.c.0.s8 %v587
        %v589 = vlaneseq
        %v590 = vshrl.u32 %v589, 7
        %v591 = vsub.s32 %v588, %v590
        %v592 = vrot.slane %v585, %v591
        %v593 = vcombine.low %v567, %v568
        %v595 = vunpack.c.l.s4 1983009808
        %v596 = vunpack.c.0.s8 %v595
        %v597 = vlaneseq
        %v598 = vshrl.u32 %v597, 7
        %v599 = vsub.s32 %v596, %v598
        %v600 = vrot.slane %v593, %v599
        %v601 = vcombine.low %v576, %v584
        %v602 = vcombine.high %v576, %v584
        %v604 = vunpack.c.l.s4 1934713408
        %v605 = vunpack.c.0.s8 %v604
        %v606 = vlaneseq
        %v607 = vshrl.u32 %v606, 7
        %v608 = vsub.s32 %v605, %v607
        %v609 = vrot.slane %v601, %v608
        %v611 = vunpack.c.l.s4 1934713408
        %v612 = vunpack.c.0.s8 %v611
        %v613 = vlaneseq
        %v614 = vshrl.u32 %v613, 7
        %v615 = vsub.s32 %v612, %v614
        %v616 = vrot.slane %v602, %v615
        %v617 = vcombine.low %v592, %v600
        %v618 = vcombine.high %v592, %v600
        %v620 = vunpack.c.l.s4 1934713408
        %v621 = vunpack.c.0.s8 %v620
        %v622 = vlaneseq
        %v623 = vshrl.u32 %v622, 7
        %v624 = vsub.s32 %v621, %v623
        %v625 = vrot.slane %v617, %v624
        %v627 = vunpack.c.l.s4 1934713408
        %v628 = vunpack.c.0.s8 %v627
        %v629 = vlaneseq
        %v630 = vshrl.u32 %v629, 7
        %v631 = vsub.s32 %v628, %v630
        %v632 = vrot.slane %v618, %v631
        %v633 = vcombine.low %v609, %v625
        %v634 = vcombine.high %v609, %v625
        %v635 = vcombine.low %v616, %v632
        %v636 = vcombine.high %v616, %v632
        %637 = vrot.lane.b32.xlu0 %v486, 96
        %v638 = vpop.permute.xlu0 %637
        %639 = vrot.lane.b32.xlu0 %v493, 96
        %v640 = vpop.permute.xlu0 %639
        %641 = vrot.lane.b32.xlu0 %v496, 96
        %v642 = vpop.permute.xlu0 %641
        %643 = vrot.lane.b32.xlu0 %v499, 96
        %v644 = vpop.permute.xlu0 %643
        %v649 = vcombine.low %v638, %v642
        %v650 = vcombine.high %v638, %v642
        %v652 = vunpack.c.l.s4 1983009808
        %v653 = vunpack.c.0.s8 %v652
        %v654 = vlaneseq
        %v655 = vshrl.u32 %v654, 7
        %v656 = vsub.s32 %v653, %v655
        %v657 = vrot.slane %v649, %v656
        %v659 = vunpack.c.l.s4 1983009808
        %v660 = vunpack.c.0.s8 %v659
        %v661 = vlaneseq
        %v662 = vshrl.u32 %v661, 7
        %v663 = vsub.s32 %v660, %v662
        %v664 = vrot.slane %v650, %v663
        %v665 = vcombine.low %v640, %v644
        %v666 = vcombine.high %v640, %v644
        %v668 = vunpack.c.l.s4 1983009808
        %v669 = vunpack.c.0.s8 %v668
        %v670 = vlaneseq
        %v671 = vshrl.u32 %v670, 7
        %v672 = vsub.s32 %v669, %v671
        %v673 = vrot.slane %v665, %v672
        %v675 = vunpack.c.l.s4 1983009808
        %v676 = vunpack.c.0.s8 %v675
        %v677 = vlaneseq
        %v678 = vshrl.u32 %v677, 7
        %v679 = vsub.s32 %v676, %v678
        %v680 = vrot.slane %v666, %v679
        %v681 = vcombine.low %v657, %v673
        %v682 = vcombine.high %v657, %v673
        %v684 = vunpack.c.l.s4 1934713408
        %v685 = vunpack.c.0.s8 %v684
        %v686 = vlaneseq
        %v687 = vshrl.u32 %v686, 7
        %v688 = vsub.s32 %v685, %v687
        %v689 = vrot.slane %v681, %v688
        %v691 = vunpack.c.l.s4 1934713408
        %v692 = vunpack.c.0.s8 %v691
        %v693 = vlaneseq
        %v694 = vshrl.u32 %v693, 7
        %v695 = vsub.s32 %v692, %v694
        %v696 = vrot.slane %v682, %v695
        %v697 = vcombine.low %v664, %v680
        %v698 = vcombine.high %v664, %v680
        %v700 = vunpack.c.l.s4 1934713408
        %v701 = vunpack.c.0.s8 %v700
        %v702 = vlaneseq
        %v703 = vshrl.u32 %v702, 7
        %v704 = vsub.s32 %v701, %v703
        %v705 = vrot.slane %v697, %v704
        %v707 = vunpack.c.l.s4 1934713408
        %v708 = vunpack.c.0.s8 %v707
        %v709 = vlaneseq
        %v710 = vshrl.u32 %v709, 7
        %v711 = vsub.s32 %v708, %v710
        %v712 = vrot.slane %v698, %v711
        %v713 = vcombine.high %v689, 0.0
        %v714 = vcombine.high %v696, 0.0
        %v715 = vcombine.high %v705, 0.0
        %v716 = vcombine.high %v712, 0.0
        %v717 = vcombine.low %v689, %v696
        %v719 = vunpack.c.l.s4 1983009808
        %v720 = vunpack.c.0.s8 %v719
        %v721 = vlaneseq
        %v722 = vshrl.u32 %v721, 7
        %v723 = vsub.s32 %v720, %v722
        %v724 = vrot.slane %v717, %v723
        %v725 = vcombine.low %v713, %v714
        %v727 = vunpack.c.l.s4 1983009808
        %v728 = vunpack.c.0.s8 %v727
        %v729 = vlaneseq
        %v730 = vshrl.u32 %v729, 7
        %v731 = vsub.s32 %v728, %v730
        %v732 = vrot.slane %v725, %v731
        %v733 = vcombine.low %v705, %v712
        %v735 = vunpack.c.l.s4 1983009808
        %v736 = vunpack.c.0.s8 %v735
        %v737 = vlaneseq
        %v738 = vshrl.u32 %v737, 7
        %v739 = vsub.s32 %v736, %v738
        %v740 = vrot.slane %v733, %v739
        %v741 = vcombine.low %v715, %v716
        %v743 = vunpack.c.l.s4 1983009808
        %v744 = vunpack.c.0.s8 %v743
        %v745 = vlaneseq
        %v746 = vshrl.u32 %v745, 7
        %v747 = vsub.s32 %v744, %v746
        %v748 = vrot.slane %v741, %v747
        %v749 = vcombine.low %v724, %v732
        %v750 = vcombine.high %v724, %v732
        %v752 = vunpack.c.l.s4 1934713408
        %v753 = vunpack.c.0.s8 %v752
        %v754 = vlaneseq
        %v755 = vshrl.u32 %v754, 7
        %v756 = vsub.s32 %v753, %v755
        %v757 = vrot.slane %v749, %v756
        %v759 = vunpack.c.l.s4 1934713408
        %v760 = vunpack.c.0.s8 %v759
        %v761 = vlaneseq
        %v762 = vshrl.u32 %v761, 7
        %v763 = vsub.s32 %v760, %v762
        %v764 = vrot.slane %v750, %v763
        %v765 = vcombine.low %v740, %v748
        %v766 = vcombine.high %v740, %v748
        %v768 = vunpack.c.l.s4 1934713408
        %v769 = vunpack.c.0.s8 %v768
        %v770 = vlaneseq
        %v771 = vshrl.u32 %v770, 7
        %v772 = vsub.s32 %v769, %v771
        %v773 = vrot.slane %v765, %v772
        %v775 = vunpack.c.l.s4 1934713408
        %v776 = vunpack.c.0.s8 %v775
        %v777 = vlaneseq
        %v778 = vshrl.u32 %v777, 7
        %v779 = vsub.s32 %v776, %v778
        %v780 = vrot.slane %v766, %v779
        %v781 = vcombine.low %v757, %v773
        %v782 = vcombine.high %v757, %v773
        %v783 = vcombine.low %v764, %v780
        %v784 = vcombine.high %v764, %v780
        %785 = vrot.lane.b32.xlu0 %v486, 64
        %v786 = vpop.permute.xlu0 %785
        %787 = vrot.lane.b32.xlu0 %v493, 64
        %v788 = vpop.permute.xlu0 %787
        %789 = vrot.lane.b32.xlu0 %v496, 64
        %v790 = vpop.permute.xlu0 %789
        %791 = vrot.lane.b32.xlu0 %v499, 64
        %v792 = vpop.permute.xlu0 %791
        %v797 = vcombine.low %v786, %v790
        %v798 = vcombine.high %v786, %v790
        %v800 = vunpack.c.l.s4 1983009808
        %v801 = vunpack.c.0.s8 %v800
        %v802 = vlaneseq
        %v803 = vshrl.u32 %v802, 7
        %v804 = vsub.s32 %v801, %v803
        %v805 = vrot.slane %v797, %v804
        %v807 = vunpack.c.l.s4 1983009808
        %v808 = vunpack.c.0.s8 %v807
        %v809 = vlaneseq
        %v810 = vshrl.u32 %v809, 7
        %v811 = vsub.s32 %v808, %v810
        %v812 = vrot.slane %v798, %v811
        %v813 = vcombine.low %v788, %v792
        %v814 = vcombine.high %v788, %v792
        %v816 = vunpack.c.l.s4 1983009808
        %v817 = vunpack.c.0.s8 %v816
        %v818 = vlaneseq
        %v819 = vshrl.u32 %v818, 7
        %v820 = vsub.s32 %v817, %v819
        %v821 = vrot.slane %v813, %v820
        %v823 = vunpack.c.l.s4 1983009808
        %v824 = vunpack.c.0.s8 %v823
        %v825 = vlaneseq
        %v826 = vshrl.u32 %v825, 7
        %v827 = vsub.s32 %v824, %v826
        %v828 = vrot.slane %v814, %v827
        %v829 = vcombine.low %v805, %v821
        %v830 = vcombine.high %v805, %v821
        %v832 = vunpack.c.l.s4 1934713408
        %v833 = vunpack.c.0.s8 %v832
        %v834 = vlaneseq
        %v835 = vshrl.u32 %v834, 7
        %v836 = vsub.s32 %v833, %v835
        %v837 = vrot.slane %v829, %v836
        %v839 = vunpack.c.l.s4 1934713408
        %v840 = vunpack.c.0.s8 %v839
        %v841 = vlaneseq
        %v842 = vshrl.u32 %v841, 7
        %v843 = vsub.s32 %v840, %v842
        %v844 = vrot.slane %v830, %v843
        %v845 = vcombine.low %v812, %v828
        %v846 = vcombine.high %v812, %v828
        %v848 = vunpack.c.l.s4 1934713408
        %v849 = vunpack.c.0.s8 %v848
        %v850 = vlaneseq
        %v851 = vshrl.u32 %v850, 7
        %v852 = vsub.s32 %v849, %v851
        %v853 = vrot.slane %v845, %v852
        %v855 = vunpack.c.l.s4 1934713408
        %v856 = vunpack.c.0.s8 %v855
        %v857 = vlaneseq
        %v858 = vshrl.u32 %v857, 7
        %v859 = vsub.s32 %v856, %v858
        %v860 = vrot.slane %v846, %v859
        %v861 = vcombine.high %v837, 0.0
        %v862 = vcombine.high %v844, 0.0
        %v863 = vcombine.high %v853, 0.0
        %v864 = vcombine.high %v860, 0.0
        %v865 = vcombine.low %v837, %v844
        %v867 = vunpack.c.l.s4 1983009808
        %v868 = vunpack.c.0.s8 %v867
        %v869 = vlaneseq
        %v870 = vshrl.u32 %v869, 7
        %v871 = vsub.s32 %v868, %v870
        %v872 = vrot.slane %v865, %v871
        %v873 = vcombine.low %v861, %v862
        %v875 = vunpack.c.l.s4 1983009808
        %v876 = vunpack.c.0.s8 %v875
        %v877 = vlaneseq
        %v878 = vshrl.u32 %v877, 7
        %v879 = vsub.s32 %v876, %v878
        %v880 = vrot.slane %v873, %v879
        %v881 = vcombine.low %v853, %v860
        %v883 = vunpack.c.l.s4 1983009808
        %v884 = vunpack.c.0.s8 %v883
        %v885 = vlaneseq
        %v886 = vshrl.u32 %v885, 7
        %v887 = vsub.s32 %v884, %v886
        %v888 = vrot.slane %v881, %v887
        %v889 = vcombine.low %v863, %v864
        %v891 = vunpack.c.l.s4 1983009808
        %v892 = vunpack.c.0.s8 %v891
        %v893 = vlaneseq
        %v894 = vshrl.u32 %v893, 7
        %v895 = vsub.s32 %v892, %v894
        %v896 = vrot.slane %v889, %v895
        %v897 = vcombine.low %v872, %v880
        %v898 = vcombine.high %v872, %v880
        %v900 = vunpack.c.l.s4 1934713408
        %v901 = vunpack.c.0.s8 %v900
        %v902 = vlaneseq
        %v903 = vshrl.u32 %v902, 7
        %v904 = vsub.s32 %v901, %v903
        %v905 = vrot.slane %v897, %v904
        %v907 = vunpack.c.l.s4 1934713408
        %v908 = vunpack.c.0.s8 %v907
        %v909 = vlaneseq
        %v910 = vshrl.u32 %v909, 7
        %v911 = vsub.s32 %v908, %v910
        %v912 = vrot.slane %v898, %v911
        %v913 = vcombine.low %v888, %v896
        %v914 = vcombine.high %v888, %v896
        %v916 = vunpack.c.l.s4 1934713408
        %v917 = vunpack.c.0.s8 %v916
        %v918 = vlaneseq
        %v919 = vshrl.u32 %v918, 7
        %v920 = vsub.s32 %v917, %v919
        %v921 = vrot.slane %v913, %v920
        %v923 = vunpack.c.l.s4 1934713408
        %v924 = vunpack.c.0.s8 %v923
        %v925 = vlaneseq
        %v926 = vshrl.u32 %v925, 7
        %v927 = vsub.s32 %v924, %v926
        %v928 = vrot.slane %v914, %v927
        %v929 = vcombine.low %v905, %v921
        %v930 = vcombine.high %v905, %v921
        %v931 = vcombine.low %v912, %v928
        %v932 = vcombine.high %v912, %v928
        %v933 = vpack.c.bf16 %v633, %v633
        %v934 = vpack.c.bf16 %v634, %v634
        %v935 = vpack.c.bf16 %v635, %v635
        %v936 = vpack.c.bf16 %v636, %v636
        %v937 = vpack.c.bf16 %v781, %v781
        %v938 = vpack.c.bf16 %v782, %v782
        %v939 = vpack.c.bf16 %v783, %v783
        %v940 = vpack.c.bf16 %v784, %v784
        %v942 = vlaneseq
        %v943 = vshrl.u32 %v942, 7
        %v944 = vsub.s32 0, %v943
        %v945 = vrot.slane %v425, %v944
        %vm947 = vcmask 64512
        %v949 = vsel %vm947, %v933, 0
        %v952 = vsel %vm947, %v937, 0
        %954 = vmatprep.subr.bf16.mxu0 0
        %955 = vmatpush1.bf16.xpose.msra.mxu0 %v952
        %956 = vmatprep.subr.bf16.mxu0 0
        %957 = vmatpush1.bf16.xpose.msra.mxu0 0
        %958 = vmatprep.subr.bf16.mxu0 0
        %959 = vmatpush1.bf16.xpose.msra.mxu0 0
        %960 = vmatprep.subr.bf16.mxu0 0
        %961 = vmatpush1.bf16.xpose.msra.mxu0 0
        %962 = vmatprep.subr.bf16.mxu0 0
        %963 = vmatpush1.bf16.xpose.msra.mxu0 0
        %964 = vmatprep.subr.bf16.mxu0 0
        %965 = vmatpush1.bf16.xpose.msra.mxu0 0
        %966 = vmatprep.subr.bf16.mxu0 0
        %967 = vmatpush1.bf16.xpose.msra.mxu0 0
        %968 = vmatprep.subr.bf16.mxu0 0
        %969 = vmatpush1.bf16.xpose.msra.mxu0 0
        %970 = vmatprep.subr.bf16.mxu0 0
        %971 = vmatpush1.bf16.xpose.msra.mxu0 0
        %972 = vmatprep.subr.bf16.mxu0 0
        %973 = vmatpush1.bf16.xpose.msra.mxu0 0
        %974 = vmatprep.subr.bf16.mxu0 0
        %975 = vmatpush1.bf16.xpose.msra.mxu0 0
        %976 = vmatprep.subr.bf16.mxu0 0
        %977 = vmatpush1.bf16.xpose.msra.mxu0 0
        %978 = vmatprep.subr.bf16.mxu0 0
        %979 = vmatpush1.bf16.xpose.msra.mxu0 0
        %980 = vmatprep.subr.bf16.mxu0 0
        %981 = vmatpush1.bf16.xpose.msra.mxu0 0
        %982 = vmatprep.subr.bf16.mxu0 0
        %983 = vmatpush1.bf16.xpose.msra.mxu0 0
        %984 = vmatprep.subr.bf16.mxu0 0
        %985 = vmatpush1.bf16.xpose.msra.mxu0 0
        %986 = vmatprep.mubr.bf16.mxu0 0
        %987 = vmatmul.mubr.bf16.gmra.mrb[0].mxu0 %v949
        %v988 = vpop.f32.mrb[0].mxu0
        %v989 = vadd.f32 %v945, %v988
        %v990 = vpop.f32.mrb[0].mxu0
        %v991 = vpop.f32.mrb[0].mxu0
        %v992 = vpop.f32.mrb[0].mxu0
        %993 = vdwg.mxu0
        %v995 = vsel %vm947, %v934, 0
        %v998 = vsel %vm947, %v938, 0
        %1000 = vmatprep.subr.bf16.mxu0 0
        %1001 = vmatpush1.bf16.xpose.msra.mxu0 %v998
        %1002 = vmatprep.subr.bf16.mxu0 0
        %1003 = vmatpush1.bf16.xpose.msra.mxu0 0
        %1004 = vmatprep.subr.bf16.mxu0 0
        %1005 = vmatpush1.bf16.xpose.msra.mxu0 0
        %1006 = vmatprep.subr.bf16.mxu0 0
        %1007 = vmatpush1.bf16.xpose.msra.mxu0 0
        %1008 = vmatprep.subr.bf16.mxu0 0
        %1009 = vmatpush1.bf16.xpose.msra.mxu0 0
        %1010 = vmatprep.subr.bf16.mxu0 0
        %1011 = vmatpush1.bf16.xpose.msra.mxu0 0
        %1012 = vmatprep.subr.bf16.mxu0 0
        %1013 = vmatpush1.bf16.xpose.msra.mxu0 0
        %1014 = vmatprep.subr.bf16.mxu0 0
        %1015 = vmatpush1.bf16.xpose.msra.mxu0 0
        %1016 = vmatprep.subr.bf16.mxu0 0
        %1017 = vmatpush1.bf16.xpose.msra.mxu0 0
        %1018 = vmatprep.subr.bf16.mxu0 0
        %1019 = vmatpush1.bf16.xpose.msra.mxu0 0
        %1020 = vmatprep.subr.bf16.mxu0 0
        %1021 = vmatpush1.bf16.xpose.msra.mxu0 0
        %1022 = vmatprep.subr.bf16.mxu0 0
        %1023 = vmatpush1.bf16.xpose.msra.mxu0 0
        %1024 = vmatprep.subr.bf16.mxu0 0
        %1025 = vmatpush1.bf16.xpose.msra.mxu0 0
        %1026 = vmatprep.subr.bf16.mxu0 0
        %1027 = vmatpush1.bf16.xpose.msra.mxu0 0
        %1028 = vmatprep.subr.bf16.mxu0 0
        %1029 = vmatpush1.bf16.xpose.msra.mxu0 0
        %1030 = vmatprep.subr.bf16.mxu0 0
        %1031 = vmatpush1.bf16.xpose.msra.mxu0 0
        %1032 = vmatprep.mubr.bf16.mxu0 0
        %1033 = vmatmul.mubr.bf16.gmra.mrb[0].mxu0 %v995
        %v1034 = vpop.f32.mrb[0].mxu0
        %v1035 = vadd.f32 %v945, %v1034
        %v1036 = vpop.f32.mrb[0].mxu0
        %v1037 = vpop.f32.mrb[0].mxu0
        %v1038 = vpop.f32.mrb[0].mxu0
        %1039 = vdwg.mxu0
        %v1041 = vsel %vm947, %v935, 0
        %v1044 = vsel %vm947, %v939, 0
        %1046 = vmatprep.subr.bf16.mxu0 0
        %1047 = vmatpush1.bf16.xpose.msra.mxu0 %v1044
        %1048 = vmatprep.subr.bf16.mxu0 0
        %1049 = vmatpush1.bf16.xpose.msra.mxu0 0
        %1050 = vmatprep.subr.bf16.mxu0 0
        %1051 = vmatpush1.bf16.xpose.msra.mxu0 0
        %1052 = vmatprep.subr.bf16.mxu0 0
        %1053 = vmatpush1.bf16.xpose.msra.mxu0 0
        %1054 = vmatprep.subr.bf16.mxu0 0
        %1055 = vmatpush1.bf16.xpose.msra.mxu0 0
        %1056 = vmatprep.subr.bf16.mxu0 0
        %1057 = vmatpush1.bf16.xpose.msra.mxu0 0
        %1058 = vmatprep.subr.bf16.mxu0 0
        %1059 = vmatpush1.bf16.xpose.msra.mxu0 0
        %1060 = vmatprep.subr.bf16.mxu0 0
        %1061 = vmatpush1.bf16.xpose.msra.mxu0 0
        %1062 = vmatprep.subr.bf16.mxu0 0
        %1063 = vmatpush1.bf16.xpose.msra.mxu0 0
        %1064 = vmatprep.subr.bf16.mxu0 0
        %1065 = vmatpush1.bf16.xpose.msra.mxu0 0
        %1066 = vmatprep.subr.bf16.mxu0 0
        %1067 = vmatpush1.bf16.xpose.msra.mxu0 0
        %1068 = vmatprep.subr.bf16.mxu0 0
        %1069 = vmatpush1.bf16.xpose.msra.mxu0 0
        %1070 = vmatprep.subr.bf16.mxu0 0
        %1071 = vmatpush1.bf16.xpose.msra.mxu0 0
        %1072 = vmatprep.subr.bf16.mxu0 0
        %1073 = vmatpush1.bf16.xpose.msra.mxu0 0
        %1074 = vmatprep.subr.bf16.mxu0 0
        %1075 = vmatpush1.bf16.xpose.msra.mxu0 0
        %1076 = vmatprep.subr.bf16.mxu0 0
        %1077 = vmatpush1.bf16.xpose.msra.mxu0 0
        %1078 = vmatprep.mubr.bf16.mxu0 0
        %1079 = vmatmul.mubr.bf16.gmra.mrb[0].mxu0 %v1041
        %v1080 = vpop.f32.mrb[0].mxu0
        %v1081 = vadd.f32 %v945, %v1080
        %v1082 = vpop.f32.mrb[0].mxu0
        %v1083 = vpop.f32.mrb[0].mxu0
        %v1084 = vpop.f32.mrb[0].mxu0
        %1085 = vdwg.mxu0
        %v1087 = vsel %vm947, %v936, 0
        %v1090 = vsel %vm947, %v940, 0
        %1092 = vmatprep.subr.bf16.mxu0 0
        %1093 = vmatpush1.bf16.xpose.msra.mxu0 %v1090
        %1094 = vmatprep.subr.bf16.mxu0 0
        %1095 = vmatpush1.bf16.xpose.msra.mxu0 0
        %1096 = vmatprep.subr.bf16.mxu0 0
        %1097 = vmatpush1.bf16.xpose.msra.mxu0 0
        %1098 = vmatprep.subr.bf16.mxu0 0
        %1099 = vmatpush1.bf16.xpose.msra.mxu0 0
        %1100 = vmatprep.subr.bf16.mxu0 0
        %1101 = vmatpush1.bf16.xpose.msra.mxu0 0
        %1102 = vmatprep.subr.bf16.mxu0 0
        %1103 = vmatpush1.bf16.xpose.msra.mxu0 0
        %1104 = vmatprep.subr.bf16.mxu0 0
        %1105 = vmatpush1.bf16.xpose.msra.mxu0 0
        %1106 = vmatprep.subr.bf16.mxu0 0
        %1107 = vmatpush1.bf16.xpose.msra.mxu0 0
        %1108 = vmatprep.subr.bf16.mxu0 0
        %1109 = vmatpush1.bf16.xpose.msra.mxu0 0
        %1110 = vmatprep.subr.bf16.mxu0 0
        %1111 = vmatpush1.bf16.xpose.msra.mxu0 0
        %1112 = vmatprep.subr.bf16.mxu0 0
        %1113 = vmatpush1.bf16.xpose.msra.mxu0 0
        %1114 = vmatprep.subr.bf16.mxu0 0
        %1115 = vmatpush1.bf16.xpose.msra.mxu0 0
        %1116 = vmatprep.subr.bf16.mxu0 0
        %1117 = vmatpush1.bf16.xpose.msra.mxu0 0
        %1118 = vmatprep.subr.bf16.mxu0 0
        %1119 = vmatpush1.bf16.xpose.msra.mxu0 0
        %1120 = vmatprep.subr.bf16.mxu0 0
        %1121 = vmatpush1.bf16.xpose.msra.mxu0 0
        %1122 = vmatprep.subr.bf16.mxu0 0
        %1123 = vmatpush1.bf16.xpose.msra.mxu0 0
        %1124 = vmatprep.mubr.bf16.mxu0 0
        %1125 = vmatmul.mubr.bf16.gmra.mrb[0].mxu0 %v1087
        %v1126 = vpop.f32.mrb[0].mxu0
        %v1127 = vadd.f32 %v945, %v1126
        %v1128 = vpop.f32.mrb[0].mxu0
        %v1129 = vpop.f32.mrb[0].mxu0
        %v1130 = vpop.f32.mrb[0].mxu0
        %1131 = vdwg.mxu0
        %v1132 = vsel %vm947, %v989, -inf
        %1133 = vmax.xlane.f32.xlu0 %v1132
        %v1134 = vpop.xlane.xlu0 %1133
        %v1135 = vsel %vm947, %v1035, -inf
        %1136 = vmax.xlane.f32.xlu0 %v1135
        %v1137 = vpop.xlane.xlu0 %1136
        %v1138 = vsel %vm947, %v1081, -inf
        %1139 = vmax.xlane.f32.xlu0 %v1138
        %v1140 = vpop.xlane.xlu0 %1139
        %v1141 = vsel %vm947, %v1127, -inf
        %1142 = vmax.xlane.f32.xlu0 %v1141
        %v1143 = vpop.xlane.xlu0 %1142
        %v1144 = vsub.f32 %v989, %v1134
        %v1145 = vsub.f32 %v1035, %v1137
        %v1146 = vsub.f32 %v1081, %v1140
        %v1147 = vsub.f32 %v1127, %v1143
        %v1148 = vmul.f32 %v1144, 1.442695
        %v1149 = vpow.pop %v1148
        %v1150 = vmul.f32 %v1145, 1.442695
        %v1151 = vpow.pop %v1150
        %v1152 = vmul.f32 %v1146, 1.442695
        %v1153 = vpow.pop %v1152
        %v1154 = vmul.f32 %v1147, 1.442695
        %v1155 = vpow.pop %v1154
        %v1156 = vsel %vm947, %v1149, 0.0
        %1157 = vadd.xlane.f32.xlu0 %v1156
        %v1158 = vpop.xlane.xlu0 %1157
        %v1159 = vsel %vm947, %v1151, 0.0
        %1160 = vadd.xlane.f32.xlu0 %v1159
        %v1161 = vpop.xlane.xlu0 %1160
        %v1162 = vsel %vm947, %v1153, 0.0
        %1163 = vadd.xlane.f32.xlu0 %v1162
        %v1164 = vpop.xlane.xlu0 %1163
        %v1165 = vsel %vm947, %v1155, 0.0
        %1166 = vadd.xlane.f32.xlu0 %v1165
        %v1167 = vpop.xlane.xlu0 %1166
        %v1168 = vrcp.pop %v1158
        %v1169 = vrcp.pop %v1161
        %v1170 = vrcp.pop %v1164
        %v1171 = vrcp.pop %v1167
        %v1172 = vmul.f32 %v1149, %v1168
        %v1173 = vmul.f32 %v1151, %v1169
        %v1174 = vmul.f32 %v1153, %v1170
        %v1175 = vmul.f32 %v1155, %v1171
        %v1176 = vpack.c.bf16 %v1172, %v1172
        %v1177 = vpack.c.bf16 %v1173, %v1173
        %v1178 = vpack.c.bf16 %v1174, %v1174
        %v1179 = vpack.c.bf16 %v1175, %v1175
        %v1180 = vpack.c.bf16 %v929, %v929
        %v1181 = vpack.c.bf16 %v930, %v930
        %v1182 = vpack.c.bf16 %v931, %v931
        %v1183 = vpack.c.bf16 %v932, %v932
        %v1185 = vsel %vm947, %v1176, 0
        %vm1187 = vcmask 1043456
        %v1189 = vsel %vm1187, %v1180, 0
        %1191 = vmatprep.subr.bf16.mxu0 0
        %1192 = vmatpush1.bf16.msra.mxu0 %v1189
        %1193 = vmatprep.subr.bf16.mxu0 0
        %1194 = vmatpush1.bf16.msra.mxu0 0
        %1195 = vmatprep.subr.bf16.mxu0 0
        %1196 = vmatpush1.bf16.msra.mxu0 0
        %1197 = vmatprep.subr.bf16.mxu0 0
        %1198 = vmatpush1.bf16.msra.mxu0 0
        %1199 = vmatprep.subr.bf16.mxu0 0
        %1200 = vmatpush1.bf16.msra.mxu0 0
        %1201 = vmatprep.subr.bf16.mxu0 0
        %1202 = vmatpush1.bf16.msra.mxu0 0
        %1203 = vmatprep.subr.bf16.mxu0 0
        %1204 = vmatpush1.bf16.msra.mxu0 0
        %1205 = vmatprep.subr.bf16.mxu0 0
        %1206 = vmatpush1.bf16.msra.mxu0 0
        %1207 = vmatprep.subr.bf16.mxu0 0
        %1208 = vmatpush1.bf16.msra.mxu0 0
        %1209 = vmatprep.subr.bf16.mxu0 0
        %1210 = vmatpush1.bf16.msra.mxu0 0
        %1211 = vmatprep.subr.bf16.mxu0 0
        %1212 = vmatpush1.bf16.msra.mxu0 0
        %1213 = vmatprep.subr.bf16.mxu0 0
        %1214 = vmatpush1.bf16.msra.mxu0 0
        %1215 = vmatprep.subr.bf16.mxu0 0
        %1216 = vmatpush1.bf16.msra.mxu0 0
        %1217 = vmatprep.subr.bf16.mxu0 0
        %1218 = vmatpush1.bf16.msra.mxu0 0
        %1219 = vmatprep.subr.bf16.mxu0 0
        %1220 = vmatpush1.bf16.msra.mxu0 0
        %1221 = vmatprep.subr.bf16.mxu0 0
        %1222 = vmatpush1.bf16.msra.mxu0 0
        %1223 = vmatprep.mubr.bf16.mxu0 0
        %1224 = vmatmul.mubr.bf16.gmra.mrb[0].mxu0 %v1185
        %v1225 = vpop.f32.mrb[0].mxu0
        %v1226 = vadd.f32 0.0, %v1225
        %v1227 = vpop.f32.mrb[0].mxu0
        %v1228 = vpop.f32.mrb[0].mxu0
        %v1229 = vpop.f32.mrb[0].mxu0
        %1230 = vdwg.mxu0
        %v1232 = vsel %vm947, %v1177, 0
        %v1235 = vsel %vm1187, %v1181, 0
        %1237 = vmatprep.subr.bf16.mxu0 0
        %1238 = vmatpush1.bf16.msra.mxu0 %v1235
        %1239 = vmatprep.subr.bf16.mxu0 0
        %1240 = vmatpush1.bf16.msra.mxu0 0
        %1241 = vmatprep.subr.bf16.mxu0 0
        %1242 = vmatpush1.bf16.msra.mxu0 0
        %1243 = vmatprep.subr.bf16.mxu0 0
        %1244 = vmatpush1.bf16.msra.mxu0 0
        %1245 = vmatprep.subr.bf16.mxu0 0
        %1246 = vmatpush1.bf16.msra.mxu0 0
        %1247 = vmatprep.subr.bf16.mxu0 0
        %1248 = vmatpush1.bf16.msra.mxu0 0
        %1249 = vmatprep.subr.bf16.mxu0 0
        %1250 = vmatpush1.bf16.msra.mxu0 0
        %1251 = vmatprep.subr.bf16.mxu0 0
        %1252 = vmatpush1.bf16.msra.mxu0 0
        %1253 = vmatprep.subr.bf16.mxu0 0
        %1254 = vmatpush1.bf16.msra.mxu0 0
        %1255 = vmatprep.subr.bf16.mxu0 0
        %1256 = vmatpush1.bf16.msra.mxu0 0
        %1257 = vmatprep.subr.bf16.mxu0 0
        %1258 = vmatpush1.bf16.msra.mxu0 0
        %1259 = vmatprep.subr.bf16.mxu0 0
        %1260 = vmatpush1.bf16.msra.mxu0 0
        %1261 = vmatprep.subr.bf16.mxu0 0
        %1262 = vmatpush1.bf16.msra.mxu0 0
        %1263 = vmatprep.subr.bf16.mxu0 0
        %1264 = vmatpush1.bf16.msra.mxu0 0
        %1265 = vmatprep.subr.bf16.mxu0 0
        %1266 = vmatpush1.bf16.msra.mxu0 0
        %1267 = vmatprep.subr.bf16.mxu0 0
        %1268 = vmatpush1.bf16.msra.mxu0 0
        %1269 = vmatprep.mubr.bf16.mxu0 0
        %1270 = vmatmul.mubr.bf16.gmra.mrb[0].mxu0 %v1232
        %v1271 = vpop.f32.mrb[0].mxu0
        %v1272 = vadd.f32 0.0, %v1271
        %v1273 = vpop.f32.mrb[0].mxu0
        %v1274 = vpop.f32.mrb[0].mxu0
        %v1275 = vpop.f32.mrb[0].mxu0
        %1276 = vdwg.mxu0
        %v1278 = vsel %vm947, %v1178, 0
        %v1281 = vsel %vm1187, %v1182, 0
        %1283 = vmatprep.subr.bf16.mxu0 0
        %1284 = vmatpush1.bf16.msra.mxu0 %v1281
        %1285 = vmatprep.subr.bf16.mxu0 0
        %1286 = vmatpush1.bf16.msra.mxu0 0
        %1287 = vmatprep.subr.bf16.mxu0 0
        %1288 = vmatpush1.bf16.msra.mxu0 0
        %1289 = vmatprep.subr.bf16.mxu0 0
        %1290 = vmatpush1.bf16.msra.mxu0 0
        %1291 = vmatprep.subr.bf16.mxu0 0
        %1292 = vmatpush1.bf16.msra.mxu0 0
        %1293 = vmatprep.subr.bf16.mxu0 0
        %1294 = vmatpush1.bf16.msra.mxu0 0
        %1295 = vmatprep.subr.bf16.mxu0 0
        %1296 = vmatpush1.bf16.msra.mxu0 0
        %1297 = vmatprep.subr.bf16.mxu0 0
        %1298 = vmatpush1.bf16.msra.mxu0 0
        %1299 = vmatprep.subr.bf16.mxu0 0
        %1300 = vmatpush1.bf16.msra.mxu0 0
        %1301 = vmatprep.subr.bf16.mxu0 0
        %1302 = vmatpush1.bf16.msra.mxu0 0
        %1303 = vmatprep.subr.bf16.mxu0 0
        %1304 = vmatpush1.bf16.msra.mxu0 0
        %1305 = vmatprep.subr.bf16.mxu0 0
        %1306 = vmatpush1.bf16.msra.mxu0 0
        %1307 = vmatprep.subr.bf16.mxu0 0
        %1308 = vmatpush1.bf16.msra.mxu0 0
        %1309 = vmatprep.subr.bf16.mxu0 0
        %1310 = vmatpush1.bf16.msra.mxu0 0
        %1311 = vmatprep.subr.bf16.mxu0 0
        %1312 = vmatpush1.bf16.msra.mxu0 0
        %1313 = vmatprep.subr.bf16.mxu0 0
        %1314 = vmatpush1.bf16.msra.mxu0 0
        %1315 = vmatprep.mubr.bf16.mxu0 0
        %1316 = vmatmul.mubr.bf16.gmra.mrb[0].mxu0 %v1278
        %v1317 = vpop.f32.mrb[0].mxu0
        %v1318 = vadd.f32 0.0, %v1317
        %v1319 = vpop.f32.mrb[0].mxu0
        %v1320 = vpop.f32.mrb[0].mxu0
        %v1321 = vpop.f32.mrb[0].mxu0
        %1322 = vdwg.mxu0
        %v1324 = vsel %vm947, %v1179, 0
        %v1327 = vsel %vm1187, %v1183, 0
        %1329 = vmatprep.subr.bf16.mxu0 0
        %1330 = vmatpush1.bf16.msra.mxu0 %v1327
        %1331 = vmatprep.subr.bf16.mxu0 0
        %1332 = vmatpush1.bf16.msra.mxu0 0
        %1333 = vmatprep.subr.bf16.mxu0 0
        %1334 = vmatpush1.bf16.msra.mxu0 0
        %1335 = vmatprep.subr.bf16.mxu0 0
        %1336 = vmatpush1.bf16.msra.mxu0 0
        %1337 = vmatprep.subr.bf16.mxu0 0
        %1338 = vmatpush1.bf16.msra.mxu0 0
        %1339 = vmatprep.subr.bf16.mxu0 0
        %1340 = vmatpush1.bf16.msra.mxu0 0
        %1341 = vmatprep.subr.bf16.mxu0 0
        %1342 = vmatpush1.bf16.msra.mxu0 0
        %1343 = vmatprep.subr.bf16.mxu0 0
        %1344 = vmatpush1.bf16.msra.mxu0 0
        %1345 = vmatprep.subr.bf16.mxu0 0
        %1346 = vmatpush1.bf16.msra.mxu0 0
        %1347 = vmatprep.subr.bf16.mxu0 0
        %1348 = vmatpush1.bf16.msra.mxu0 0
        %1349 = vmatprep.subr.bf16.mxu0 0
        %1350 = vmatpush1.bf16.msra.mxu0 0
        %1351 = vmatprep.subr.bf16.mxu0 0
        %1352 = vmatpush1.bf16.msra.mxu0 0
        %1353 = vmatprep.subr.bf16.mxu0 0
        %1354 = vmatpush1.bf16.msra.mxu0 0
        %1355 = vmatprep.subr.bf16.mxu0 0
        %1356 = vmatpush1.bf16.msra.mxu0 0
        %1357 = vmatprep.subr.bf16.mxu0 0
        %1358 = vmatpush1.bf16.msra.mxu0 0
        %1359 = vmatprep.subr.bf16.mxu0 0
        %1360 = vmatpush1.bf16.msra.mxu0 0
        %1361 = vmatprep.mubr.bf16.mxu0 0
        %1362 = vmatmul.mubr.bf16.gmra.mrb[0].mxu0 %v1324
        %v1363 = vpop.f32.mrb[0].mxu0
        %v1364 = vadd.f32 0.0, %v1363
        %v1365 = vpop.f32.mrb[0].mxu0
        %v1366 = vpop.f32.mrb[0].mxu0
        %v1367 = vpop.f32.mrb[0].mxu0
        %1368 = vdwg.mxu0
        %v1369 = vcombine.low %v1226, %v1318
        %v1370 = vcombine.high %v1226, %v1318
        %v1372 = vunpack.c.l.s4 1983009808
        %v1373 = vunpack.c.0.s8 %v1372
        %v1374 = vlaneseq
        %v1375 = vshrl.u32 %v1374, 7
        %v1376 = vsub.s32 %v1373, %v1375
        %v1377 = vrot.slane %v1369, %v1376
        %v1379 = vunpack.c.l.s4 1983009808
        %v1380 = vunpack.c.0.s8 %v1379
        %v1381 = vlaneseq
        %v1382 = vshrl.u32 %v1381, 7
        %v1383 = vsub.s32 %v1380, %v1382
        %v1384 = vrot.slane %v1370, %v1383
        %v1385 = vcombine.low %v1272, %v1364
        %v1386 = vcombine.high %v1272, %v1364
        %v1388 = vunpack.c.l.s4 1983009808
        %v1389 = vunpack.c.0.s8 %v1388
        %v1390 = vlaneseq
        %v1391 = vshrl.u32 %v1390, 7
        %v1392 = vsub.s32 %v1389, %v1391
        %v1393 = vrot.slane %v1385, %v1392
        %v1395 = vunpack.c.l.s4 1983009808
        %v1396 = vunpack.c.0.s8 %v1395
        %v1397 = vlaneseq
        %v1398 = vshrl.u32 %v1397, 7
        %v1399 = vsub.s32 %v1396, %v1398
        %v1400 = vrot.slane %v1386, %v1399
        %v1401 = vcombine.low %v1377, %v1393
        %v1402 = vcombine.high %v1377, %v1393
        %v1404 = vunpack.c.l.s4 1934713408
        %v1405 = vunpack.c.0.s8 %v1404
        %v1406 = vlaneseq
        %v1407 = vshrl.u32 %v1406, 7
        %v1408 = vsub.s32 %v1405, %v1407
        %v1409 = vrot.slane %v1401, %v1408
        %v1411 = vunpack.c.l.s4 1934713408
        %v1412 = vunpack.c.0.s8 %v1411
        %v1413 = vlaneseq
        %v1414 = vshrl.u32 %v1413, 7
        %v1415 = vsub.s32 %v1412, %v1414
        %v1416 = vrot.slane %v1402, %v1415
        %v1417 = vcombine.low %v1384, %v1400
        %v1418 = vcombine.high %v1384, %v1400
        %v1420 = vunpack.c.l.s4 1934713408
        %v1421 = vunpack.c.0.s8 %v1420
        %v1422 = vlaneseq
        %v1423 = vshrl.u32 %v1422, 7
        %v1424 = vsub.s32 %v1421, %v1423
        %v1425 = vrot.slane %v1417, %v1424
        %v1427 = vunpack.c.l.s4 1934713408
        %v1428 = vunpack.c.0.s8 %v1427
        %v1429 = vlaneseq
        %v1430 = vshrl.u32 %v1429, 7
        %v1431 = vsub.s32 %v1428, %v1430
        %v1432 = vrot.slane %v1418, %v1431
        %v1433 = vcombine.high %v1409, 0.0
        %v1434 = vcombine.high %v1416, 0.0
        %v1435 = vcombine.high %v1425, 0.0
        %v1436 = vcombine.high %v1432, 0.0
        %v1437 = vcombine.low %v1409, %v1416
        %v1439 = vunpack.c.l.s4 1983009808
        %v1440 = vunpack.c.0.s8 %v1439
        %v1441 = vlaneseq
        %v1442 = vshrl.u32 %v1441, 7
        %v1443 = vsub.s32 %v1440, %v1442
        %v1444 = vrot.slane %v1437, %v1443
        %v1445 = vcombine.low %v1433, %v1434
        %v1447 = vunpack.c.l.s4 1983009808
        %v1448 = vunpack.c.0.s8 %v1447
        %v1449 = vlaneseq
        %v1450 = vshrl.u32 %v1449, 7
        %v1451 = vsub.s32 %v1448, %v1450
        %v1452 = vrot.slane %v1445, %v1451
        %v1453 = vcombine.low %v1425, %v1432
        %v1455 = vunpack.c.l.s4 1983009808
        %v1456 = vunpack.c.0.s8 %v1455
        %v1457 = vlaneseq
        %v1458 = vshrl.u32 %v1457, 7
        %v1459 = vsub.s32 %v1456, %v1458
        %v1460 = vrot.slane %v1453, %v1459
        %v1461 = vcombine.low %v1435, %v1436
        %v1463 = vunpack.c.l.s4 1983009808
        %v1464 = vunpack.c.0.s8 %v1463
        %v1465 = vlaneseq
        %v1466 = vshrl.u32 %v1465, 7
        %v1467 = vsub.s32 %v1464, %v1466
        %v1468 = vrot.slane %v1461, %v1467
        %v1469 = vcombine.low %v1444, %v1452
        %v1470 = vcombine.high %v1444, %v1452
        %v1472 = vunpack.c.l.s4 1934713408
        %v1473 = vunpack.c.0.s8 %v1472
        %v1474 = vlaneseq
        %v1475 = vshrl.u32 %v1474, 7
        %v1476 = vsub.s32 %v1473, %v1475
        %v1477 = vrot.slane %v1469, %v1476
        %v1479 = vunpack.c.l.s4 1934713408
        %v1480 = vunpack.c.0.s8 %v1479
        %v1481 = vlaneseq
        %v1482 = vshrl.u32 %v1481, 7
        %v1483 = vsub.s32 %v1480, %v1482
        %v1484 = vrot.slane %v1470, %v1483
        %v1485 = vcombine.low %v1460, %v1468
        %v1486 = vcombine.high %v1460, %v1468
        %v1488 = vunpack.c.l.s4 1934713408
        %v1489 = vunpack.c.0.s8 %v1488
        %v1490 = vlaneseq
        %v1491 = vshrl.u32 %v1490, 7
        %v1492 = vsub.s32 %v1489, %v1491
        %v1493 = vrot.slane %v1485, %v1492
        %v1495 = vunpack.c.l.s4 1934713408
        %v1496 = vunpack.c.0.s8 %v1495
        %v1497 = vlaneseq
        %v1498 = vshrl.u32 %v1497, 7
        %v1499 = vsub.s32 %v1496, %v1498
        %v1500 = vrot.slane %v1486, %v1499
        %v1501 = vcombine.low %v1477, %v1493
        %v1502 = vcombine.high %v1477, %v1493
        %v1503 = vcombine.low %v1484, %v1500
        %v1504 = vcombine.high %v1484, %v1500
        %1506 = vrot.lane.b32.xlu0 %v1502, 8
        %v1507 = vpop.permute.xlu0 %1506
        %1510 = vrot.lane.b32.xlu0 %v1503, 16
        %v1511 = vpop.permute.xlu0 %1510
        %1514 = vrot.lane.b32.xlu0 %v1504, 24
        %v1515 = vpop.permute.xlu0 %1514
        %v1517 = vsel %vm947, %v1501, %v1507
        %vm1518 = vcmask 130048
        %v1519 = vsel %vm1518, %v1517, %v1511
        %vm1520 = vcmask 195584
        %v1521 = vsel %vm1520, %v1519, %v1515
        %v1522 = vpack.c.bf16 %v1521, %v1521
        %v1523 = vld [vmem:[%s5] sm:$0xf]
        %v1524 = vld [vmem:[%s5 + $0x4] sm:$0xf]
        %v1525 = vld [vmem:[%s5 + $0x8] sm:$0xf]
        %v1526 = vld [vmem:[%s5 + $0xc] sm:$0xf]
        %v1527 = vlaneseq
        %v1528 = vshrl.u32 %v1527, 7
        %v1529 = vsub.s32 2, %v1528
        %v1530 = vrot.slane %v426, %v1529
        %v1535 = vunpack.c.l.b16 %v1523
        %v1536 = vunpack.c.l.b16 %v1524
        %v1537 = vunpack.c.l.b16 %v1525
        %v1538 = vunpack.c.l.b16 %v1526
        %v1539 = vpack.c.b16 %v1536, %v1535
        %v1540 = vpack.c.b16 %v1538, %v1537
        %v1544 = vsel %vm400, %v1522, 0
        %1546 = vmatprep.subr.bf16.mxu0 0
        %1547 = vmatpush1.bf16.msra.mxu0 %v1539
        %1548 = vmatprep.subr.bf16.mxu0 0
        %1549 = vmatpush1.bf16.msra.mxu0 %v1540
        %1550 = vmatprep.subr.bf16.mxu0 0
        %1551 = vmatpush1.bf16.msra.mxu0 0
        %1552 = vmatprep.subr.bf16.mxu0 0
        %1553 = vmatpush1.bf16.msra.mxu0 0
        %1554 = vmatprep.subr.bf16.mxu0 0
        %1555 = vmatpush1.bf16.msra.mxu0 0
        %1556 = vmatprep.subr.bf16.mxu0 0
        %1557 = vmatpush1.bf16.msra.mxu0 0
        %1558 = vmatprep.subr.bf16.mxu0 0
        %1559 = vmatpush1.bf16.msra.mxu0 0
        %1560 = vmatprep.subr.bf16.mxu0 0
        %1561 = vmatpush1.bf16.msra.mxu0 0
        %1562 = vmatprep.subr.bf16.mxu0 0
        %1563 = vmatpush1.bf16.msra.mxu0 0
        %1564 = vmatprep.subr.bf16.mxu0 0
        %1565 = vmatpush1.bf16.msra.mxu0 0
        %1566 = vmatprep.subr.bf16.mxu0 0
        %1567 = vmatpush1.bf16.msra.mxu0 0
        %1568 = vmatprep.subr.bf16.mxu0 0
        %1569 = vmatpush1.bf16.msra.mxu0 0
        %1570 = vmatprep.subr.bf16.mxu0 0
        %1571 = vmatpush1.bf16.msra.mxu0 0
        %1572 = vmatprep.subr.bf16.mxu0 0
        %1573 = vmatpush1.bf16.msra.mxu0 0
        %1574 = vmatprep.subr.bf16.mxu0 0
        %1575 = vmatpush1.bf16.msra.mxu0 0
        %1576 = vmatprep.subr.bf16.mxu0 0
        %1577 = vmatpush1.bf16.msra.mxu0 0
        %1578 = vmatprep.mubr.bf16.mxu0 0
        %1579 = vmatmul.mubr.bf16.gmra.mrb[0].mxu0 %v1544
        %v1580 = vpop.f32.mrb[0].mxu0
        %v1581 = vadd.f32 %v1530, %v1580
        %v1582 = vpop.f32.mrb[0].mxu0
        %v1583 = vpop.f32.mrb[0].mxu0
        %v1584 = vpop.f32.mrb[0].mxu0
        %1585 = vdwg.mxu0
        %v1586 = vadd.f32 %v1581, %v424
        %v1587 = vsel %vm400, %v1586, 0.0
        %1588 = vadd.xlane.f32.xlu0 %v1587
        %v1589 = vpop.xlane.xlu0 %1588
        %v1590 = vmul.f32 %v1589, %v404
        %v1591 = vsub.f32 %v1586, %v1590
        %v1592 = vmul.f32 %v1591, %v1591
        %v1593 = vsel %vm400, %v1592, 0.0
        %1594 = vadd.xlane.f32.xlu0 %v1593
        %v1595 = vpop.xlane.xlu0 %1594
        %v1596 = vmul.f32 %v1595, %v404
        %v1597 = vadd.f32 %v1596, 1e-12
        %v1598 = vrsqrt.pop %v1597
        %v1599 = vmul.f32 %v1591, %v1598
        %v1600 = vlaneseq
        %v1601 = vshrl.u32 %v1600, 7
        %v1602 = vsub.s32 3, %v1601
        %v1603 = vrot.slane %v426, %v1602
        %v1604 = vmul.f32 %v1599, %v1603
        %v1605 = vlaneseq
        %v1606 = vshrl.u32 %v1605, 7
        %v1607 = vsub.s32 4, %v1606
        %v1608 = vrot.slane %v426, %v1607
        %v1609 = vadd.f32 %v1604, %v1608
        %v1610 = vpack.c.bf16 %v1609, %v1609
        %v1611 = vld [vmem:[%s6] sm:$0xf]
        %v1612 = vld [vmem:[%s6 + $0x4] sm:$0xf]
        %v1613 = vld [vmem:[%s6 + $0x8] sm:$0xf]
        %v1614 = vld [vmem:[%s6 + $0xc] sm:$0xf]
        %v1615 = vlaneseq
        %v1616 = vshrl.u32 %v1615, 7
        %v1617 = vsub.s32 1, %v1616
        %v1618 = vrot.slane %v426, %v1617
        %v1623 = vunpack.c.l.b16 %v1611
        %v1624 = vunpack.c.l.b16 %v1612
        %v1625 = vunpack.c.l.b16 %v1613
        %v1626 = vunpack.c.l.b16 %v1614
        %v1627 = vpack.c.b16 %v1624, %v1623
        %v1628 = vpack.c.b16 %v1626, %v1625
        %v1632 = vsel %vm400, %v1610, 0
        %1634 = vmatprep.subr.bf16.mxu0 0
        %1635 = vmatpush1.bf16.msra.mxu0 %v1627
        %1636 = vmatprep.subr.bf16.mxu0 0
        %1637 = vmatpush1.bf16.msra.mxu0 %v1628
        %1638 = vmatprep.subr.bf16.mxu0 0
        %1639 = vmatpush1.bf16.msra.mxu0 0
        %1640 = vmatprep.subr.bf16.mxu0 0
        %1641 = vmatpush1.bf16.msra.mxu0 0
        %1642 = vmatprep.subr.bf16.mxu0 0
        %1643 = vmatpush1.bf16.msra.mxu0 0
        %1644 = vmatprep.subr.bf16.mxu0 0
        %1645 = vmatpush1.bf16.msra.mxu0 0
        %1646 = vmatprep.subr.bf16.mxu0 0
        %1647 = vmatpush1.bf16.msra.mxu0 0
        %1648 = vmatprep.subr.bf16.mxu0 0
        %1649 = vmatpush1.bf16.msra.mxu0 0
        %1650 = vmatprep.subr.bf16.mxu0 0
        %1651 = vmatpush1.bf16.msra.mxu0 0
        %1652 = vmatprep.subr.bf16.mxu0 0
        %1653 = vmatpush1.bf16.msra.mxu0 0
        %1654 = vmatprep.subr.bf16.mxu0 0
        %1655 = vmatpush1.bf16.msra.mxu0 0
        %1656 = vmatprep.subr.bf16.mxu0 0
        %1657 = vmatpush1.bf16.msra.mxu0 0
        %1658 = vmatprep.subr.bf16.mxu0 0
        %1659 = vmatpush1.bf16.msra.mxu0 0
        %1660 = vmatprep.subr.bf16.mxu0 0
        %1661 = vmatpush1.bf16.msra.mxu0 0
        %1662 = vmatprep.subr.bf16.mxu0 0
        %1663 = vmatpush1.bf16.msra.mxu0 0
        %1664 = vmatprep.subr.bf16.mxu0 0
        %1665 = vmatpush1.bf16.msra.mxu0 0
        %1666 = vmatprep.mubr.bf16.mxu0 0
        %1667 = vmatmul.mubr.bf16.gmra.mrb[0].mxu0 %v1632
        %v1668 = vpop.f32.mrb[0].mxu0
        %v1669 = vadd.f32 %v1618, %v1668
        %v1670 = vpop.f32.mrb[0].mxu0
        %v1671 = vpop.f32.mrb[0].mxu0
        %v1672 = vpop.f32.mrb[0].mxu0
        %1673 = vdwg.mxu0
        %v1674 = vmul.f32 %v1669, %v1669
        %v1675 = vmul.f32 %v1669, %v1674
        %v1676 = vmul.f32 %v1675, 0.044715
        %v1677 = vadd.f32 %v1669, %v1676
        %v1678 = vmul.f32 %v1677, 0.7978846
        %v1679 = vtanh.pop %v1678
        %v1680 = vadd.f32 %v1679, 1.0
        %v1681 = vmul.f32 %v1680, 0.5
        %v1682 = vmul.f32 %v1669, %v1681
        %v1683 = vpack.c.bf16 %v1682, %v1682
        %v1684 = vld [vmem:[%s7] sm:$0xf]
        %v1685 = vld [vmem:[%s7 + $0x4] sm:$0xf]
        %v1686 = vld [vmem:[%s7 + $0x8] sm:$0xf]
        %v1687 = vld [vmem:[%s7 + $0xc] sm:$0xf]
        %v1688 = vld [vmem:[%s7 + $0x10] sm:$0xf]
        %v1689 = vld [vmem:[%s7 + $0x14] sm:$0xf]
        %v1690 = vld [vmem:[%s7 + $0x18] sm:$0xf]
        %v1691 = vld [vmem:[%s7 + $0x1c] sm:$0xf]
        %v1692 = vlaneseq
        %v1693 = vshrl.u32 %v1692, 7
        %v1694 = vsub.s32 5, %v1693
        %v1695 = vrot.slane %v426, %v1694
        %v1704 = vunpack.c.l.b16 %v1684
        %v1705 = vunpack.c.l.b16 %v1685
        %v1706 = vunpack.c.l.b16 %v1686
        %v1707 = vunpack.c.l.b16 %v1687
        %v1708 = vunpack.c.l.b16 %v1688
        %v1709 = vunpack.c.l.b16 %v1689
        %v1710 = vunpack.c.l.b16 %v1690
        %v1711 = vunpack.c.l.b16 %v1691
        %v1712 = vpack.c.b16 %v1705, %v1704
        %v1713 = vpack.c.b16 %v1707, %v1706
        %v1714 = vpack.c.b16 %v1709, %v1708
        %v1715 = vpack.c.b16 %v1711, %v1710
        %vm1720 = vcmask 523264
        %v1722 = vsel %vm1720, %v1683, 0
        %1724 = vmatprep.subr.bf16.mxu0 0
        %1725 = vmatpush1.bf16.msra.mxu0 %v1712
        %1726 = vmatprep.subr.bf16.mxu0 0
        %1727 = vmatpush1.bf16.msra.mxu0 %v1713
        %1728 = vmatprep.subr.bf16.mxu0 0
        %1729 = vmatpush1.bf16.msra.mxu0 %v1714
        %1730 = vmatprep.subr.bf16.mxu0 0
        %1731 = vmatpush1.bf16.msra.mxu0 %v1715
        %1732 = vmatprep.subr.bf16.mxu0 0
        %1733 = vmatpush1.bf16.msra.mxu0 0
        %1734 = vmatprep.subr.bf16.mxu0 0
        %1735 = vmatpush1.bf16.msra.mxu0 0
        %1736 = vmatprep.subr.bf16.mxu0 0
        %1737 = vmatpush1.bf16.msra.mxu0 0
        %1738 = vmatprep.subr.bf16.mxu0 0
        %1739 = vmatpush1.bf16.msra.mxu0 0
        %1740 = vmatprep.subr.bf16.mxu0 0
        %1741 = vmatpush1.bf16.msra.mxu0 0
        %1742 = vmatprep.subr.bf16.mxu0 0
        %1743 = vmatpush1.bf16.msra.mxu0 0
        %1744 = vmatprep.subr.bf16.mxu0 0
        %1745 = vmatpush1.bf16.msra.mxu0 0
        %1746 = vmatprep.subr.bf16.mxu0 0
        %1747 = vmatpush1.bf16.msra.mxu0 0
        %1748 = vmatprep.subr.bf16.mxu0 0
        %1749 = vmatpush1.bf16.msra.mxu0 0
        %1750 = vmatprep.subr.bf16.mxu0 0
        %1751 = vmatpush1.bf16.msra.mxu0 0
        %1752 = vmatprep.subr.bf16.mxu0 0
        %1753 = vmatpush1.bf16.msra.mxu0 0
        %1754 = vmatprep.subr.bf16.mxu0 0
        %1755 = vmatpush1.bf16.msra.mxu0 0
        %1756 = vmatprep.mubr.bf16.mxu0 0
        %1757 = vmatmul.mubr.bf16.gmra.mrb[0].mxu0 %v1722
        %v1758 = vpop.f32.mrb[0].mxu0
        %v1759 = vadd.f32 %v1695, %v1758
        %v1760 = vpop.f32.mrb[0].mxu0
        %v1761 = vpop.f32.mrb[0].mxu0
        %v1762 = vpop.f32.mrb[0].mxu0
        %1763 = vdwg.mxu0
        %v1764 = vadd.f32 %v1759, %v1609
        %v1765 = vsel %vm400, %v1764, 0.0
        %1766 = vadd.xlane.f32.xlu0 %v1765
        %v1767 = vpop.xlane.xlu0 %1766
        %v1768 = vmul.f32 %v1767, %v404
        %v1769 = vsub.f32 %v1764, %v1768
        %v1770 = vmul.f32 %v1769, %v1769
        %v1771 = vsel %vm400, %v1770, 0.0
        %1772 = vadd.xlane.f32.xlu0 %v1771
        %v1773 = vpop.xlane.xlu0 %1772
        %v1774 = vmul.f32 %v1773, %v404
        %v1775 = vadd.f32 %v1774, 1e-12
        %v1776 = vrsqrt.pop %v1775
        %v1777 = vmul.f32 %v1769, %v1776
        %v1778 = vlaneseq
        %v1779 = vshrl.u32 %v1778, 7
        %v1780 = vsub.s32 6, %v1779
        %v1781 = vrot.slane %v426, %v1780
        %v1782 = vmul.f32 %v1777, %v1781
        %v1783 = vlaneseq
        %v1784 = vshrl.u32 %v1783, 7
        %v1785 = vsub.s32 7, %v1784
        %v1786 = vrot.slane %v426, %v1785
        %v1787 = vadd.f32 %v1782, %v1786
        %s1788 = scalar_lea.vmem %s8, 8
        %v1789 = vld [vmem:[%s1788] sm:$0xff]
        %v1790 = vpack.c.bf16 %v1787, %v1787
        %s1791 = scalar_lea.vmem %s4, 16
        %v1792 = vld [vmem:[%s1791] sm:$0xf]
        %v1793 = vld [vmem:[%s1791 + $0x4] sm:$0xf]
        %v1794 = vld [vmem:[%s1791 + $0x8] sm:$0xf]
        %v1795 = vld [vmem:[%s1791 + $0xc] sm:$0xf]
        %v1796 = vlaneseq
        %v1797 = vshrl.u32 %v1796, 7
        %v1798 = vsub.s32 0, %v1797
        %v1799 = vrot.slane %v1789, %v1798
        %v1804 = vunpack.c.l.b16 %v1792
        %v1805 = vunpack.c.l.b16 %v1793
        %v1806 = vunpack.c.l.b16 %v1794
        %v1807 = vunpack.c.l.b16 %v1795
        %v1808 = vpack.c.b16 %v1805, %v1804
        %v1809 = vpack.c.b16 %v1807, %v1806
        %v1813 = vsel %vm400, %v1790, 0
        %1815 = vmatprep.subr.bf16.mxu0 0
        %1816 = vmatpush1.bf16.msra.mxu0 %v1808
        %1817 = vmatprep.subr.bf16.mxu0 0
        %1818 = vmatpush1.bf16.msra.mxu0 %v1809
        %1819 = vmatprep.subr.bf16.mxu0 0
        %1820 = vmatpush1.bf16.msra.mxu0 0
        %1821 = vmatprep.subr.bf16.mxu0 0
        %1822 = vmatpush1.bf16.msra.mxu0 0
        %1823 = vmatprep.subr.bf16.mxu0 0
        %1824 = vmatpush1.bf16.msra.mxu0 0
        %1825 = vmatprep.subr.bf16.mxu0 0
        %1826 = vmatpush1.bf16.msra.mxu0 0
        %1827 = vmatprep.subr.bf16.mxu0 0
        %1828 = vmatpush1.bf16.msra.mxu0 0
        %1829 = vmatprep.subr.bf16.mxu0 0
        %1830 = vmatpush1.bf16.msra.mxu0 0
        %1831 = vmatprep.subr.bf16.mxu0 0
        %1832 = vmatpush1.bf16.msra.mxu0 0
        %1833 = vmatprep.subr.bf16.mxu0 0
        %1834 = vmatpush1.bf16.msra.mxu0 0
        %1835 = vmatprep.subr.bf16.mxu0 0
        %1836 = vmatpush1.bf16.msra.mxu0 0
        %1837 = vmatprep.subr.bf16.mxu0 0
        %1838 = vmatpush1.bf16.msra.mxu0 0
        %1839 = vmatprep.subr.bf16.mxu0 0
        %1840 = vmatpush1.bf16.msra.mxu0 0
        %1841 = vmatprep.subr.bf16.mxu0 0
        %1842 = vmatpush1.bf16.msra.mxu0 0
        %1843 = vmatprep.subr.bf16.mxu0 0
        %1844 = vmatpush1.bf16.msra.mxu0 0
        %1845 = vmatprep.subr.bf16.mxu0 0
        %1846 = vmatpush1.bf16.msra.mxu0 0
        %1847 = vmatprep.mubr.bf16.mxu0 0
        %1848 = vmatmul.mubr.bf16.gmra.mrb[0].mxu0 %v1813
        %v1849 = vpop.f32.mrb[0].mxu0
        %v1850 = vadd.f32 %v1799, %v1849
        %v1851 = vpop.f32.mrb[0].mxu0
        %v1852 = vpop.f32.mrb[0].mxu0
        %v1853 = vpop.f32.mrb[0].mxu0
        %1854 = vdwg.mxu0
        %1856 = vrot.lane.b32.xlu0 %v1850, 120
        %v1857 = vpop.permute.xlu0 %1856
        %1859 = vrot.lane.b32.xlu0 %v1850, 112
        %v1860 = vpop.permute.xlu0 %1859
        %1862 = vrot.lane.b32.xlu0 %v1850, 104
        %v1863 = vpop.permute.xlu0 %1862
        %v1865 = vcombine.low %v1850, %v1860
        %v1866 = vcombine.high %v1850, %v1860
        %v1868 = vunpack.c.l.s4 1983009808
        %v1869 = vunpack.c.0.s8 %v1868
        %v1870 = vlaneseq
        %v1871 = vshrl.u32 %v1870, 7
        %v1872 = vsub.s32 %v1869, %v1871
        %v1873 = vrot.slane %v1865, %v1872
        %v1875 = vunpack.c.l.s4 1983009808
        %v1876 = vunpack.c.0.s8 %v1875
        %v1877 = vlaneseq
        %v1878 = vshrl.u32 %v1877, 7
        %v1879 = vsub.s32 %v1876, %v1878
        %v1880 = vrot.slane %v1866, %v1879
        %v1881 = vcombine.low %v1857, %v1863
        %v1882 = vcombine.high %v1857, %v1863
        %v1884 = vunpack.c.l.s4 1983009808
        %v1885 = vunpack.c.0.s8 %v1884
        %v1886 = vlaneseq
        %v1887 = vshrl.u32 %v1886, 7
        %v1888 = vsub.s32 %v1885, %v1887
        %v1889 = vrot.slane %v1881, %v1888
        %v1891 = vunpack.c.l.s4 1983009808
        %v1892 = vunpack.c.0.s8 %v1891
        %v1893 = vlaneseq
        %v1894 = vshrl.u32 %v1893, 7
        %v1895 = vsub.s32 %v1892, %v1894
        %v1896 = vrot.slane %v1882, %v1895
        %v1897 = vcombine.low %v1873, %v1889
        %v1898 = vcombine.high %v1873, %v1889
        %v1900 = vunpack.c.l.s4 1934713408
        %v1901 = vunpack.c.0.s8 %v1900
        %v1902 = vlaneseq
        %v1903 = vshrl.u32 %v1902, 7
        %v1904 = vsub.s32 %v1901, %v1903
        %v1905 = vrot.slane %v1897, %v1904
        %v1907 = vunpack.c.l.s4 1934713408
        %v1908 = vunpack.c.0.s8 %v1907
        %v1909 = vlaneseq
        %v1910 = vshrl.u32 %v1909, 7
        %v1911 = vsub.s32 %v1908, %v1910
        %v1912 = vrot.slane %v1898, %v1911
        %v1913 = vcombine.low %v1880, %v1896
        %v1914 = vcombine.high %v1880, %v1896
        %v1916 = vunpack.c.l.s4 1934713408
        %v1917 = vunpack.c.0.s8 %v1916
        %v1918 = vlaneseq
        %v1919 = vshrl.u32 %v1918, 7
        %v1920 = vsub.s32 %v1917, %v1919
        %v1921 = vrot.slane %v1913, %v1920
        %v1923 = vunpack.c.l.s4 1934713408
        %v1924 = vunpack.c.0.s8 %v1923
        %v1925 = vlaneseq
        %v1926 = vshrl.u32 %v1925, 7
        %v1927 = vsub.s32 %v1924, %v1926
        %v1928 = vrot.slane %v1914, %v1927
        %v1929 = vcombine.high %v1905, 0.0
        %v1930 = vcombine.high %v1912, 0.0
        %v1931 = vcombine.high %v1921, 0.0
        %v1932 = vcombine.high %v1928, 0.0
        %v1933 = vcombine.low %v1905, %v1912
        %v1935 = vunpack.c.l.s4 1983009808
        %v1936 = vunpack.c.0.s8 %v1935
        %v1937 = vlaneseq
        %v1938 = vshrl.u32 %v1937, 7
        %v1939 = vsub.s32 %v1936, %v1938
        %v1940 = vrot.slane %v1933, %v1939
        %v1941 = vcombine.low %v1929, %v1930
        %v1943 = vunpack.c.l.s4 1983009808
        %v1944 = vunpack.c.0.s8 %v1943
        %v1945 = vlaneseq
        %v1946 = vshrl.u32 %v1945, 7
        %v1947 = vsub.s32 %v1944, %v1946
        %v1948 = vrot.slane %v1941, %v1947
        %v1949 = vcombine.low %v1921, %v1928
        %v1951 = vunpack.c.l.s4 1983009808
        %v1952 = vunpack.c.0.s8 %v1951
        %v1953 = vlaneseq
        %v1954 = vshrl.u32 %v1953, 7
        %v1955 = vsub.s32 %v1952, %v1954
        %v1956 = vrot.slane %v1949, %v1955
        %v1957 = vcombine.low %v1931, %v1932
        %v1959 = vunpack.c.l.s4 1983009808
        %v1960 = vunpack.c.0.s8 %v1959
        %v1961 = vlaneseq
        %v1962 = vshrl.u32 %v1961, 7
        %v1963 = vsub.s32 %v1960, %v1962
        %v1964 = vrot.slane %v1957, %v1963
        %v1965 = vcombine.low %v1940, %v1948
        %v1966 = vcombine.high %v1940, %v1948
        %v1968 = vunpack.c.l.s4 1934713408
        %v1969 = vunpack.c.0.s8 %v1968
        %v1970 = vlaneseq
        %v1971 = vshrl.u32 %v1970, 7
        %v1972 = vsub.s32 %v1969, %v1971
        %v1973 = vrot.slane %v1965, %v1972
        %v1975 = vunpack.c.l.s4 1934713408
        %v1976 = vunpack.c.0.s8 %v1975
        %v1977 = vlaneseq
        %v1978 = vshrl.u32 %v1977, 7
        %v1979 = vsub.s32 %v1976, %v1978
        %v1980 = vrot.slane %v1966, %v1979
        %v1981 = vcombine.low %v1956, %v1964
        %v1982 = vcombine.high %v1956, %v1964
        %v1984 = vunpack.c.l.s4 1934713408
        %v1985 = vunpack.c.0.s8 %v1984
        %v1986 = vlaneseq
        %v1987 = vshrl.u32 %v1986, 7
        %v1988 = vsub.s32 %v1985, %v1987
        %v1989 = vrot.slane %v1981, %v1988
        %v1991 = vunpack.c.l.s4 1934713408
        %v1992 = vunpack.c.0.s8 %v1991
        %v1993 = vlaneseq
        %v1994 = vshrl.u32 %v1993, 7
        %v1995 = vsub.s32 %v1992, %v1994
        %v1996 = vrot.slane %v1982, %v1995
        %v1997 = vcombine.low %v1973, %v1989
        %v1998 = vcombine.high %v1973, %v1989
        %v1999 = vcombine.low %v1980, %v1996
        %v2000 = vcombine.high %v1980, %v1996
        %2001 = vrot.lane.b32.xlu0 %v1850, 96
        %v2002 = vpop.permute.xlu0 %2001
        %2003 = vrot.lane.b32.xlu0 %v1857, 96
        %v2004 = vpop.permute.xlu0 %2003
        %2005 = vrot.lane.b32.xlu0 %v1860, 96
        %v2006 = vpop.permute.xlu0 %2005
        %2007 = vrot.lane.b32.xlu0 %v1863, 96
        %v2008 = vpop.permute.xlu0 %2007
        %v2013 = vcombine.low %v2002, %v2006
        %v2014 = vcombine.high %v2002, %v2006
        %v2016 = vunpack.c.l.s4 1983009808
        %v2017 = vunpack.c.0.s8 %v2016
        %v2018 = vlaneseq
        %v2019 = vshrl.u32 %v2018, 7
        %v2020 = vsub.s32 %v2017, %v2019
        %v2021 = vrot.slane %v2013, %v2020
        %v2023 = vunpack.c.l.s4 1983009808
        %v2024 = vunpack.c.0.s8 %v2023
        %v2025 = vlaneseq
        %v2026 = vshrl.u32 %v2025, 7
        %v2027 = vsub.s32 %v2024, %v2026
        %v2028 = vrot.slane %v2014, %v2027
        %v2029 = vcombine.low %v2004, %v2008
        %v2030 = vcombine.high %v2004, %v2008
        %v2032 = vunpack.c.l.s4 1983009808
        %v2033 = vunpack.c.0.s8 %v2032
        %v2034 = vlaneseq
        %v2035 = vshrl.u32 %v2034, 7
        %v2036 = vsub.s32 %v2033, %v2035
        %v2037 = vrot.slane %v2029, %v2036
        %v2039 = vunpack.c.l.s4 1983009808
        %v2040 = vunpack.c.0.s8 %v2039
        %v2041 = vlaneseq
        %v2042 = vshrl.u32 %v2041, 7
        %v2043 = vsub.s32 %v2040, %v2042
        %v2044 = vrot.slane %v2030, %v2043
        %v2045 = vcombine.low %v2021, %v2037
        %v2046 = vcombine.high %v2021, %v2037
        %v2048 = vunpack.c.l.s4 1934713408
        %v2049 = vunpack.c.0.s8 %v2048
        %v2050 = vlaneseq
        %v2051 = vshrl.u32 %v2050, 7
        %v2052 = vsub.s32 %v2049, %v2051
        %v2053 = vrot.slane %v2045, %v2052
        %v2055 = vunpack.c.l.s4 1934713408
        %v2056 = vunpack.c.0.s8 %v2055
        %v2057 = vlaneseq
        %v2058 = vshrl.u32 %v2057, 7
        %v2059 = vsub.s32 %v2056, %v2058
        %v2060 = vrot.slane %v2046, %v2059
        %v2061 = vcombine.low %v2028, %v2044
        %v2062 = vcombine.high %v2028, %v2044
        %v2064 = vunpack.c.l.s4 1934713408
        %v2065 = vunpack.c.0.s8 %v2064
        %v2066 = vlaneseq
        %v2067 = vshrl.u32 %v2066, 7
        %v2068 = vsub.s32 %v2065, %v2067
        %v2069 = vrot.slane %v2061, %v2068
        %v2071 = vunpack.c.l.s4 1934713408
        %v2072 = vunpack.c.0.s8 %v2071
        %v2073 = vlaneseq
        %v2074 = vshrl.u32 %v2073, 7
        %v2075 = vsub.s32 %v2072, %v2074
        %v2076 = vrot.slane %v2062, %v2075
        %v2077 = vcombine.high %v2053, 0.0
        %v2078 = vcombine.high %v2060, 0.0
        %v2079 = vcombine.high %v2069, 0.0
        %v2080 = vcombine.high %v2076, 0.0
        %v2081 = vcombine.low %v2053, %v2060
        %v2083 = vunpack.c.l.s4 1983009808
        %v2084 = vunpack.c.0.s8 %v2083
        %v2085 = vlaneseq
        %v2086 = vshrl.u32 %v2085, 7
        %v2087 = vsub.s32 %v2084, %v2086
        %v2088 = vrot.slane %v2081, %v2087
        %v2089 = vcombine.low %v2077, %v2078
        %v2091 = vunpack.c.l.s4 1983009808
        %v2092 = vunpack.c.0.s8 %v2091
        %v2093 = vlaneseq
        %v2094 = vshrl.u32 %v2093, 7
        %v2095 = vsub.s32 %v2092, %v2094
        %v2096 = vrot.slane %v2089, %v2095
        %v2097 = vcombine.low %v2069, %v2076
        %v2099 = vunpack.c.l.s4 1983009808
        %v2100 = vunpack.c.0.s8 %v2099
        %v2101 = vlaneseq
        %v2102 = vshrl.u32 %v2101, 7
        %v2103 = vsub.s32 %v2100, %v2102
        %v2104 = vrot.slane %v2097, %v2103
        %v2105 = vcombine.low %v2079, %v2080
        %v2107 = vunpack.c.l.s4 1983009808
        %v2108 = vunpack.c.0.s8 %v2107
        %v2109 = vlaneseq
        %v2110 = vshrl.u32 %v2109, 7
        %v2111 = vsub.s32 %v2108, %v2110
        %v2112 = vrot.slane %v2105, %v2111
        %v2113 = vcombine.low %v2088, %v2096
        %v2114 = vcombine.high %v2088, %v2096
        %v2116 = vunpack.c.l.s4 1934713408
        %v2117 = vunpack.c.0.s8 %v2116
        %v2118 = vlaneseq
        %v2119 = vshrl.u32 %v2118, 7
        %v2120 = vsub.s32 %v2117, %v2119
        %v2121 = vrot.slane %v2113, %v2120
        %v2123 = vunpack.c.l.s4 1934713408
        %v2124 = vunpack.c.0.s8 %v2123
        %v2125 = vlaneseq
        %v2126 = vshrl.u32 %v2125, 7
        %v2127 = vsub.s32 %v2124, %v2126
        %v2128 = vrot.slane %v2114, %v2127
        %v2129 = vcombine.low %v2104, %v2112
        %v2130 = vcombine.high %v2104, %v2112
        %v2132 = vunpack.c.l.s4 1934713408
        %v2133 = vunpack.c.0.s8 %v2132
        %v2134 = vlaneseq
        %v2135 = vshrl.u32 %v2134, 7
        %v2136 = vsub.s32 %v2133, %v2135
        %v2137 = vrot.slane %v2129, %v2136
        %v2139 = vunpack.c.l.s4 1934713408
        %v2140 = vunpack.c.0.s8 %v2139
        %v2141 = vlaneseq
        %v2142 = vshrl.u32 %v2141, 7
        %v2143 = vsub.s32 %v2140, %v2142
        %v2144 = vrot.slane %v2130, %v2143
        %v2145 = vcombine.low %v2121, %v2137
        %v2146 = vcombine.high %v2121, %v2137
        %v2147 = vcombine.low %v2128, %v2144
        %v2148 = vcombine.high %v2128, %v2144
        %2149 = vrot.lane.b32.xlu0 %v1850, 64
        %v2150 = vpop.permute.xlu0 %2149
        %2151 = vrot.lane.b32.xlu0 %v1857, 64
        %v2152 = vpop.permute.xlu0 %2151
        %2153 = vrot.lane.b32.xlu0 %v1860, 64
        %v2154 = vpop.permute.xlu0 %2153
        %2155 = vrot.lane.b32.xlu0 %v1863, 64
        %v2156 = vpop.permute.xlu0 %2155
        %v2161 = vcombine.low %v2150, %v2154
        %v2162 = vcombine.high %v2150, %v2154
        %v2164 = vunpack.c.l.s4 1983009808
        %v2165 = vunpack.c.0.s8 %v2164
        %v2166 = vlaneseq
        %v2167 = vshrl.u32 %v2166, 7
        %v2168 = vsub.s32 %v2165, %v2167
        %v2169 = vrot.slane %v2161, %v2168
        %v2171 = vunpack.c.l.s4 1983009808
        %v2172 = vunpack.c.0.s8 %v2171
        %v2173 = vlaneseq
        %v2174 = vshrl.u32 %v2173, 7
        %v2175 = vsub.s32 %v2172, %v2174
        %v2176 = vrot.slane %v2162, %v2175
        %v2177 = vcombine.low %v2152, %v2156
        %v2178 = vcombine.high %v2152, %v2156
        %v2180 = vunpack.c.l.s4 1983009808
        %v2181 = vunpack.c.0.s8 %v2180
        %v2182 = vlaneseq
        %v2183 = vshrl.u32 %v2182, 7
        %v2184 = vsub.s32 %v2181, %v2183
        %v2185 = vrot.slane %v2177, %v2184
        %v2187 = vunpack.c.l.s4 1983009808
        %v2188 = vunpack.c.0.s8 %v2187
        %v2189 = vlaneseq
        %v2190 = vshrl.u32 %v2189, 7
        %v2191 = vsub.s32 %v2188, %v2190
        %v2192 = vrot.slane %v2178, %v2191
        %v2193 = vcombine.low %v2169, %v2185
        %v2194 = vcombine.high %v2169, %v2185
        %v2196 = vunpack.c.l.s4 1934713408
        %v2197 = vunpack.c.0.s8 %v2196
        %v2198 = vlaneseq
        %v2199 = vshrl.u32 %v2198, 7
        %v2200 = vsub.s32 %v2197, %v2199
        %v2201 = vrot.slane %v2193, %v2200
        %v2203 = vunpack.c.l.s4 1934713408
        %v2204 = vunpack.c.0.s8 %v2203
        %v2205 = vlaneseq
        %v2206 = vshrl.u32 %v2205, 7
        %v2207 = vsub.s32 %v2204, %v2206
        %v2208 = vrot.slane %v2194, %v2207
        %v2209 = vcombine.low %v2176, %v2192
        %v2210 = vcombine.high %v2176, %v2192
        %v2212 = vunpack.c.l.s4 1934713408
        %v2213 = vunpack.c.0.s8 %v2212
        %v2214 = vlaneseq
        %v2215 = vshrl.u32 %v2214, 7
        %v2216 = vsub.s32 %v2213, %v2215
        %v2217 = vrot.slane %v2209, %v2216
        %v2219 = vunpack.c.l.s4 1934713408
        %v2220 = vunpack.c.0.s8 %v2219
        %v2221 = vlaneseq
        %v2222 = vshrl.u32 %v2221, 7
        %v2223 = vsub.s32 %v2220, %v2222
        %v2224 = vrot.slane %v2210, %v2223
        %v2225 = vcombine.high %v2201, 0.0
        %v2226 = vcombine.high %v2208, 0.0
        %v2227 = vcombine.high %v2217, 0.0
        %v2228 = vcombine.high %v2224, 0.0
        %v2229 = vcombine.low %v2201, %v2208
        %v2231 = vunpack.c.l.s4 1983009808
        %v2232 = vunpack.c.0.s8 %v2231
        %v2233 = vlaneseq
        %v2234 = vshrl.u32 %v2233, 7
        %v2235 = vsub.s32 %v2232, %v2234
        %v2236 = vrot.slane %v2229, %v2235
        %v2237 = vcombine.low %v2225, %v2226
        %v2239 = vunpack.c.l.s4 1983009808
        %v2240 = vunpack.c.0.s8 %v2239
        %v2241 = vlaneseq
        %v2242 = vshrl.u32 %v2241, 7
        %v2243 = vsub.s32 %v2240, %v2242
        %v2244 = vrot.slane %v2237, %v2243
        %v2245 = vcombine.low %v2217, %v2224
        %v2247 = vunpack.c.l.s4 1983009808
        %v2248 = vunpack.c.0.s8 %v2247
        %v2249 = vlaneseq
        %v2250 = vshrl.u32 %v2249, 7
        %v2251 = vsub.s32 %v2248, %v2250
        %v2252 = vrot.slane %v2245, %v2251
        %v2253 = vcombine.low %v2227, %v2228
        %v2255 = vunpack.c.l.s4 1983009808
        %v2256 = vunpack.c.0.s8 %v2255
        %v2257 = vlaneseq
        %v2258 = vshrl.u32 %v2257, 7
        %v2259 = vsub.s32 %v2256, %v2258
        %v2260 = vrot.slane %v2253, %v2259
        %v2261 = vcombine.low %v2236, %v2244
        %v2262 = vcombine.high %v2236, %v2244
        %v2264 = vunpack.c.l.s4 1934713408
        %v2265 = vunpack.c.0.s8 %v2264
        %v2266 = vlaneseq
        %v2267 = vshrl.u32 %v2266, 7
        %v2268 = vsub.s32 %v2265, %v2267
        %v2269 = vrot.slane %v2261, %v2268
        %v2271 = vunpack.c.l.s4 1934713408
        %v2272 = vunpack.c.0.s8 %v2271
        %v2273 = vlaneseq
        %v2274 = vshrl.u32 %v2273, 7
        %v2275 = vsub.s32 %v2272, %v2274
        %v2276 = vrot.slane %v2262, %v2275
        %v2277 = vcombine.low %v2252, %v2260
        %v2278 = vcombine.high %v2252, %v2260
        %v2280 = vunpack.c.l.s4 1934713408
        %v2281 = vunpack.c.0.s8 %v2280
        %v2282 = vlaneseq
        %v2283 = vshrl.u32 %v2282, 7
        %v2284 = vsub.s32 %v2281, %v2283
        %v2285 = vrot.slane %v2277, %v2284
        %v2287 = vunpack.c.l.s4 1934713408
        %v2288 = vunpack.c.0.s8 %v2287
        %v2289 = vlaneseq
        %v2290 = vshrl.u32 %v2289, 7
        %v2291 = vsub.s32 %v2288, %v2290
        %v2292 = vrot.slane %v2278, %v2291
        %v2293 = vcombine.low %v2269, %v2285
        %v2294 = vcombine.high %v2269, %v2285
        %v2295 = vcombine.low %v2276, %v2292
        %v2296 = vcombine.high %v2276, %v2292
        %v2297 = vpack.c.bf16 %v1997, %v1997
        %v2298 = vpack.c.bf16 %v1998, %v1998
        %v2299 = vpack.c.bf16 %v1999, %v1999
        %v2300 = vpack.c.bf16 %v2000, %v2000
        %v2301 = vpack.c.bf16 %v2145, %v2145
        %v2302 = vpack.c.bf16 %v2146, %v2146
        %v2303 = vpack.c.bf16 %v2147, %v2147
        %v2304 = vpack.c.bf16 %v2148, %v2148
        %v2306 = vsel %vm947, %v2297, 0
        %v2309 = vsel %vm947, %v2301, 0
        %2311 = vmatprep.subr.bf16.mxu0 0
        %2312 = vmatpush1.bf16.xpose.msra.mxu0 %v2309
        %2313 = vmatprep.subr.bf16.mxu0 0
        %2314 = vmatpush1.bf16.xpose.msra.mxu0 0
        %2315 = vmatprep.subr.bf16.mxu0 0
        %2316 = vmatpush1.bf16.xpose.msra.mxu0 0
        %2317 = vmatprep.subr.bf16.mxu0 0
        %2318 = vmatpush1.bf16.xpose.msra.mxu0 0
        %2319 = vmatprep.subr.bf16.mxu0 0
        %2320 = vmatpush1.bf16.xpose.msra.mxu0 0
        %2321 = vmatprep.subr.bf16.mxu0 0
        %2322 = vmatpush1.bf16.xpose.msra.mxu0 0
        %2323 = vmatprep.subr.bf16.mxu0 0
        %2324 = vmatpush1.bf16.xpose.msra.mxu0 0
        %2325 = vmatprep.subr.bf16.mxu0 0
        %2326 = vmatpush1.bf16.xpose.msra.mxu0 0
        %2327 = vmatprep.subr.bf16.mxu0 0
        %2328 = vmatpush1.bf16.xpose.msra.mxu0 0
        %2329 = vmatprep.subr.bf16.mxu0 0
        %2330 = vmatpush1.bf16.xpose.msra.mxu0 0
        %2331 = vmatprep.subr.bf16.mxu0 0
        %2332 = vmatpush1.bf16.xpose.msra.mxu0 0
        %2333 = vmatprep.subr.bf16.mxu0 0
        %2334 = vmatpush1.bf16.xpose.msra.mxu0 0
        %2335 = vmatprep.subr.bf16.mxu0 0
        %2336 = vmatpush1.bf16.xpose.msra.mxu0 0
        %2337 = vmatprep.subr.bf16.mxu0 0
        %2338 = vmatpush1.bf16.xpose.msra.mxu0 0
        %2339 = vmatprep.subr.bf16.mxu0 0
        %2340 = vmatpush1.bf16.xpose.msra.mxu0 0
        %2341 = vmatprep.subr.bf16.mxu0 0
        %2342 = vmatpush1.bf16.xpose.msra.mxu0 0
        %2343 = vmatprep.mubr.bf16.mxu0 0
        %2344 = vmatmul.mubr.bf16.gmra.mrb[0].mxu0 %v2306
        %v2345 = vpop.f32.mrb[0].mxu0
        %v2346 = vadd.f32 %v945, %v2345
        %v2347 = vpop.f32.mrb[0].mxu0
        %v2348 = vpop.f32.mrb[0].mxu0
        %v2349 = vpop.f32.mrb[0].mxu0
        %2350 = vdwg.mxu0
        %v2352 = vsel %vm947, %v2298, 0
        %v2355 = vsel %vm947, %v2302, 0
        %2357 = vmatprep.subr.bf16.mxu0 0
        %2358 = vmatpush1.bf16.xpose.msra.mxu0 %v2355
        %2359 = vmatprep.subr.bf16.mxu0 0
        %2360 = vmatpush1.bf16.xpose.msra.mxu0 0
        %2361 = vmatprep.subr.bf16.mxu0 0
        %2362 = vmatpush1.bf16.xpose.msra.mxu0 0
        %2363 = vmatprep.subr.bf16.mxu0 0
        %2364 = vmatpush1.bf16.xpose.msra.mxu0 0
        %2365 = vmatprep.subr.bf16.mxu0 0
        %2366 = vmatpush1.bf16.xpose.msra.mxu0 0
        %2367 = vmatprep.subr.bf16.mxu0 0
        %2368 = vmatpush1.bf16.xpose.msra.mxu0 0
        %2369 = vmatprep.subr.bf16.mxu0 0
        %2370 = vmatpush1.bf16.xpose.msra.mxu0 0
        %2371 = vmatprep.subr.bf16.mxu0 0
        %2372 = vmatpush1.bf16.xpose.msra.mxu0 0
        %2373 = vmatprep.subr.bf16.mxu0 0
        %2374 = vmatpush1.bf16.xpose.msra.mxu0 0
        %2375 = vmatprep.subr.bf16.mxu0 0
        %2376 = vmatpush1.bf16.xpose.msra.mxu0 0
        %2377 = vmatprep.subr.bf16.mxu0 0
        %2378 = vmatpush1.bf16.xpose.msra.mxu0 0
        %2379 = vmatprep.subr.bf16.mxu0 0
        %2380 = vmatpush1.bf16.xpose.msra.mxu0 0
        %2381 = vmatprep.subr.bf16.mxu0 0
        %2382 = vmatpush1.bf16.xpose.msra.mxu0 0
        %2383 = vmatprep.subr.bf16.mxu0 0
        %2384 = vmatpush1.bf16.xpose.msra.mxu0 0
        %2385 = vmatprep.subr.bf16.mxu0 0
        %2386 = vmatpush1.bf16.xpose.msra.mxu0 0
        %2387 = vmatprep.subr.bf16.mxu0 0
        %2388 = vmatpush1.bf16.xpose.msra.mxu0 0
        %2389 = vmatprep.mubr.bf16.mxu0 0
        %2390 = vmatmul.mubr.bf16.gmra.mrb[0].mxu0 %v2352
        %v2391 = vpop.f32.mrb[0].mxu0
        %v2392 = vadd.f32 %v945, %v2391
        %v2393 = vpop.f32.mrb[0].mxu0
        %v2394 = vpop.f32.mrb[0].mxu0
        %v2395 = vpop.f32.mrb[0].mxu0
        %2396 = vdwg.mxu0
        %v2398 = vsel %vm947, %v2299, 0
        %v2401 = vsel %vm947, %v2303, 0
        %2403 = vmatprep.subr.bf16.mxu0 0
        %2404 = vmatpush1.bf16.xpose.msra.mxu0 %v2401
        %2405 = vmatprep.subr.bf16.mxu0 0
        %2406 = vmatpush1.bf16.xpose.msra.mxu0 0
        %2407 = vmatprep.subr.bf16.mxu0 0
        %2408 = vmatpush1.bf16.xpose.msra.mxu0 0
        %2409 = vmatprep.subr.bf16.mxu0 0
        %2410 = vmatpush1.bf16.xpose.msra.mxu0 0
        %2411 = vmatprep.subr.bf16.mxu0 0
        %2412 = vmatpush1.bf16.xpose.msra.mxu0 0
        %2413 = vmatprep.subr.bf16.mxu0 0
        %2414 = vmatpush1.bf16.xpose.msra.mxu0 0
        %2415 = vmatprep.subr.bf16.mxu0 0
        %2416 = vmatpush1.bf16.xpose.msra.mxu0 0
        %2417 = vmatprep.subr.bf16.mxu0 0
        %2418 = vmatpush1.bf16.xpose.msra.mxu0 0
        %2419 = vmatprep.subr.bf16.mxu0 0
        %2420 = vmatpush1.bf16.xpose.msra.mxu0 0
        %2421 = vmatprep.subr.bf16.mxu0 0
        %2422 = vmatpush1.bf16.xpose.msra.mxu0 0
        %2423 = vmatprep.subr.bf16.mxu0 0
        %2424 = vmatpush1.bf16.xpose.msra.mxu0 0
        %2425 = vmatprep.subr.bf16.mxu0 0
        %2426 = vmatpush1.bf16.xpose.msra.mxu0 0
        %2427 = vmatprep.subr.bf16.mxu0 0
        %2428 = vmatpush1.bf16.xpose.msra.mxu0 0
        %2429 = vmatprep.subr.bf16.mxu0 0
        %2430 = vmatpush1.bf16.xpose.msra.mxu0 0
        %2431 = vmatprep.subr.bf16.mxu0 0
        %2432 = vmatpush1.bf16.xpose.msra.mxu0 0
        %2433 = vmatprep.subr.bf16.mxu0 0
        %2434 = vmatpush1.bf16.xpose.msra.mxu0 0
        %2435 = vmatprep.mubr.bf16.mxu0 0
        %2436 = vmatmul.mubr.bf16.gmra.mrb[0].mxu0 %v2398
        %v2437 = vpop.f32.mrb[0].mxu0
        %v2438 = vadd.f32 %v945, %v2437
        %v2439 = vpop.f32.mrb[0].mxu0
        %v2440 = vpop.f32.mrb[0].mxu0
        %v2441 = vpop.f32.mrb[0].mxu0
        %2442 = vdwg.mxu0
        %v2444 = vsel %vm947, %v2300, 0
        %v2447 = vsel %vm947, %v2304, 0
        %2449 = vmatprep.subr.bf16.mxu0 0
        %2450 = vmatpush1.bf16.xpose.msra.mxu0 %v2447
        %2451 = vmatprep.subr.bf16.mxu0 0
        %2452 = vmatpush1.bf16.xpose.msra.mxu0 0
        %2453 = vmatprep.subr.bf16.mxu0 0
        %2454 = vmatpush1.bf16.xpose.msra.mxu0 0
        %2455 = vmatprep.subr.bf16.mxu0 0
        %2456 = vmatpush1.bf16.xpose.msra.mxu0 0
        %2457 = vmatprep.subr.bf16.mxu0 0
        %2458 = vmatpush1.bf16.xpose.msra.mxu0 0
        %2459 = vmatprep.subr.bf16.mxu0 0
        %2460 = vmatpush1.bf16.xpose.msra.mxu0 0
        %2461 = vmatprep.subr.bf16.mxu0 0
        %2462 = vmatpush1.bf16.xpose.msra.mxu0 0
        %2463 = vmatprep.subr.bf16.mxu0 0
        %2464 = vmatpush1.bf16.xpose.msra.mxu0 0
        %2465 = vmatprep.subr.bf16.mxu0 0
        %2466 = vmatpush1.bf16.xpose.msra.mxu0 0
        %2467 = vmatprep.subr.bf16.mxu0 0
        %2468 = vmatpush1.bf16.xpose.msra.mxu0 0
        %2469 = vmatprep.subr.bf16.mxu0 0
        %2470 = vmatpush1.bf16.xpose.msra.mxu0 0
        %2471 = vmatprep.subr.bf16.mxu0 0
        %2472 = vmatpush1.bf16.xpose.msra.mxu0 0
        %2473 = vmatprep.subr.bf16.mxu0 0
        %2474 = vmatpush1.bf16.xpose.msra.mxu0 0
        %2475 = vmatprep.subr.bf16.mxu0 0
        %2476 = vmatpush1.bf16.xpose.msra.mxu0 0
        %2477 = vmatprep.subr.bf16.mxu0 0
        %2478 = vmatpush1.bf16.xpose.msra.mxu0 0
        %2479 = vmatprep.subr.bf16.mxu0 0
        %2480 = vmatpush1.bf16.xpose.msra.mxu0 0
        %2481 = vmatprep.mubr.bf16.mxu0 0
        %2482 = vmatmul.mubr.bf16.gmra.mrb[0].mxu0 %v2444
        %v2483 = vpop.f32.mrb[0].mxu0
        %v2484 = vadd.f32 %v945, %v2483
        %v2485 = vpop.f32.mrb[0].mxu0
        %v2486 = vpop.f32.mrb[0].mxu0
        %v2487 = vpop.f32.mrb[0].mxu0
        %2488 = vdwg.mxu0
        %v2489 = vsel %vm947, %v2346, -inf
        %2490 = vmax.xlane.f32.xlu0 %v2489
        %v2491 = vpop.xlane.xlu0 %2490
        %v2492 = vsel %vm947, %v2392, -inf
        %2493 = vmax.xlane.f32.xlu0 %v2492
        %v2494 = vpop.xlane.xlu0 %2493
        %v2495 = vsel %vm947, %v2438, -inf
        %2496 = vmax.xlane.f32.xlu0 %v2495
        %v2497 = vpop.xlane.xlu0 %2496
        %v2498 = vsel %vm947, %v2484, -inf
        %2499 = vmax.xlane.f32.xlu0 %v2498
        %v2500 = vpop.xlane.xlu0 %2499
        %v2501 = vsub.f32 %v2346, %v2491
        %v2502 = vsub.f32 %v2392, %v2494
        %v2503 = vsub.f32 %v2438, %v2497
        %v2504 = vsub.f32 %v2484, %v2500
        %v2505 = vmul.f32 %v2501, 1.442695
        %v2506 = vpow.pop %v2505
        %v2507 = vmul.f32 %v2502, 1.442695
        %v2508 = vpow.pop %v2507
        %v2509 = vmul.f32 %v2503, 1.442695
        %v2510 = vpow.pop %v2509
        %v2511 = vmul.f32 %v2504, 1.442695
        %v2512 = vpow.pop %v2511
        %v2513 = vsel %vm947, %v2506, 0.0
        %2514 = vadd.xlane.f32.xlu0 %v2513
        %v2515 = vpop.xlane.xlu0 %2514
        %v2516 = vsel %vm947, %v2508, 0.0
        %2517 = vadd.xlane.f32.xlu0 %v2516
        %v2518 = vpop.xlane.xlu0 %2517
        %v2519 = vsel %vm947, %v2510, 0.0
        %2520 = vadd.xlane.f32.xlu0 %v2519
        %v2521 = vpop.xlane.xlu0 %2520
        %v2522 = vsel %vm947, %v2512, 0.0
        %2523 = vadd.xlane.f32.xlu0 %v2522
        %v2524 = vpop.xlane.xlu0 %2523
        %v2525 = vrcp.pop %v2515
        %v2526 = vrcp.pop %v2518
        %v2527 = vrcp.pop %v2521
        %v2528 = vrcp.pop %v2524
        %v2529 = vmul.f32 %v2506, %v2525
        %v2530 = vmul.f32 %v2508, %v2526
        %v2531 = vmul.f32 %v2510, %v2527
        %v2532 = vmul.f32 %v2512, %v2528
        %v2533 = vpack.c.bf16 %v2529, %v2529
        %v2534 = vpack.c.bf16 %v2530, %v2530
        %v2535 = vpack.c.bf16 %v2531, %v2531
        %v2536 = vpack.c.bf16 %v2532, %v2532
        %v2537 = vpack.c.bf16 %v2293, %v2293
        %v2538 = vpack.c.bf16 %v2294, %v2294
        %v2539 = vpack.c.bf16 %v2295, %v2295
        %v2540 = vpack.c.bf16 %v2296, %v2296
        %v2542 = vsel %vm947, %v2533, 0
        %v2545 = vsel %vm1187, %v2537, 0
        %2547 = vmatprep.subr.bf16.mxu0 0
        %2548 = vmatpush1.bf16.msra.mxu0 %v2545
        %2549 = vmatprep.subr.bf16.mxu0 0
        %2550 = vmatpush1.bf16.msra.mxu0 0
        %2551 = vmatprep.subr.bf16.mxu0 0
        %2552 = vmatpush1.bf16.msra.mxu0 0
        %2553 = vmatprep.subr.bf16.mxu0 0
        %2554 = vmatpush1.bf16.msra.mxu0 0
        %2555 = vmatprep.subr.bf16.mxu0 0
        %2556 = vmatpush1.bf16.msra.mxu0 0
        %2557 = vmatprep.subr.bf16.mxu0 0
        %2558 = vmatpush1.bf16.msra.mxu0 0
        %2559 = vmatprep.subr.bf16.mxu0 0
        %2560 = vmatpush1.bf16.msra.mxu0 0
        %2561 = vmatprep.subr.bf16.mxu0 0
        %2562 = vmatpush1.bf16.msra.mxu0 0
        %2563 = vmatprep.subr.bf16.mxu0 0
        %2564 = vmatpush1.bf16.msra.mxu0 0
        %2565 = vmatprep.subr.bf16.mxu0 0
        %2566 = vmatpush1.bf16.msra.mxu0 0
        %2567 = vmatprep.subr.bf16.mxu0 0
        %2568 = vmatpush1.bf16.msra.mxu0 0
        %2569 = vmatprep.subr.bf16.mxu0 0
        %2570 = vmatpush1.bf16.msra.mxu0 0
        %2571 = vmatprep.subr.bf16.mxu0 0
        %2572 = vmatpush1.bf16.msra.mxu0 0
        %2573 = vmatprep.subr.bf16.mxu0 0
        %2574 = vmatpush1.bf16.msra.mxu0 0
        %2575 = vmatprep.subr.bf16.mxu0 0
        %2576 = vmatpush1.bf16.msra.mxu0 0
        %2577 = vmatprep.subr.bf16.mxu0 0
        %2578 = vmatpush1.bf16.msra.mxu0 0
        %2579 = vmatprep.mubr.bf16.mxu0 0
        %2580 = vmatmul.mubr.bf16.gmra.mrb[0].mxu0 %v2542
        %v2581 = vpop.f32.mrb[0].mxu0
        %v2582 = vadd.f32 0.0, %v2581
        %v2583 = vpop.f32.mrb[0].mxu0
        %v2584 = vpop.f32.mrb[0].mxu0
        %v2585 = vpop.f32.mrb[0].mxu0
        %2586 = vdwg.mxu0
        %v2588 = vsel %vm947, %v2534, 0
        %v2591 = vsel %vm1187, %v2538, 0
        %2593 = vmatprep.subr.bf16.mxu0 0
        %2594 = vmatpush1.bf16.msra.mxu0 %v2591
        %2595 = vmatprep.subr.bf16.mxu0 0
        %2596 = vmatpush1.bf16.msra.mxu0 0
        %2597 = vmatprep.subr.bf16.mxu0 0
        %2598 = vmatpush1.bf16.msra.mxu0 0
        %2599 = vmatprep.subr.bf16.mxu0 0
        %2600 = vmatpush1.bf16.msra.mxu0 0
        %2601 = vmatprep.subr.bf16.mxu0 0
        %2602 = vmatpush1.bf16.msra.mxu0 0
        %2603 = vmatprep.subr.bf16.mxu0 0
        %2604 = vmatpush1.bf16.msra.mxu0 0
        %2605 = vmatprep.subr.bf16.mxu0 0
        %2606 = vmatpush1.bf16.msra.mxu0 0
        %2607 = vmatprep.subr.bf16.mxu0 0
        %2608 = vmatpush1.bf16.msra.mxu0 0
        %2609 = vmatprep.subr.bf16.mxu0 0
        %2610 = vmatpush1.bf16.msra.mxu0 0
        %2611 = vmatprep.subr.bf16.mxu0 0
        %2612 = vmatpush1.bf16.msra.mxu0 0
        %2613 = vmatprep.subr.bf16.mxu0 0
        %2614 = vmatpush1.bf16.msra.mxu0 0
        %2615 = vmatprep.subr.bf16.mxu0 0
        %2616 = vmatpush1.bf16.msra.mxu0 0
        %2617 = vmatprep.subr.bf16.mxu0 0
        %2618 = vmatpush1.bf16.msra.mxu0 0
        %2619 = vmatprep.subr.bf16.mxu0 0
        %2620 = vmatpush1.bf16.msra.mxu0 0
        %2621 = vmatprep.subr.bf16.mxu0 0
        %2622 = vmatpush1.bf16.msra.mxu0 0
        %2623 = vmatprep.subr.bf16.mxu0 0
        %2624 = vmatpush1.bf16.msra.mxu0 0
        %2625 = vmatprep.mubr.bf16.mxu0 0
        %2626 = vmatmul.mubr.bf16.gmra.mrb[0].mxu0 %v2588
        %v2627 = vpop.f32.mrb[0].mxu0
        %v2628 = vadd.f32 0.0, %v2627
        %v2629 = vpop.f32.mrb[0].mxu0
        %v2630 = vpop.f32.mrb[0].mxu0
        %v2631 = vpop.f32.mrb[0].mxu0
        %2632 = vdwg.mxu0
        %v2634 = vsel %vm947, %v2535, 0
        %v2637 = vsel %vm1187, %v2539, 0
        %2639 = vmatprep.subr.bf16.mxu0 0
        %2640 = vmatpush1.bf16.msra.mxu0 %v2637
        %2641 = vmatprep.subr.bf16.mxu0 0
        %2642 = vmatpush1.bf16.msra.mxu0 0
        %2643 = vmatprep.subr.bf16.mxu0 0
        %2644 = vmatpush1.bf16.msra.mxu0 0
        %2645 = vmatprep.subr.bf16.mxu0 0
        %2646 = vmatpush1.bf16.msra.mxu0 0
        %2647 = vmatprep.subr.bf16.mxu0 0
        %2648 = vmatpush1.bf16.msra.mxu0 0
        %2649 = vmatprep.subr.bf16.mxu0 0
        %2650 = vmatpush1.bf16.msra.mxu0 0
        %2651 = vmatprep.subr.bf16.mxu0 0
        %2652 = vmatpush1.bf16.msra.mxu0 0
        %2653 = vmatprep.subr.bf16.mxu0 0
        %2654 = vmatpush1.bf16.msra.mxu0 0
        %2655 = vmatprep.subr.bf16.mxu0 0
        %2656 = vmatpush1.bf16.msra.mxu0 0
        %2657 = vmatprep.subr.bf16.mxu0 0
        %2658 = vmatpush1.bf16.msra.mxu0 0
        %2659 = vmatprep.subr.bf16.mxu0 0
        %2660 = vmatpush1.bf16.msra.mxu0 0
        %2661 = vmatprep.subr.bf16.mxu0 0
        %2662 = vmatpush1.bf16.msra.mxu0 0
        %2663 = vmatprep.subr.bf16.mxu0 0
        %2664 = vmatpush1.bf16.msra.mxu0 0
        %2665 = vmatprep.subr.bf16.mxu0 0
        %2666 = vmatpush1.bf16.msra.mxu0 0
        %2667 = vmatprep.subr.bf16.mxu0 0
        %2668 = vmatpush1.bf16.msra.mxu0 0
        %2669 = vmatprep.subr.bf16.mxu0 0
        %2670 = vmatpush1.bf16.msra.mxu0 0
        %2671 = vmatprep.mubr.bf16.mxu0 0
        %2672 = vmatmul.mubr.bf16.gmra.mrb[0].mxu0 %v2634
        %v2673 = vpop.f32.mrb[0].mxu0
        %v2674 = vadd.f32 0.0, %v2673
        %v2675 = vpop.f32.mrb[0].mxu0
        %v2676 = vpop.f32.mrb[0].mxu0
        %v2677 = vpop.f32.mrb[0].mxu0
        %2678 = vdwg.mxu0
        %v2680 = vsel %vm947, %v2536, 0
        %v2683 = vsel %vm1187, %v2540, 0
        %2685 = vmatprep.subr.bf16.mxu0 0
        %2686 = vmatpush1.bf16.msra.mxu0 %v2683
        %2687 = vmatprep.subr.bf16.mxu0 0
        %2688 = vmatpush1.bf16.msra.mxu0 0
        %2689 = vmatprep.subr.bf16.mxu0 0
        %2690 = vmatpush1.bf16.msra.mxu0 0
        %2691 = vmatprep.subr.bf16.mxu0 0
        %2692 = vmatpush1.bf16.msra.mxu0 0
        %2693 = vmatprep.subr.bf16.mxu0 0
        %2694 = vmatpush1.bf16.msra.mxu0 0
        %2695 = vmatprep.subr.bf16.mxu0 0
        %2696 = vmatpush1.bf16.msra.mxu0 0
        %2697 = vmatprep.subr.bf16.mxu0 0
        %2698 = vmatpush1.bf16.msra.mxu0 0
        %2699 = vmatprep.subr.bf16.mxu0 0
        %2700 = vmatpush1.bf16.msra.mxu0 0
        %2701 = vmatprep.subr.bf16.mxu0 0
        %2702 = vmatpush1.bf16.msra.mxu0 0
        %2703 = vmatprep.subr.bf16.mxu0 0
        %2704 = vmatpush1.bf16.msra.mxu0 0
        %2705 = vmatprep.subr.bf16.mxu0 0
        %2706 = vmatpush1.bf16.msra.mxu0 0
        %2707 = vmatprep.subr.bf16.mxu0 0
        %2708 = vmatpush1.bf16.msra.mxu0 0
        %2709 = vmatprep.subr.bf16.mxu0 0
        %2710 = vmatpush1.bf16.msra.mxu0 0
        %2711 = vmatprep.subr.bf16.mxu0 0
        %2712 = vmatpush1.bf16.msra.mxu0 0
        %2713 = vmatprep.subr.bf16.mxu0 0
        %2714 = vmatpush1.bf16.msra.mxu0 0
        %2715 = vmatprep.subr.bf16.mxu0 0
        %2716 = vmatpush1.bf16.msra.mxu0 0
        %2717 = vmatprep.mubr.bf16.mxu0 0
        %2718 = vmatmul.mubr.bf16.gmra.mrb[0].mxu0 %v2680
        %v2719 = vpop.f32.mrb[0].mxu0
        %v2720 = vadd.f32 0.0, %v2719
        %v2721 = vpop.f32.mrb[0].mxu0
        %v2722 = vpop.f32.mrb[0].mxu0
        %v2723 = vpop.f32.mrb[0].mxu0
        %2724 = vdwg.mxu0
        %v2725 = vcombine.low %v2582, %v2674
        %v2726 = vcombine.high %v2582, %v2674
        %v2728 = vunpack.c.l.s4 1983009808
        %v2729 = vunpack.c.0.s8 %v2728
        %v2730 = vlaneseq
        %v2731 = vshrl.u32 %v2730, 7
        %v2732 = vsub.s32 %v2729, %v2731
        %v2733 = vrot.slane %v2725, %v2732
        %v2735 = vunpack.c.l.s4 1983009808
        %v2736 = vunpack.c.0.s8 %v2735
        %v2737 = vlaneseq
        %v2738 = vshrl.u32 %v2737, 7
        %v2739 = vsub.s32 %v2736, %v2738
        %v2740 = vrot.slane %v2726, %v2739
        %v2741 = vcombine.low %v2628, %v2720
        %v2742 = vcombine.high %v2628, %v2720
        %v2744 = vunpack.c.l.s4 1983009808
        %v2745 = vunpack.c.0.s8 %v2744
        %v2746 = vlaneseq
        %v2747 = vshrl.u32 %v2746, 7
        %v2748 = vsub.s32 %v2745, %v2747
        %v2749 = vrot.slane %v2741, %v2748
        %v2751 = vunpack.c.l.s4 1983009808
        %v2752 = vunpack.c.0.s8 %v2751
        %v2753 = vlaneseq
        %v2754 = vshrl.u32 %v2753, 7
        %v2755 = vsub.s32 %v2752, %v2754
        %v2756 = vrot.slane %v2742, %v2755
        %v2757 = vcombine.low %v2733, %v2749
        %v2758 = vcombine.high %v2733, %v2749
        %v2760 = vunpack.c.l.s4 1934713408
        %v2761 = vunpack.c.0.s8 %v2760
        %v2762 = vlaneseq
        %v2763 = vshrl.u32 %v2762, 7
        %v2764 = vsub.s32 %v2761, %v2763
        %v2765 = vrot.slane %v2757, %v2764
        %v2767 = vunpack.c.l.s4 1934713408
        %v2768 = vunpack.c.0.s8 %v2767
        %v2769 = vlaneseq
        %v2770 = vshrl.u32 %v2769, 7
        %v2771 = vsub.s32 %v2768, %v2770
        %v2772 = vrot.slane %v2758, %v2771
        %v2773 = vcombine.low %v2740, %v2756
        %v2774 = vcombine.high %v2740, %v2756
        %v2776 = vunpack.c.l.s4 1934713408
        %v2777 = vunpack.c.0.s8 %v2776
        %v2778 = vlaneseq
        %v2779 = vshrl.u32 %v2778, 7
        %v2780 = vsub.s32 %v2777, %v2779
        %v2781 = vrot.slane %v2773, %v2780
        %v2783 = vunpack.c.l.s4 1934713408
        %v2784 = vunpack.c.0.s8 %v2783
        %v2785 = vlaneseq
        %v2786 = vshrl.u32 %v2785, 7
        %v2787 = vsub.s32 %v2784, %v2786
        %v2788 = vrot.slane %v2774, %v2787
        %v2789 = vcombine.high %v2765, 0.0
        %v2790 = vcombine.high %v2772, 0.0
        %v2791 = vcombine.high %v2781, 0.0
        %v2792 = vcombine.high %v2788, 0.0
        %v2793 = vcombine.low %v2765, %v2772
        %v2795 = vunpack.c.l.s4 1983009808
        %v2796 = vunpack.c.0.s8 %v2795
        %v2797 = vlaneseq
        %v2798 = vshrl.u32 %v2797, 7
        %v2799 = vsub.s32 %v2796, %v2798
        %v2800 = vrot.slane %v2793, %v2799
        %v2801 = vcombine.low %v2789, %v2790
        %v2803 = vunpack.c.l.s4 1983009808
        %v2804 = vunpack.c.0.s8 %v2803
        %v2805 = vlaneseq
        %v2806 = vshrl.u32 %v2805, 7
        %v2807 = vsub.s32 %v2804, %v2806
        %v2808 = vrot.slane %v2801, %v2807
        %v2809 = vcombine.low %v2781, %v2788
        %v2811 = vunpack.c.l.s4 1983009808
        %v2812 = vunpack.c.0.s8 %v2811
        %v2813 = vlaneseq
        %v2814 = vshrl.u32 %v2813, 7
        %v2815 = vsub.s32 %v2812, %v2814
        %v2816 = vrot.slane %v2809, %v2815
        %v2817 = vcombine.low %v2791, %v2792
        %v2819 = vunpack.c.l.s4 1983009808
        %v2820 = vunpack.c.0.s8 %v2819
        %v2821 = vlaneseq
        %v2822 = vshrl.u32 %v2821, 7
        %v2823 = vsub.s32 %v2820, %v2822
        %v2824 = vrot.slane %v2817, %v2823
        %v2825 = vcombine.low %v2800, %v2808
        %v2826 = vcombine.high %v2800, %v2808
        %v2828 = vunpack.c.l.s4 1934713408
        %v2829 = vunpack.c.0.s8 %v2828
        %v2830 = vlaneseq
        %v2831 = vshrl.u32 %v2830, 7
        %v2832 = vsub.s32 %v2829, %v2831
        %v2833 = vrot.slane %v2825, %v2832
        %v2835 = vunpack.c.l.s4 1934713408
        %v2836 = vunpack.c.0.s8 %v2835
        %v2837 = vlaneseq
        %v2838 = vshrl.u32 %v2837, 7
        %v2839 = vsub.s32 %v2836, %v2838
        %v2840 = vrot.slane %v2826, %v2839
        %v2841 = vcombine.low %v2816, %v2824
        %v2842 = vcombine.high %v2816, %v2824
        %v2844 = vunpack.c.l.s4 1934713408
        %v2845 = vunpack.c.0.s8 %v2844
        %v2846 = vlaneseq
        %v2847 = vshrl.u32 %v2846, 7
        %v2848 = vsub.s32 %v2845, %v2847
        %v2849 = vrot.slane %v2841, %v2848
        %v2851 = vunpack.c.l.s4 1934713408
        %v2852 = vunpack.c.0.s8 %v2851
        %v2853 = vlaneseq
        %v2854 = vshrl.u32 %v2853, 7
        %v2855 = vsub.s32 %v2852, %v2854
        %v2856 = vrot.slane %v2842, %v2855
        %v2857 = vcombine.low %v2833, %v2849
        %v2858 = vcombine.high %v2833, %v2849
        %v2859 = vcombine.low %v2840, %v2856
        %v2860 = vcombine.high %v2840, %v2856
        %2862 = vrot.lane.b32.xlu0 %v2858, 8
        %v2863 = vpop.permute.xlu0 %2862
        %2866 = vrot.lane.b32.xlu0 %v2859, 16
        %v2867 = vpop.permute.xlu0 %2866
        %2870 = vrot.lane.b32.xlu0 %v2860, 24
        %v2871 = vpop.permute.xlu0 %2870
        %v2873 = vsel %vm947, %v2857, %v2863
        %v2874 = vsel %vm1518, %v2873, %v2867
        %v2875 = vsel %vm1520, %v2874, %v2871
        %v2876 = vpack.c.bf16 %v2875, %v2875
        %s2877 = scalar_lea.vmem %s5, 16
        %v2878 = vld [vmem:[%s2877] sm:$0xf]
        %v2879 = vld [vmem:[%s2877 + $0x4] sm:$0xf]
        %v2880 = vld [vmem:[%s2877 + $0x8] sm:$0xf]
        %v2881 = vld [vmem:[%s2877 + $0xc] sm:$0xf]
        %v2882 = vlaneseq
        %v2883 = vshrl.u32 %v2882, 7
        %v2884 = vsub.s32 2, %v2883
        %v2885 = vrot.slane %v1789, %v2884
        %v2890 = vunpack.c.l.b16 %v2878
        %v2891 = vunpack.c.l.b16 %v2879
        %v2892 = vunpack.c.l.b16 %v2880
        %v2893 = vunpack.c.l.b16 %v2881
        %v2894 = vpack.c.b16 %v2891, %v2890
        %v2895 = vpack.c.b16 %v2893, %v2892
        %v2899 = vsel %vm400, %v2876, 0
        %2901 = vmatprep.subr.bf16.mxu0 0
        %2902 = vmatpush1.bf16.msra.mxu0 %v2894
        %2903 = vmatprep.subr.bf16.mxu0 0
        %2904 = vmatpush1.bf16.msra.mxu0 %v2895
        %2905 = vmatprep.subr.bf16.mxu0 0
        %2906 = vmatpush1.bf16.msra.mxu0 0
        %2907 = vmatprep.subr.bf16.mxu0 0
        %2908 = vmatpush1.bf16.msra.mxu0 0
        %2909 = vmatprep.subr.bf16.mxu0 0
        %2910 = vmatpush1.bf16.msra.mxu0 0
        %2911 = vmatprep.subr.bf16.mxu0 0
        %2912 = vmatpush1.bf16.msra.mxu0 0
        %2913 = vmatprep.subr.bf16.mxu0 0
        %2914 = vmatpush1.bf16.msra.mxu0 0
        %2915 = vmatprep.subr.bf16.mxu0 0
        %2916 = vmatpush1.bf16.msra.mxu0 0
        %2917 = vmatprep.subr.bf16.mxu0 0
        %2918 = vmatpush1.bf16.msra.mxu0 0
        %2919 = vmatprep.subr.bf16.mxu0 0
        %2920 = vmatpush1.bf16.msra.mxu0 0
        %2921 = vmatprep.subr.bf16.mxu0 0
        %2922 = vmatpush1.bf16.msra.mxu0 0
        %2923 = vmatprep.subr.bf16.mxu0 0
        %2924 = vmatpush1.bf16.msra.mxu0 0
        %2925 = vmatprep.subr.bf16.mxu0 0
        %2926 = vmatpush1.bf16.msra.mxu0 0
        %2927 = vmatprep.subr.bf16.mxu0 0
        %2928 = vmatpush1.bf16.msra.mxu0 0
        %2929 = vmatprep.subr.bf16.mxu0 0
        %2930 = vmatpush1.bf16.msra.mxu0 0
        %2931 = vmatprep.subr.bf16.mxu0 0
        %2932 = vmatpush1.bf16.msra.mxu0 0
        %2933 = vmatprep.mubr.bf16.mxu0 0
        %2934 = vmatmul.mubr.bf16.gmra.mrb[0].mxu0 %v2899
        %v2935 = vpop.f32.mrb[0].mxu0
        %v2936 = vadd.f32 %v2885, %v2935
        %v2937 = vpop.f32.mrb[0].mxu0
        %v2938 = vpop.f32.mrb[0].mxu0
        %v2939 = vpop.f32.mrb[0].mxu0
        %2940 = vdwg.mxu0
        %v2941 = vadd.f32 %v2936, %v1787
        %v2942 = vsel %vm400, %v2941, 0.0
        %2943 = vadd.xlane.f32.xlu0 %v2942
        %v2944 = vpop.xlane.xlu0 %2943
        %v2945 = vmul.f32 %v2944, %v404
        %v2946 = vsub.f32 %v2941, %v2945
        %v2947 = vmul.f32 %v2946, %v2946
        %v2948 = vsel %vm400, %v2947, 0.0
        %2949 = vadd.xlane.f32.xlu0 %v2948
        %v2950 = vpop.xlane.xlu0 %2949
        %v2951 = vmul.f32 %v2950, %v404
        %v2952 = vadd.f32 %v2951, 1e-12
        %v2953 = vrsqrt.pop %v2952
        %v2954 = vmul.f32 %v2946, %v2953
        %v2955 = vlaneseq
        %v2956 = vshrl.u32 %v2955, 7
        %v2957 = vsub.s32 3, %v2956
        %v2958 = vrot.slane %v1789, %v2957
        %v2959 = vmul.f32 %v2954, %v2958
        %v2960 = vlaneseq
        %v2961 = vshrl.u32 %v2960, 7
        %v2962 = vsub.s32 4, %v2961
        %v2963 = vrot.slane %v1789, %v2962
        %v2964 = vadd.f32 %v2959, %v2963
        %v2965 = vpack.c.bf16 %v2964, %v2964
        %s2966 = scalar_lea.vmem %s6, 16
        %v2967 = vld [vmem:[%s2966] sm:$0xf]
        %v2968 = vld [vmem:[%s2966 + $0x4] sm:$0xf]
        %v2969 = vld [vmem:[%s2966 + $0x8] sm:$0xf]
        %v2970 = vld [vmem:[%s2966 + $0xc] sm:$0xf]
        %v2971 = vlaneseq
        %v2972 = vshrl.u32 %v2971, 7
        %v2973 = vsub.s32 1, %v2972
        %v2974 = vrot.slane %v1789, %v2973
        %v2979 = vunpack.c.l.b16 %v2967
        %v2980 = vunpack.c.l.b16 %v2968
        %v2981 = vunpack.c.l.b16 %v2969
        %v2982 = vunpack.c.l.b16 %v2970
        %v2983 = vpack.c.b16 %v2980, %v2979
        %v2984 = vpack.c.b16 %v2982, %v2981
        %v2988 = vsel %vm400, %v2965, 0
        %2990 = vmatprep.subr.bf16.mxu0 0
        %2991 = vmatpush1.bf16.msra.mxu0 %v2983
        %2992 = vmatprep.subr.bf16.mxu0 0
        %2993 = vmatpush1.bf16.msra.mxu0 %v2984
        %2994 = vmatprep.subr.bf16.mxu0 0
        %2995 = vmatpush1.bf16.msra.mxu0 0
        %2996 = vmatprep.subr.bf16.mxu0 0
        %2997 = vmatpush1.bf16.msra.mxu0 0
        %2998 = vmatprep.subr.bf16.mxu0 0
        %2999 = vmatpush1.bf16.msra.mxu0 0
        %3000 = vmatprep.subr.bf16.mxu0 0
        %3001 = vmatpush1.bf16.msra.mxu0 0
        %3002 = vmatprep.subr.bf16.mxu0 0
        %3003 = vmatpush1.bf16.msra.mxu0 0
        %3004 = vmatprep.subr.bf16.mxu0 0
        %3005 = vmatpush1.bf16.msra.mxu0 0
        %3006 = vmatprep.subr.bf16.mxu0 0
        %3007 = vmatpush1.bf16.msra.mxu0 0
        %3008 = vmatprep.subr.bf16.mxu0 0
        %3009 = vmatpush1.bf16.msra.mxu0 0
        %3010 = vmatprep.subr.bf16.mxu0 0
        %3011 = vmatpush1.bf16.msra.mxu0 0
        %3012 = vmatprep.subr.bf16.mxu0 0
        %3013 = vmatpush1.bf16.msra.mxu0 0
        %3014 = vmatprep.subr.bf16.mxu0 0
        %3015 = vmatpush1.bf16.msra.mxu0 0
        %3016 = vmatprep.subr.bf16.mxu0 0
        %3017 = vmatpush1.bf16.msra.mxu0 0
        %3018 = vmatprep.subr.bf16.mxu0 0
        %3019 = vmatpush1.bf16.msra.mxu0 0
        %3020 = vmatprep.subr.bf16.mxu0 0
        %3021 = vmatpush1.bf16.msra.mxu0 0
        %3022 = vmatprep.mubr.bf16.mxu0 0
        %3023 = vmatmul.mubr.bf16.gmra.mrb[0].mxu0 %v2988
        %v3024 = vpop.f32.mrb[0].mxu0
        %v3025 = vadd.f32 %v2974, %v3024
        %v3026 = vpop.f32.mrb[0].mxu0
        %v3027 = vpop.f32.mrb[0].mxu0
        %v3028 = vpop.f32.mrb[0].mxu0
        %3029 = vdwg.mxu0
        %v3030 = vmul.f32 %v3025, %v3025
        %v3031 = vmul.f32 %v3025, %v3030
        %v3032 = vmul.f32 %v3031, 0.044715
        %v3033 = vadd.f32 %v3025, %v3032
        %v3034 = vmul.f32 %v3033, 0.7978846
        %v3035 = vtanh.pop %v3034
        %v3036 = vadd.f32 %v3035, 1.0
        %v3037 = vmul.f32 %v3036, 0.5
        %v3038 = vmul.f32 %v3025, %v3037
        %v3039 = vpack.c.bf16 %v3038, %v3038
        %s3040 = scalar_lea.vmem %s7, 32
        %v3041 = vld [vmem:[%s3040] sm:$0xf]
        %v3042 = vld [vmem:[%s3040 + $0x4] sm:$0xf]
        %v3043 = vld [vmem:[%s3040 + $0x8] sm:$0xf]
        %v3044 = vld [vmem:[%s3040 + $0xc] sm:$0xf]
        %v3045 = vld [vmem:[%s3040 + $0x10] sm:$0xf]
        %v3046 = vld [vmem:[%s3040 + $0x14] sm:$0xf]
        %v3047 = vld [vmem:[%s3040 + $0x18] sm:$0xf]
        %v3048 = vld [vmem:[%s3040 + $0x1c] sm:$0xf]
        %v3049 = vlaneseq
        %v3050 = vshrl.u32 %v3049, 7
        %v3051 = vsub.s32 5, %v3050
        %v3052 = vrot.slane %v1789, %v3051
        %v3061 = vunpack.c.l.b16 %v3041
        %v3062 = vunpack.c.l.b16 %v3042
        %v3063 = vunpack.c.l.b16 %v3043
        %v3064 = vunpack.c.l.b16 %v3044
        %v3065 = vunpack.c.l.b16 %v3045
        %v3066 = vunpack.c.l.b16 %v3046
        %v3067 = vunpack.c.l.b16 %v3047
        %v3068 = vunpack.c.l.b16 %v3048
        %v3069 = vpack.c.b16 %v3062, %v3061
        %v3070 = vpack.c.b16 %v3064, %v3063
        %v3071 = vpack.c.b16 %v3066, %v3065
        %v3072 = vpack.c.b16 %v3068, %v3067
        %v3078 = vsel %vm1720, %v3039, 0
        %3080 = vmatprep.subr.bf16.mxu0 0
        %3081 = vmatpush1.bf16.msra.mxu0 %v3069
        %3082 = vmatprep.subr.bf16.mxu0 0
        %3083 = vmatpush1.bf16.msra.mxu0 %v3070
        %3084 = vmatprep.subr.bf16.mxu0 0
        %3085 = vmatpush1.bf16.msra.mxu0 %v3071
        %3086 = vmatprep.subr.bf16.mxu0 0
        %3087 = vmatpush1.bf16.msra.mxu0 %v3072
        %3088 = vmatprep.subr.bf16.mxu0 0
        %3089 = vmatpush1.bf16.msra.mxu0 0
        %3090 = vmatprep.subr.bf16.mxu0 0
        %3091 = vmatpush1.bf16.msra.mxu0 0
        %3092 = vmatprep.subr.bf16.mxu0 0
        %3093 = vmatpush1.bf16.msra.mxu0 0
        %3094 = vmatprep.subr.bf16.mxu0 0
        %3095 = vmatpush1.bf16.msra.mxu0 0
        %3096 = vmatprep.subr.bf16.mxu0 0
        %3097 = vmatpush1.bf16.msra.mxu0 0
        %3098 = vmatprep.subr.bf16.mxu0 0
        %3099 = vmatpush1.bf16.msra.mxu0 0
        %3100 = vmatprep.subr.bf16.mxu0 0
        %3101 = vmatpush1.bf16.msra.mxu0 0
        %3102 = vmatprep.subr.bf16.mxu0 0
        %3103 = vmatpush1.bf16.msra.mxu0 0
        %3104 = vmatprep.subr.bf16.mxu0 0
        %3105 = vmatpush1.bf16.msra.mxu0 0
        %3106 = vmatprep.subr.bf16.mxu0 0
        %3107 = vmatpush1.bf16.msra.mxu0 0
        %3108 = vmatprep.subr.bf16.mxu0 0
        %3109 = vmatpush1.bf16.msra.mxu0 0
        %3110 = vmatprep.subr.bf16.mxu0 0
        %3111 = vmatpush1.bf16.msra.mxu0 0
        %3112 = vmatprep.mubr.bf16.mxu0 0
        %3113 = vmatmul.mubr.bf16.gmra.mrb[0].mxu0 %v3078
        %v3114 = vpop.f32.mrb[0].mxu0
        %v3115 = vadd.f32 %v3052, %v3114
        %v3116 = vpop.f32.mrb[0].mxu0
        %v3117 = vpop.f32.mrb[0].mxu0
        %v3118 = vpop.f32.mrb[0].mxu0
        %3119 = vdwg.mxu0
        %v3120 = vadd.f32 %v3115, %v2964
        %v3121 = vsel %vm400, %v3120, 0.0
        %3122 = vadd.xlane.f32.xlu0 %v3121
        %v3123 = vpop.xlane.xlu0 %3122
        %v3124 = vmul.f32 %v3123, %v404
        %v3125 = vsub.f32 %v3120, %v3124
        %v3126 = vmul.f32 %v3125, %v3125
        %v3127 = vsel %vm400, %v3126, 0.0
        %3128 = vadd.xlane.f32.xlu0 %v3127
        %v3129 = vpop.xlane.xlu0 %3128
        %v3130 = vmul.f32 %v3129, %v404
        %v3131 = vadd.f32 %v3130, 1e-12
        %v3132 = vrsqrt.pop %v3131
        %v3133 = vmul.f32 %v3125, %v3132
        %v3134 = vlaneseq
        %v3135 = vshrl.u32 %v3134, 7
        %v3136 = vsub.s32 6, %v3135
        %v3137 = vrot.slane %v1789, %v3136
        %v3138 = vmul.f32 %v3133, %v3137
        %v3139 = vlaneseq
        %v3140 = vshrl.u32 %v3139, 7
        %v3141 = vsub.s32 7, %v3140
        %v3142 = vrot.slane %v1789, %v3141
        %v3143 = vadd.f32 %v3138, %v3142
        %v3144 = vpack.c.bf16 %v3143, %v3143
        %v3145 = vld [vmem:[%s9] sm:$0xf]
        %v3146 = vld [vmem:[%s9 + $0x4] sm:$0xf]
        %v3147 = vld [vmem:[%s9 + $0x8] sm:$0xf]
        %v3148 = vld [vmem:[%s9 + $0xc] sm:$0xf]
        %v3153 = vunpack.c.l.b16 %v3145
        %v3154 = vunpack.c.l.b16 %v3146
        %v3155 = vunpack.c.l.b16 %v3147
        %v3156 = vunpack.c.l.b16 %v3148
        %v3157 = vpack.c.b16 %v3154, %v3153
        %v3158 = vpack.c.b16 %v3156, %v3155
        %v3162 = vrot.slane %v396, 2
        %v3165 = vsel %vm400, %v3144, 0
        %3167 = vmatprep.subr.bf16.mxu0 0
        %3168 = vmatpush1.bf16.msra.mxu0 %v3157
        %3169 = vmatprep.subr.bf16.mxu0 0
        %3170 = vmatpush1.bf16.msra.mxu0 %v3158
        %3171 = vmatprep.subr.bf16.mxu0 0
        %3172 = vmatpush1.bf16.msra.mxu0 0
        %3173 = vmatprep.subr.bf16.mxu0 0
        %3174 = vmatpush1.bf16.msra.mxu0 0
        %3175 = vmatprep.subr.bf16.mxu0 0
        %3176 = vmatpush1.bf16.msra.mxu0 0
        %3177 = vmatprep.subr.bf16.mxu0 0
        %3178 = vmatpush1.bf16.msra.mxu0 0
        %3179 = vmatprep.subr.bf16.mxu0 0
        %3180 = vmatpush1.bf16.msra.mxu0 0
        %3181 = vmatprep.subr.bf16.mxu0 0
        %3182 = vmatpush1.bf16.msra.mxu0 0
        %3183 = vmatprep.subr.bf16.mxu0 0
        %3184 = vmatpush1.bf16.msra.mxu0 0
        %3185 = vmatprep.subr.bf16.mxu0 0
        %3186 = vmatpush1.bf16.msra.mxu0 0
        %3187 = vmatprep.subr.bf16.mxu0 0
        %3188 = vmatpush1.bf16.msra.mxu0 0
        %3189 = vmatprep.subr.bf16.mxu0 0
        %3190 = vmatpush1.bf16.msra.mxu0 0
        %3191 = vmatprep.subr.bf16.mxu0 0
        %3192 = vmatpush1.bf16.msra.mxu0 0
        %3193 = vmatprep.subr.bf16.mxu0 0
        %3194 = vmatpush1.bf16.msra.mxu0 0
        %3195 = vmatprep.subr.bf16.mxu0 0
        %3196 = vmatpush1.bf16.msra.mxu0 0
        %3197 = vmatprep.subr.bf16.mxu0 0
        %3198 = vmatpush1.bf16.msra.mxu0 0
        %3199 = vmatprep.mubr.bf16.mxu0 0
        %3200 = vmatmul.mubr.bf16.gmra.mrb[0].mxu0 %v3165
        %v3201 = vpop.f32.mrb[0].mxu0
        %v3202 = vadd.f32 %v3162, %v3201
        %v3203 = vpop.f32.mrb[0].mxu0
        %v3204 = vpop.f32.mrb[0].mxu0
        %v3205 = vpop.f32.mrb[0].mxu0
        %3206 = vdwg.mxu0
        %v3207 = vtanh.pop %v3202
        %v3208 = vpack.c.bf16 %v3207, %v3207
        %v3209 = vld [vmem:[%s10] sm:$0xf]
        %v3210 = vld [vmem:[%s10 + $0x4] sm:$0xf]
        %v3211 = vld [vmem:[%s10 + $0x8] sm:$0xf]
        %v3212 = vld [vmem:[%s10 + $0xc] sm:$0xf]
        %v3217 = vunpack.c.l.b16 %v3209
        %v3218 = vunpack.c.l.b16 %v3210
        %v3219 = vunpack.c.l.b16 %v3211
        %v3220 = vunpack.c.l.b16 %v3212
        %v3221 = vpack.c.b16 %v3218, %v3217
        %v3222 = vpack.c.b16 %v3220, %v3219
        %v3225 = vrot.slane %v396, 3
        %v3228 = vsel %vm400, %v3208, 0
        %3230 = vmatprep.subr.bf16.mxu0 0
        %3231 = vmatpush1.bf16.msra.mxu0 %v3221
        %3232 = vmatprep.subr.bf16.mxu0 0
        %3233 = vmatpush1.bf16.msra.mxu0 %v3222
        %3234 = vmatprep.subr.bf16.mxu0 0
        %3235 = vmatpush1.bf16.msra.mxu0 0
        %3236 = vmatprep.subr.bf16.mxu0 0
        %3237 = vmatpush1.bf16.msra.mxu0 0
        %3238 = vmatprep.subr.bf16.mxu0 0
        %3239 = vmatpush1.bf16.msra.mxu0 0
        %3240 = vmatprep.subr.bf16.mxu0 0
        %3241 = vmatpush1.bf16.msra.mxu0 0
        %3242 = vmatprep.subr.bf16.mxu0 0
        %3243 = vmatpush1.bf16.msra.mxu0 0
        %3244 = vmatprep.subr.bf16.mxu0 0
        %3245 = vmatpush1.bf16.msra.mxu0 0
        %3246 = vmatprep.subr.bf16.mxu0 0
        %3247 = vmatpush1.bf16.msra.mxu0 0
        %3248 = vmatprep.subr.bf16.mxu0 0
        %3249 = vmatpush1.bf16.msra.mxu0 0
        %3250 = vmatprep.subr.bf16.mxu0 0
        %3251 = vmatpush1.bf16.msra.mxu0 0
        %3252 = vmatprep.subr.bf16.mxu0 0
        %3253 = vmatpush1.bf16.msra.mxu0 0
        %3254 = vmatprep.subr.bf16.mxu0 0
        %3255 = vmatpush1.bf16.msra.mxu0 0
        %3256 = vmatprep.subr.bf16.mxu0 0
        %3257 = vmatpush1.bf16.msra.mxu0 0
        %3258 = vmatprep.subr.bf16.mxu0 0
        %3259 = vmatpush1.bf16.msra.mxu0 0
        %3260 = vmatprep.subr.bf16.mxu0 0
        %3261 = vmatpush1.bf16.msra.mxu0 0
        %3262 = vmatprep.mubr.bf16.mxu0 0
        %3263 = vmatmul.mubr.bf16.gmra.mrb[0].mxu0 %v3228
        %v3264 = vpop.f32.mrb[0].mxu0
        %v3265 = vadd.f32 %v3225, %v3264
        %v3266 = vpop.f32.mrb[0].mxu0
        %v3267 = vpop.f32.mrb[0].mxu0
        %v3268 = vpop.f32.mrb[0].mxu0
        %3269 = vdwg.mxu0
        %3270 = vst [vmem:[%s387] sm:$0x1] %v3265
        %s3271 = sand.u32 %s274, 1
        %s3272 = scalar_lea.sflag [#allocation3], %s3271
        %s3273 = sand.u32 %s274, 1
        %s3274 = scalar_lea.vmem [#allocation2], %s3273
        // Predicated region
        $region65: #{bert_sentiment_forward.1} parent=63 // pred_check
          %p3275 = pneg %p284
        $region66: #{bert_sentiment_forward.1} parent=63 // pred_check_branch
          %3277 = sbr.rel (%p3275) target = $region68
        $region67: #{bert_sentiment_forward.1} parent=63 // pred_region
          %s3279 = ssub.s32 16, 16
          %3280 = vsyncadd %s3272, %s3279
          %s3281 = smul.addr %s25, 16
          %s3282 = scalar_lea.hbm %s11, %s3281
          %s3284 = sshll.u32 %s3274, 4
          %s3285 = int_to_ptr.vmem [resolvable:$true] %s3284
          %3287 = dma.vmem_to_hbm [thread:$0]  %s3285, 16, %s3282, %s3272
        $region68: #{bert_sentiment_forward.1} parent=63 // pred_fallthru
          _
      $region64: #{bert_sentiment_forward.1} parent=5 // pred_fallthru
        _
      %p3288 = scmp.le.s32.totalorder 2, %s20
      // Predicated region
      $region69: #{bert_sentiment_forward.1} parent=5 // pred_check
        %p3289 = pneg %p3288
      $region70: #{bert_sentiment_forward.1} parent=5 // pred_check_branch
        %3291 = sbr.rel (%p3289) target = $region72
      $region71: #{bert_sentiment_forward.1} parent=5 // pred_region
        %s3292 = ssub.s32 %s20, 2
        // Predicated region
        $region73: #{bert_sentiment_forward.1} parent=71 // pred_check
          %p3293 = pneg %p290
        $region74: #{bert_sentiment_forward.1} parent=71 // pred_check_branch
          %3295 = sbr.rel (%p3293) target = $region76
        $region75: #{bert_sentiment_forward.1} parent=71 // pred_region
          %s3296 = sand.u32 %s275, 1
          %s3297 = scalar_lea.sflag [#allocation3], %s3296
          %s3298 = sand.u32 %s275, 1
          %s3299 = scalar_lea.vmem [#allocation2], %s3298
          %3300 = dma.done %s3297, 16
        $region76: #{bert_sentiment_forward.1} parent=71 // pred_fallthru
          _
      $region72: #{bert_sentiment_forward.1} parent=5 // pred_fallthru
        _
    $region6: #{bert_sentiment_forward.1} parent=1 // loop_footer
      %s24 = sadd.s32 1, %s20
    $region7: #{bert_sentiment_forward.1} parent=1 // loop_footer_branch
      %19 = sbr.rel target = $region3
    $region8: #{bert_sentiment_forward.1} parent=1 // loop_exit
      _
    %3301 = vsyncpa [#allocation3], 1
    %s3302 = scalar_lea.sflag [#allocation3], 1
    %3303 = vsyncpa %s3302, 1

</llo_original>
